<compile_context>
chip_gen: v5e
topology: v5e:2x2
jax: 0.10.0
libtpu: 0.0.40
codegen_flags: <defaults>
</compile_context>

<pallas_src>
import functools

import jax
import jax.numpy as jnp
from jax.experimental import pallas as pl
from jax.experimental.pallas import tpu as pltpu


# ---------------------------------------------------------------------------
# Kernels
# ---------------------------------------------------------------------------
def _encoder_kernel(u_ref, we_ref, be_ref, wh_ref, bh_ref, wd1_ref, bd1_ref,
                    eps_ref, h2_ref, kl_ref, h_acc, *, e1, tb, batch):
    """dropout(u) @ We -> tanh -> fused mu/logvar -> z -> tanh(z@Wd1+bd1), KL.

    Grid = (batch_tiles, item_k_tiles).  The K reduction over num_item runs on
    the last ("arbitrary") axis with an f32 VMEM accumulator.  The epilogue at
    the last K step produces h2 (bf16, consumed by the decoder kernel) and a
    per-batch-tile, lane-dense KL partial row.
    """
    b = pl.program_id(0)
    k = pl.program_id(1)
    nk = pl.num_programs(1)

    # bf16 x bf16 MXU matmul, f32 accumulation.  `u` already has the dropout
    # mask applied and the 1/keep_prob scale is folded into We.
    contrib = jnp.dot(u_ref[...], we_ref[...], preferred_element_type=jnp.float32)

    @pl.when(k == 0)
    def _():
        h_acc[...] = contrib            # overwrite: no zero-init + add

    @pl.when(k > 0)
    def _():
        h_acc[...] += contrib

    @pl.when(k == nk - 1)
    def _():
        h = jnp.tanh(h_acc[...] + be_ref[...])
        # Fused mu/logvar heads: one lane-dense [e0, 2*e1] matmul.
        head = jnp.dot(h.astype(jnp.bfloat16), wh_ref[...],
                       preferred_element_type=jnp.float32) + bh_ref[...]
        mu = head[:, :e1]
        logvar = head[:, e1:]
        std = jnp.exp(0.5 * logvar)
        ex = std * std                  # == exp(logvar); reused by the KL term
        z = mu + eps_ref[...] * std
        # Decoder first layer fused here -> decoder kernel is pure streaming.
        h2 = jnp.tanh(jnp.dot(z.astype(jnp.bfloat16), wd1_ref[...],
                              preferred_element_type=jnp.float32) + bd1_ref[...])
        h2_ref[...] = h2.astype(h2_ref.dtype)

        # KL partial reduced over users (sublane axis); padded batch rows are
        # masked so the wrapper's final sum is exact.
        kl_term = 1.0 + logvar - mu * mu - ex
        row = b * tb + jax.lax.broadcasted_iota(jnp.int32, (tb, 1), 0)
        kl_term = jnp.where(row < batch, kl_term, 0.0)
        kl_ref[...] = jnp.sum(kl_term, axis=0, keepdims=True).reshape(kl_ref.shape)


def _decoder_kernel(h2_ref, wd2_ref, bd2_ref, recon_ref):
    """recon tile = h2 @ Wd2[:, n-tile] + bd2[n-tile] (weight streaming)."""
    recon_ref[...] = (
        jnp.dot(h2_ref[...], wd2_ref[...], preferred_element_type=jnp.float32)
        + bd2_ref[...]
    ).astype(recon_ref.dtype)


# ---------------------------------------------------------------------------
# Wrapper
# ---------------------------------------------------------------------------
def _round_up(x, m):
    return ((x + m - 1) // m) * m


def _pick_tile(dim, target, align=128):
    """Largest multiple of `align` dividing `dim` that is <= target (dim padded)."""
    t = min((max(target, align) // align) * align, dim)
    t = max(t, align)
    while t > align and dim % t != 0:
        t -= align
    return t


def _vmem_limit_bytes(default=48 << 20):
    """VMEM budget with headroom, derived from the chip (64 MiB physical on v7x)."""
    try:
        cap = int(pltpu.get_tpu_info().vmem_capacity_bytes)
    except Exception:
        return default
    return min((cap * 3) // 4, 96 << 20)


def _enc_vmem_bytes(tb, tk, e0, e1):
    dbl = 2  # double-buffered pipeline buffers
    b = 0
    b += dbl * tb * tk * 2          # u tile (bf16)
    b += dbl * tk * e0 * 2          # We tile (bf16)
    b += dbl * e0 * 4               # be
    b += dbl * e0 * 2 * e1 * 2      # [Wm | Wl] (bf16)
    b += dbl * 2 * e1 * 4           # [bm | bl]
    b += dbl * e1 * e0 * 2          # Wd1 (bf16)
    b += dbl * e0 * 4               # bd1
    b += dbl * tb * e1 * 4          # eps
    b += dbl * tb * e0 * 2          # h2 output (bf16)
    b += dbl * e1 * 4               # KL partial
    b += tb * e0 * 4                # f32 accumulator scratch
    return b


def _dec_vmem_bytes(tb, tn, e0):
    dbl = 2
    b = 0
    b += dbl * tb * e0 * 2          # h2 tile (bf16)
    b += dbl * e0 * tn * 2          # Wd2 tile (bf16)
    b += dbl * tn * 4               # bd2 tile
    b += dbl * tb * tn * 4          # recon tile (f32)
    return b


def vae_forward(u, eps, dropout_key, params, *, dropout_p=0.5):
    """VAE forward: returns (u_recon [batch, num_item] f32, KL scalar f32)."""
    we, be, wm, bm, wl, bl, wd1, bd1, wd2, bd2 = params
    batch, num_item = u.shape
    e0 = we.shape[1]
    e1 = wm.shape[1]
    keep_prob = 1.0 - dropout_p

    # ---- Dropout in the wrapper (select only; 1/keep_prob folded into We).
    # TODO(synk): generate the mask on-chip with pltpu.prng_random_bits once the
    # runtime supports TPU PRNG primitives, removing this extra pass over u.
    if dropout_p > 0.0:
        keep = jax.random.bernoulli(dropout_key, p=keep_prob, shape=u.shape)
        u_in = jnp.where(keep, u, 0.0).astype(jnp.bfloat16)
        we_s = we * jnp.float32(1.0 / keep_prob)
    else:
        u_in = u.astype(jnp.bfloat16)
        we_s = we

    # ---- bf16 MXU operands (halves weight/activation DMA); biases stay f32.
    we_bf = we_s.astype(jnp.bfloat16)
    wh_bf = jnp.concatenate([wm, wl], axis=1).astype(jnp.bfloat16)   # fused heads
    bh = jnp.concatenate([bm, bl], axis=1).astype(jnp.float32)
    wd1_bf = wd1.astype(jnp.bfloat16)
    wd2_bf = wd2.astype(jnp.bfloat16)
    bd2_f = bd2.astype(jnp.float32)

    # ---- Pad batch / num_item to multiples of 128 (zero pads are exact for the
    # matmuls; padded KL rows are masked in-kernel; padded recon sliced off).
    batch_p = _round_up(batch, 128)
    item_p = _round_up(num_item, 128)
    if batch_p != batch:
        u_in = jnp.pad(u_in, ((0, batch_p - batch), (0, 0)))
        eps = jnp.pad(eps, ((0, batch_p - batch), (0, 0)))
    if item_p != num_item:
        u_in = jnp.pad(u_in, ((0, 0), (0, item_p - num_item)))
        we_bf = jnp.pad(we_bf, ((0, item_p - num_item), (0, 0)))
        wd2_bf = jnp.pad(wd2_bf, ((0, 0), (0, item_p - num_item)))
        bd2_f = jnp.pad(bd2_f, ((0, 0), (0, item_p - num_item)))

    # ---- Tile selection: keep nb >= 2 (both v7x TensorCores busy); K / N tiles
    # start at 512 and shrink under the VMEM budget.
    budget = _vmem_limit_bytes()
    tb = _pick_tile(batch_p, 256)
    if batch_p // tb < 2 and batch_p >= 256:
        tb = _pick_tile(batch_p, batch_p // 2)
    tk = _pick_tile(item_p, 512)
    while tk > 128 and _enc_vmem_bytes(tb, tk, e0, e1) > budget:
        tk = _pick_tile(item_p, tk - 128)
    tn = _pick_tile(item_p, 512)
    while tn > 128 and _dec_vmem_bytes(tb, tn, e0) > budget:
        tn = _pick_tile(item_p, tn - 128)
    nb, nk, nn = batch_p // tb, item_p // tk, item_p // tn

    enc_cparams = pltpu.CompilerParams(
        dimension_semantics=("parallel", "arbitrary"),
        vmem_limit_bytes=budget,
    )
    dec_cparams = pltpu.CompilerParams(
        dimension_semantics=("parallel", "parallel"),
        vmem_limit_bytes=budget,
    )

    # ---- Kernel 1: dropout(u) @ We -> tanh -> mu/logvar -> z -> h2, KL ----
    enc_grid = pltpu.PrefetchScalarGridSpec(
        num_scalar_prefetch=0,
        grid=(nb, nk),
        in_specs=[
            pl.BlockSpec((tb, tk), lambda b, k: (b, k)),          # u (bf16)
            pl.BlockSpec((tk, e0), lambda b, k: (k, 0)),          # We tile (bf16)
            pl.BlockSpec((1, e0), lambda b, k: (0, 0)),           # be
            pl.BlockSpec((e0, 2 * e1), lambda b, k: (0, 0)),      # [Wm | Wl] (bf16)
            pl.BlockSpec((1, 2 * e1), lambda b, k: (0, 0)),       # [bm | bl]
            pl.BlockSpec((e1, e0), lambda b, k: (0, 0)),          # Wd1 (bf16)
            pl.BlockSpec((1, e0), lambda b, k: (0, 0)),           # bd1
            pl.BlockSpec((tb, e1), lambda b, k: (b, 0)),          # eps
        ],
        out_specs=(
            pl.BlockSpec((tb, e0), lambda b, k: (b, 0)),          # h2 (bf16)
            pl.BlockSpec((1, 1, e1), lambda b, k: (b, 0, 0)),     # KL partial rows
        ),
        scratch_shapes=[pltpu.VMEM((tb, e0), jnp.float32)],       # h accumulator
    )
    h2, kl_rows = pl.pallas_call(
        functools.partial(_encoder_kernel, e1=e1, tb=tb, batch=batch),
        out_shape=(
            jax.ShapeDtypeStruct((batch_p, e0), jnp.bfloat16),
            jax.ShapeDtypeStruct((nb, 1, e1), jnp.float32),
        ),
        grid_spec=enc_grid,
        compiler_params=enc_cparams,
    )(u_in, we_bf, be, wh_bf, bh, wd1_bf, bd1, eps)

    # ---- Kernel 2: recon = h2 @ Wd2 + bd2, streaming over num_item tiles ----
    dec_grid = pltpu.PrefetchScalarGridSpec(
        num_scalar_prefetch=0,
        grid=(nb, nn),
        in_specs=[
            pl.BlockSpec((tb, e0), lambda b, n: (b, 0)),          # h2 (bf16)
            pl.BlockSpec((e0, tn), lambda b, n: (0, n)),          # Wd2 tile (bf16)
            pl.BlockSpec((1, tn), lambda b, n: (0, n)),           # bd2 tile
        ],
        out_specs=pl.BlockSpec((tb, tn), lambda b, n: (b, n)),
    )
    recon_p = pl.pallas_call(
        _decoder_kernel,
        out_shape=jax.ShapeDtypeStruct((batch_p, item_p), jnp.float32),
        grid_spec=dec_grid,
        compiler_params=dec_cparams,
    )(h2, wd2_bf, bd2_f)

    u_recon = recon_p[:batch, :num_item]
    kl = -0.5 * jnp.sum(kl_rows)            # tiny final reduction over partial rows
    return u_recon, kl


def init_params(key, num_item, emb_dim):
    """PyTorch-style Linear init; weights stored transposed [in, out], biases [1, out]."""
    e0, e1 = emb_dim
    ks = jax.random.split(key, 10)

    def lin(kw, kb, fan_in, fan_out):
        bound = 1.0 / float(fan_in) ** 0.5
        w = jax.random.uniform(kw, (fan_in, fan_out), jnp.float32, -bound, bound)
        b = jax.random.uniform(kb, (1, fan_out), jnp.float32, -bound, bound)
        return w, b

    we, be = lin(ks[0], ks[1], num_item, e0)    # E: Linear(num_item, e0)
    wm, bm = lin(ks[2], ks[3], e0, e1)          # E_mean
    wl, bl = lin(ks[4], ks[5], e0, e1)          # E_logvar
    wd1, bd1 = lin(ks[6], ks[7], e1, e0)        # D: Linear(e1, e0)
    wd2, bd2 = lin(ks[8], ks[9], e0, num_item)  # D: Linear(e0, num_item)
    return (we, be, wm, bm, wl, bl, wd1, bd1, wd2, bd2)


if __name__ == "__main__":
    # Small but large enough to exercise the tiled pipeline: 2 batch tiles of
    # 128 users, 2 item tiles of 512 on both the encoder K axis and the decoder
    # output N axis.
    num_user = 256
    num_item = 1024
    emb_dim = (256, 128)

    key = jax.random.PRNGKey(0)
    k_data, k_param, k_eps, k_drop = jax.random.split(key, 4)

    # Binary implicit-feedback input u: [batch, num_item]
    u = (jax.random.uniform(k_data, (num_user, num_item)) > 0.8).astype(jnp.float32)
    # eps ~ N(0,1) for the reparameterization (torch.randn_like stand-in).
    eps = jax.random.normal(k_eps, (num_user, emb_dim[1]), jnp.float32)
    params = init_params(k_param, num_item, emb_dim)

    fwd = jax.jit(functools.partial(vae_forward, dropout_p=0.5))
    u_recon, KL = fwd(u, eps, k_drop, params)
    jax.block_until_ready((u_recon, KL))

    assert u_recon.shape == (num_user, num_item)
    assert KL.shape == ()
    assert bool(jnp.all(jnp.isfinite(u_recon)))
    assert bool(jnp.isfinite(KL))

    print("KERNEL_OK")
</pallas_src>

<mosaic_0001>
module attributes {stable_mosaic.version = 11 : i64} {
  func.func @_encoder_kernel(%arg0: i32, %arg1: i32, %arg2: memref<128x512xbf16, #tpu.memory_space<vmem>>, %arg3: memref<512x256xbf16, #tpu.memory_space<vmem>>, %arg4: memref<1x256xf32, #tpu.memory_space<vmem>>, %arg5: memref<256x256xbf16, #tpu.memory_space<vmem>>, %arg6: memref<1x256xf32, #tpu.memory_space<vmem>>, %arg7: memref<128x256xbf16, #tpu.memory_space<vmem>>, %arg8: memref<1x256xf32, #tpu.memory_space<vmem>>, %arg9: memref<128x128xf32, #tpu.memory_space<vmem>>, %arg10: memref<128x256xbf16, #tpu.memory_space<vmem>>, %arg11: memref<1x1x128xf32, #tpu.memory_space<vmem>>, %arg12: memref<128x256xf32, #tpu.memory_space<vmem>>) attributes {dimension_semantics = [#tpu.dimension_semantics<parallel>, #tpu.dimension_semantics<arbitrary>], iteration_bounds = array<i64: 2, 2>, scalar_prefetch = 0 : i64, scratch_operands = 1 : i64, tpu.core_type = #tpu.core_type<tc>, window_params = [{transform_indices = @transform_0, window_bounds = array<i64: 128, 512>}, {transform_indices = @transform_1, window_bounds = array<i64: 512, 256>}, {pipeline_mode = #tpu.pipeline_mode<synchronous>, transform_indices = @transform_2, window_bounds = array<i64: 1, 256>}, {pipeline_mode = #tpu.pipeline_mode<synchronous>, transform_indices = @transform_3, window_bounds = array<i64: 256, 256>}, {pipeline_mode = #tpu.pipeline_mode<synchronous>, transform_indices = @transform_4, window_bounds = array<i64: 1, 256>}, {pipeline_mode = #tpu.pipeline_mode<synchronous>, transform_indices = @transform_5, window_bounds = array<i64: 128, 256>}, {pipeline_mode = #tpu.pipeline_mode<synchronous>, transform_indices = @transform_6, window_bounds = array<i64: 1, 256>}, {transform_indices = @transform_7, window_bounds = array<i64: 128, 128>}, {transform_indices = @transform_8, window_bounds = array<i64: 128, 256>}, {transform_indices = @transform_9, window_bounds = array<i64: 1, 1, 128>}]} {
    %c0 = arith.constant 0 : index
    %c0_0 = arith.constant 0 : index
    %0 = vector.load %arg2[%c0, %c0_0] : memref<128x512xbf16, #tpu.memory_space<vmem>>, vector<128x512xbf16>
    %c0_1 = arith.constant 0 : index
    %c0_2 = arith.constant 0 : index
    %1 = vector.load %arg3[%c0_1, %c0_2] : memref<512x256xbf16, #tpu.memory_space<vmem>>, vector<512x256xbf16>
    %cst = arith.constant dense<0.000000e+00> : vector<128x256xf32>
    %2 = tpu.matmul %0, %1, %cst {dimension_numbers = #tpu.dot_dimension_numbers<[1], [0], [0], [1], [0, 0, 1, 1], [], []>} : vector<128x512xbf16>, vector<512x256xbf16>, vector<128x256xf32> -> vector<128x256xf32>
    %c0_i32 = arith.constant 0 : i32
    %3 = arith.cmpi eq, %arg1, %c0_i32 : i32
    %4 = arith.extui %3 : i1 to i32
    %c0_i32_3 = arith.constant 0 : i32
    %5 = arith.cmpi ne, %4, %c0_i32_3 : i32
    scf.if %5 {
      %c0_7 = arith.constant 0 : index
      %c0_8 = arith.constant 0 : index
      %12 = vector.load %arg12[%c0_7, %c0_8] : memref<128x256xf32, #tpu.memory_space<vmem>>, vector<128x256xf32>
      tpu.vector_store %arg12[%c0_7, %c0_8], %2 {strides = array<i32>} : memref<128x256xf32, #tpu.memory_space<vmem>>, vector<128x256xf32>,
    } else {
    }
    %c0_i32_4 = arith.constant 0 : i32
    %6 = arith.cmpi sgt, %arg1, %c0_i32_4 : i32
    %7 = arith.extui %6 : i1 to i32
    %c0_i32_5 = arith.constant 0 : i32
    %8 = arith.cmpi ne, %7, %c0_i32_5 : i32
    scf.if %8 {
      %c0_7 = arith.constant 0 : index
      %c0_8 = arith.constant 0 : index
      %12 = vector.load %arg12[%c0_7, %c0_8] : memref<128x256xf32, #tpu.memory_space<vmem>>, vector<128x256xf32>
      %13 = arith.addf %12, %2 : vector<128x256xf32>
      %c0_9 = arith.constant 0 : index
      %c0_10 = arith.constant 0 : index
      %14 = vector.load %arg12[%c0_9, %c0_10] : memref<128x256xf32, #tpu.memory_space<vmem>>, vector<128x256xf32>
      tpu.vector_store %arg12[%c0_9, %c0_10], %13 {strides = array<i32>} : memref<128x256xf32, #tpu.memory_space<vmem>>, vector<128x256xf32>,
    } else {
    }
    %c1_i32 = arith.constant 1 : i32
    %9 = arith.cmpi eq, %arg1, %c1_i32 : i32
    %10 = arith.extui %9 : i1 to i32
    %c0_i32_6 = arith.constant 0 : i32
    %11 = arith.cmpi ne, %10, %c0_i32_6 : i32
    scf.if %11 {
      %c0_7 = arith.constant 0 : index
      %c0_8 = arith.constant 0 : index
      %12 = vector.load %arg12[%c0_7, %c0_8] : memref<128x256xf32, #tpu.memory_space<vmem>>, vector<128x256xf32>
      %c0_9 = arith.constant 0 : index
      %c0_10 = arith.constant 0 : index
      %13 = vector.load %arg4[%c0_9, %c0_10] : memref<1x256xf32, #tpu.memory_space<vmem>>, vector<1x256xf32>
      %14 = vector.broadcast %13 : vector<1x256xf32> to vector<128x256xf32>
      %15 = arith.addf %12, %14 : vector<128x256xf32>
      %16 = math.tanh %15 : vector<128x256xf32>
      %17 = arith.truncf %16 : vector<128x256xf32> to vector<128x256xbf16>
      %c0_11 = arith.constant 0 : index
      %c0_12 = arith.constant 0 : index
      %18 = vector.load %arg5[%c0_11, %c0_12] : memref<256x256xbf16, #tpu.memory_space<vmem>>, vector<256x256xbf16>
      %cst_13 = arith.constant dense<0.000000e+00> : vector<128x256xf32>
      %19 = tpu.matmul %17, %18, %cst_13 {dimension_numbers = #tpu.dot_dimension_numbers<[1], [0], [0], [1], [0, 0, 1, 1], [], []>} : vector<128x256xbf16>, vector<256x256xbf16>, vector<128x256xf32> -> vector<128x256xf32>
      %c0_14 = arith.constant 0 : index
      %c0_15 = arith.constant 0 : index
      %20 = vector.load %arg6[%c0_14, %c0_15] : memref<1x256xf32, #tpu.memory_space<vmem>>, vector<1x256xf32>
      %21 = vector.broadcast %20 : vector<1x256xf32> to vector<128x256xf32>
      %22 = arith.addf %19, %21 : vector<128x256xf32>
      %23 = vector.extract_strided_slice %22 {offsets = [0, 0], sizes = [128, 128], strides = [1, 1]} : vector<128x256xf32> to vector<128x128xf32>
      %24 = vector.extract_strided_slice %22 {offsets = [0, 128], sizes = [128, 128], strides = [1, 1]} : vector<128x256xf32> to vector<128x128xf32>
      %cst_16 = arith.constant 5.000000e-01 : f32
      %25 = vector.broadcast %cst_16 : f32 to vector<128x128xf32>
      %26 = arith.mulf %25, %24 : vector<128x128xf32>
      %27 = math.exp %26 : vector<128x128xf32>
      %28 = arith.mulf %27, %27 : vector<128x128xf32>
      %c0_17 = arith.constant 0 : index
      %c0_18 = arith.constant 0 : index
      %29 = vector.load %arg9[%c0_17, %c0_18] : memref<128x128xf32, #tpu.memory_space<vmem>>, vector<128x128xf32>
      %30 = arith.mulf %29, %27 : vector<128x128xf32>
      %31 = arith.addf %23, %30 : vector<128x128xf32>
      %32 = arith.truncf %31 : vector<128x128xf32> to vector<128x128xbf16>
      %c0_19 = arith.constant 0 : index
      %c0_20 = arith.constant 0 : index
      %33 = vector.load %arg7[%c0_19, %c0_20] : memref<128x256xbf16, #tpu.memory_space<vmem>>, vector<128x256xbf16>
      %cst_21 = arith.constant dense<0.000000e+00> : vector<128x256xf32>
      %34 = tpu.matmul %32, %33, %cst_21 {dimension_numbers = #tpu.dot_dimension_numbers<[1], [0], [0], [1], [0, 0, 1, 1], [], []>} : vector<128x128xbf16>, vector<128x256xbf16>, vector<128x256xf32> -> vector<128x256xf32>
      %c0_22 = arith.constant 0 : index
      %c0_23 = arith.constant 0 : index
      %35 = vector.load %arg8[%c0_22, %c0_23] : memref<1x256xf32, #tpu.memory_space<vmem>>, vector<1x256xf32>
      %36 = vector.broadcast %35 : vector<1x256xf32> to vector<128x256xf32>
      %37 = arith.addf %34, %36 : vector<128x256xf32>
      %38 = math.tanh %37 : vector<128x256xf32>
      %39 = arith.truncf %38 : vector<128x256xf32> to vector<128x256xbf16>
      %c0_24 = arith.constant 0 : index
      %c0_25 = arith.constant 0 : index
      %40 = vector.load %arg10[%c0_24, %c0_25] : memref<128x256xbf16, #tpu.memory_space<vmem>>, vector<128x256xbf16>
      tpu.vector_store %arg10[%c0_24, %c0_25], %39 {strides = array<i32>} : memref<128x256xbf16, #tpu.memory_space<vmem>>, vector<128x256xbf16>,
      %cst_26 = arith.constant 1.000000e+00 : f32
      %41 = vector.broadcast %cst_26 : f32 to vector<128x128xf32>
      %42 = arith.addf %41, %24 : vector<128x128xf32>
      %43 = arith.mulf %23, %23 : vector<128x128xf32>
      %44 = arith.subf %42, %43 : vector<128x128xf32>
      %45 = arith.subf %44, %28 : vector<128x128xf32>
      %c128_i32 = arith.constant 128 : i32
      %46 = arith.muli %arg0, %c128_i32 : i32
      %47 = tpu.iota {dimensions = array<i32: 0>} : vector<128x1xi32>
      %48 = vector.broadcast %46 : i32 to vector<128x1xi32>
      %49 = arith.addi %48, %47 : vector<128x1xi32>
      %c256_i32 = arith.constant 256 : i32
      %50 = vector.broadcast %c256_i32 : i32 to vector<128x1xi32>
      %51 = arith.cmpi slt, %49, %50 : vector<128x1xi32>
      %cst_27 = arith.constant 0.000000e+00 : f32
      %52 = vector.shape_cast %51 : vector<128x1xi1> to vector<128x1xi1>
      %53 = vector.broadcast %52 : vector<128x1xi1> to vector<128x128xi1>
      %54 = vector.broadcast %cst_27 : f32 to vector<128x128xf32>
      %55 = arith.select %53, %45, %54 : vector<128x128xi1>, vector<128x128xf32>
      %cst_28 = arith.constant dense<0.000000e+00> : vector<128xf32>
      %56 = vector.multi_reduction <add>, %55, %cst_28 [0] : vector<128x128xf32> to vector<128xf32>
      %57 = vector.shape_cast %56 : vector<128xf32> to vector<1x128xf32>
      %58 = vector.shape_cast %57 : vector<1x128xf32> to vector<1x1x128xf32>
      %c0_29 = arith.constant 0 : index
      %c0_30 = arith.constant 0 : index
      %c0_31 = arith.constant 0 : index
      %59 = vector.load %arg11[%c0_29, %c0_30, %c0_31] : memref<1x1x128xf32, #tpu.memory_space<vmem>>, vector<1x1x128xf32>
      tpu.vector_store %arg11[%c0_29, %c0_30, %c0_31], %58 {strides = array<i32>} : memref<1x1x128xf32, #tpu.memory_space<vmem>>, vector<1x1x128xf32>,
    } else {
    }
    return
  }
  func.func @transform_0(%arg0: i32, %arg1: i32) -> (i32, i32) {
    %c0_i32 = arith.constant 0 : i32
    return %arg0, %arg1 : i32, i32
  }
  func.func @transform_1(%arg0: i32, %arg1: i32) -> (i32, i32) {
    %c0_i32 = arith.constant 0 : i32
    %c0_i32_0 = arith.constant 0 : i32
    return %arg1, %c0_i32 : i32, i32
  }
  func.func @transform_2(%arg0: i32, %arg1: i32) -> (i32, i32) {
    %c0_i32 = arith.constant 0 : i32
    %c0_i32_0 = arith.constant 0 : i32
    %c0_i32_1 = arith.constant 0 : i32
    return %c0_i32, %c0_i32_0 : i32, i32
  }
  func.func @transform_3(%arg0: i32, %arg1: i32) -> (i32, i32) {
    %c0_i32 = arith.constant 0 : i32
    %c0_i32_0 = arith.constant 0 : i32
    %c0_i32_1 = arith.constant 0 : i32
    return %c0_i32, %c0_i32_0 : i32, i32
  }
  func.func @transform_4(%arg0: i32, %arg1: i32) -> (i32, i32) {
    %c0_i32 = arith.constant 0 : i32
    %c0_i32_0 = arith.constant 0 : i32
    %c0_i32_1 = arith.constant 0 : i32
    return %c0_i32, %c0_i32_0 : i32, i32
  }
  func.func @transform_5(%arg0: i32, %arg1: i32) -> (i32, i32) {
    %c0_i32 = arith.constant 0 : i32
    %c0_i32_0 = arith.constant 0 : i32
    %c0_i32_1 = arith.constant 0 : i32
    return %c0_i32, %c0_i32_0 : i32, i32
  }
  func.func @transform_6(%arg0: i32, %arg1: i32) -> (i32, i32) {
    %c0_i32 = arith.constant 0 : i32
    %c0_i32_0 = arith.constant 0 : i32
    %c0_i32_1 = arith.constant 0 : i32
    return %c0_i32, %c0_i32_0 : i32, i32
  }
  func.func @transform_7(%arg0: i32, %arg1: i32) -> (i32, i32) {
    %c0_i32 = arith.constant 0 : i32
    %c0_i32_0 = arith.constant 0 : i32
    return %arg0, %c0_i32 : i32, i32
  }
  func.func @transform_8(%arg0: i32, %arg1: i32) -> (i32, i32) {
    %c0_i32 = arith.constant 0 : i32
    %c0_i32_0 = arith.constant 0 : i32
    return %arg0, %c0_i32 : i32, i32
  }
  func.func @transform_9(%arg0: i32, %arg1: i32) -> (i32, i32, i32) {
    %c0_i32 = arith.constant 0 : i32
    %c0_i32_0 = arith.constant 0 : i32
    %c0_i32_1 = arith.constant 0 : i32
    return %arg0, %c0_i32, %c0_i32_0 : i32, i32, i32
  }
}

module attributes {stable_mosaic.version = 11 : i64} {
  func.func @_decoder_kernel(%arg0: i32, %arg1: i32, %arg2: memref<128x256xbf16, #tpu.memory_space<vmem>>, %arg3: memref<256x512xbf16, #tpu.memory_space<vmem>>, %arg4: memref<1x512xf32, #tpu.memory_space<vmem>>, %arg5: memref<128x512xf32, #tpu.memory_space<vmem>>) attributes {dimension_semantics = [#tpu.dimension_semantics<parallel>, #tpu.dimension_semantics<parallel>], iteration_bounds = array<i64: 2, 2>, scalar_prefetch = 0 : i64, scratch_operands = 0 : i64, tpu.core_type = #tpu.core_type<tc>, window_params = [{transform_indices = @transform_0, window_bounds = array<i64: 128, 256>}, {transform_indices = @transform_1, window_bounds = array<i64: 256, 512>}, {transform_indices = @transform_2, window_bounds = array<i64: 1, 512>}, {transform_indices = @transform_3, window_bounds = array<i64: 128, 512>}]} {
    %c0 = arith.constant 0 : index
    %c0_0 = arith.constant 0 : index
    %0 = vector.load %arg2[%c0, %c0_0] : memref<128x256xbf16, #tpu.memory_space<vmem>>, vector<128x256xbf16>
    %c0_1 = arith.constant 0 : index
    %c0_2 = arith.constant 0 : index
    %1 = vector.load %arg3[%c0_1, %c0_2] : memref<256x512xbf16, #tpu.memory_space<vmem>>, vector<256x512xbf16>
    %cst = arith.constant dense<0.000000e+00> : vector<128x512xf32>
    %2 = tpu.matmul %0, %1, %cst {dimension_numbers = #tpu.dot_dimension_numbers<[1], [0], [0], [1], [0, 0, 1, 1], [], []>} : vector<128x256xbf16>, vector<256x512xbf16>, vector<128x512xf32> -> vector<128x512xf32>
    %c0_3 = arith.constant 0 : index
    %c0_4 = arith.constant 0 : index
    %3 = vector.load %arg4[%c0_3, %c0_4] : memref<1x512xf32, #tpu.memory_space<vmem>>, vector<1x512xf32>
    %4 = vector.broadcast %3 : vector<1x512xf32> to vector<128x512xf32>
    %5 = arith.addf %2, %4 : vector<128x512xf32>
    %c0_5 = arith.constant 0 : index
    %c0_6 = arith.constant 0 : index
    %6 = vector.load %arg5[%c0_5, %c0_6] : memref<128x512xf32, #tpu.memory_space<vmem>>, vector<128x512xf32>
    tpu.vector_store %arg5[%c0_5, %c0_6], %5 {strides = array<i32>} : memref<128x512xf32, #tpu.memory_space<vmem>>, vector<128x512xf32>,
    return
  }
  func.func @transform_0(%arg0: i32, %arg1: i32) -> (i32, i32) {
    %c0_i32 = arith.constant 0 : i32
    %c0_i32_0 = arith.constant 0 : i32
    return %arg0, %c0_i32 : i32, i32
  }
  func.func @transform_1(%arg0: i32, %arg1: i32) -> (i32, i32) {
    %c0_i32 = arith.constant 0 : i32
    %c0_i32_0 = arith.constant 0 : i32
    return %c0_i32, %arg1 : i32, i32
  }
  func.func @transform_2(%arg0: i32, %arg1: i32) -> (i32, i32) {
    %c0_i32 = arith.constant 0 : i32
    %c0_i32_0 = arith.constant 0 : i32
    return %c0_i32, %arg1 : i32, i32
  }
  func.func @transform_3(%arg0: i32, %arg1: i32) -> (i32, i32) {
    %c0_i32 = arith.constant 0 : i32
    return %arg0, %arg1 : i32, i32
  }
}

</mosaic_0001>

<llo_original>
// kernel: vae_forward.3
$region0: #{vae_forward.3}
  #allocation0 [shape = 'u32[]', space=smem, size = 0x4, offset = 0x4, fixed_abs, tag = 'smem constant byte address 0x4 - core index']
  #allocation1 [shape = 'u32[72,128]{1,0:T(1,128)}', space=vmem, size = 0x9000, scoped, tag = 'internal scratch']
  %s0 = inlined_call_operand.vmem [shape: bf16[256,256], index: 0, kind: input, shape index: {}]
  %s1 = inlined_call_operand.vmem [shape: bf16[256,1024], index: 1, kind: input, shape index: {}]
  %s2 = inlined_call_operand.vmem [shape: f32[1,1024], index: 2, kind: input, shape index: {}]
  %s3 = inlined_call_operand.hbm [shape: f32[256,1024], index: 3, kind: output, shape index: {}]
  %s4 = sld [smem:[#allocation0]]
  $region68: #{vae_forward.3} parent=0
    _
  %s6 = ssub.s32 1, %s4
  %s7 = scalar_select 0, %s6, %s4
  $region1: #{vae_forward.3} parent=0
    #allocation2 [shape = 'u8[524288]{0}', space=vmem, size = 0x80000, scoped, tag = 'input window, operand 1']
    #allocation3 [shape = 'u8[524288]{0}', space=vmem, size = 0x80000, scoped, tag = 'output window, operand 0']
    #allocation4 [shape = 's32[2]{0}', space=sflag, size = 0x8, scoped, tag = 'scoped memory for vae_forward.3']
    %8 = vsyncpa [#allocation4], 0
    %s9 = scalar_lea.sflag [#allocation4], 1
    %10 = vsyncpa %s9, 0
    loop: start=0, step=1, limit=6
    $region2: #{vae_forward.3} parent=1 // loop_pre_header
      _
    $region3: #{vae_forward.3} parent=1 // loop_header
      %s12 = sphi 0, %s16
      %p13 = scmp.ge.s32.totalorder %s12, 6
      %s19 = sphi 0, %s31
      %s20 = sphi 0, %s27
      %s21 = sphi 0, %s19
      %s22 = sphi 0, %s20
      %s23 = sphi 0, %s21
      %s24 = sphi 0, %s22
      %s34 = sphi 0, %s36
      %s37 = sphi 0, %s34
      %s38 = sphi 0, %s37
      %s54 = sphi 0, %s38
      %s60 = sphi 0, %s62
      %s63 = sphi 0, %s60
      %s64 = sphi 0, %s63
      %s80 = sphi 0, %s64
      %s86 = sphi 0, %s88
      %s89 = sphi 0, %s86
      %s90 = sphi 0, %s89
      %s106 = sphi 0, %s90
      %s114 = sphi 0, %s116
      %s117 = sphi 0, %s114
      %s118 = sphi 0, %s117
      %s134 = sphi 0, %s118
    $region4: #{vae_forward.3} parent=1 // loop_header_branch
      %15 = sbr.rel (%p13) target = $region8
    $region5: #{vae_forward.3} parent=1 // loop_body
      %s17 = ssub.s32 %s12, 1
      %s18 = ssub.s32 %s12, 2
      %s25 = sadd.s32 1, %s20
      %p26 = scmp.ge.s32.totalorder %s25, 2
      %s27 = scalar_select %p26, 0, %s25
      %s28 = sadd.s32 1, %s19
      %s29 = scalar_select %p26, %s28, %s19
      %p30 = scmp.ge.s32.totalorder %s29, 2
      %s31 = scalar_select %p30, 0, %s29
      %s32 = ssub.s32 %s19, %s31
      %p33 = scmp.eq.s32.totalorder %s32, 0
      %s35 = sadd.s32 %s34, 1
      %s36 = scalar_select %p33, %s34, %s35
      %p39 = pneg %p33
      %p40 = scmp.eq.s32.totalorder %s12, 3
      %p41 = por %p39, %p40
      %p42 = scmp.ne.s32.totalorder %s34, %s37
      %p43 = scmp.eq.s32.totalorder %s12, 0
      %p44 = por %p42, %p43
      %p45 = scmp.ne.s32.totalorder %s34, %s37
      %p46 = scmp.eq.s32.totalorder %s17, 3
      %p47 = por %p45, %p46
      %p48 = scmp.ne.s32.totalorder %s37, %s38
      %p49 = scmp.eq.s32.totalorder %s17, 0
      %p50 = por %p48, %p49
      %p51 = scmp.ne.s32.totalorder %s37, %s38
      %p52 = scmp.eq.s32.totalorder %s18, 3
      %p53 = por %p51, %p52
      %p55 = scmp.ne.s32.totalorder %s38, %s54
      %p56 = scmp.eq.s32.totalorder %s18, 0
      %p57 = por %p55, %p56
      %s58 = ssub.s32 %s20, %s27
      %p59 = scmp.eq.s32.totalorder %s58, 0
      %s61 = sadd.s32 %s60, 1
      %s62 = scalar_select %p59, %s60, %s61
      %p65 = pneg %p59
      %p66 = scmp.eq.s32.totalorder %s12, 3
      %p67 = por %p65, %p66
      %p68 = scmp.ne.s32.totalorder %s60, %s63
      %p69 = scmp.eq.s32.totalorder %s12, 0
      %p70 = por %p68, %p69
      %p71 = scmp.ne.s32.totalorder %s60, %s63
      %p72 = scmp.eq.s32.totalorder %s17, 3
      %p73 = por %p71, %p72
      %p74 = scmp.ne.s32.totalorder %s63, %s64
      %p75 = scmp.eq.s32.totalorder %s17, 0
      %p76 = por %p74, %p75
      %p77 = scmp.ne.s32.totalorder %s63, %s64
      %p78 = scmp.eq.s32.totalorder %s18, 3
      %p79 = por %p77, %p78
      %p81 = scmp.ne.s32.totalorder %s64, %s80
      %p82 = scmp.eq.s32.totalorder %s18, 0
      %p83 = por %p81, %p82
      %s84 = ssub.s32 %s20, %s27
      %p85 = scmp.eq.s32.totalorder %s84, 0
      %s87 = sadd.s32 %s86, 1
      %s88 = scalar_select %p85, %s86, %s87
      %p91 = pneg %p85
      %p92 = scmp.eq.s32.totalorder %s12, 3
      %p93 = por %p91, %p92
      %p94 = scmp.ne.s32.totalorder %s86, %s89
      %p95 = scmp.eq.s32.totalorder %s12, 0
      %p96 = por %p94, %p95
      %p97 = scmp.ne.s32.totalorder %s86, %s89
      %p98 = scmp.eq.s32.totalorder %s17, 3
      %p99 = por %p97, %p98
      %p100 = scmp.ne.s32.totalorder %s89, %s90
      %p101 = scmp.eq.s32.totalorder %s17, 0
      %p102 = por %p100, %p101
      %p103 = scmp.ne.s32.totalorder %s89, %s90
      %p104 = scmp.eq.s32.totalorder %s18, 3
      %p105 = por %p103, %p104
      %p107 = scmp.ne.s32.totalorder %s90, %s106
      %p108 = scmp.eq.s32.totalorder %s18, 0
      %p109 = por %p107, %p108
      %s110 = ssub.s32 %s19, %s31
      %s111 = ssub.s32 %s20, %s27
      %s112 = sor.u32 %s110, %s111
      %p113 = scmp.eq.s32.totalorder %s112, 0
      %s115 = sadd.s32 %s114, 1
      %s116 = scalar_select %p113, %s114, %s115
      %p119 = pneg %p113
      %p120 = scmp.eq.s32.totalorder %s12, 3
      %p121 = por %p119, %p120
      %p122 = scmp.ne.s32.totalorder %s114, %s117
      %p123 = scmp.eq.s32.totalorder %s12, 0
      %p124 = por %p122, %p123
      %p125 = scmp.ne.s32.totalorder %s114, %s117
      %p126 = scmp.eq.s32.totalorder %s17, 3
      %p127 = por %p125, %p126
      %p128 = scmp.ne.s32.totalorder %s117, %s118
      %p129 = scmp.eq.s32.totalorder %s17, 0
      %p130 = por %p128, %p129
      %p131 = scmp.ne.s32.totalorder %s117, %s118
      %p132 = scmp.eq.s32.totalorder %s18, 3
      %p133 = por %p131, %p132
      %p135 = scmp.ne.s32.totalorder %s118, %s134
      %p136 = scmp.eq.s32.totalorder %s18, 0
      %p137 = por %p135, %p136
      %p138 = scmp.le.s32.totalorder 1, %s12
      %p139 = scmp.lt.s32.totalorder %s12, 5
      %p140 = pnand %p138, %p139
      %p141 = pneg %p140
      // Predicated region
      $region9: #{vae_forward.3} parent=5 // pred_check
        _
      $region10: #{vae_forward.3} parent=5 // pred_check_branch
        %143 = sbr.rel (%p140) target = $region12
      $region11: #{vae_forward.3} parent=5 // pred_region
        %s144 = ssub.s32 %s12, 1
      $region12: #{vae_forward.3} parent=5 // pred_fallthru
        _
      %p145 = scmp.lt.s32.totalorder %s12, 4
      // Predicated region
      $region13: #{vae_forward.3} parent=5 // pred_check
        %p146 = pneg %p145
      $region14: #{vae_forward.3} parent=5 // pred_check_branch
        %148 = sbr.rel (%p146) target = $region16
      $region15: #{vae_forward.3} parent=5 // pred_region
        // Predicated region
        $region17: #{vae_forward.3} parent=15 // pred_check
          %p149 = pneg %p44
        $region18: #{vae_forward.3} parent=15 // pred_check_branch
          %151 = sbr.rel (%p149) target = $region20
        $region19: #{vae_forward.3} parent=15 // pred_region
          %s152 = smul.u32 16, %s19
          %p153 = scmp.lt.s32.totalorder %s152, 31
          %s154 = scalar_select %p153, %s152, 31
          %s155 = smul.addr %s154, 2
          %s156 = smul.addr %s155, 4
          %s157 = scalar_lea.vmem %s0, %s156
          %s158 = smul.u32 16, %s19
        $region20: #{vae_forward.3} parent=15 // pred_fallthru
          _
        // Predicated region
        $region21: #{vae_forward.3} parent=15 // pred_check
          %p159 = pneg %p70
        $region22: #{vae_forward.3} parent=15 // pred_check_branch
          %161 = sbr.rel (%p159) target = $region24
        $region23: #{vae_forward.3} parent=15 // pred_region
          %s162 = sand.u32 %s60, 1
          %s163 = sand.u32 %s60, 1
          %s164 = smul.addr %s163, 512
          %s165 = scalar_lea.vmem [#allocation2], %s164
          %s166 = smul.u32 4, %s20
          %s167 = smul.addr %s166, 4
          %s168 = scalar_lea.vmem %s1, %s167
          // Predicated region
          $region25: #{vae_forward.3} parent=23 // pred_check
            _
          $region26: #{vae_forward.3} parent=23 // pred_check_branch
            %170 = sbr.rel (0) target = $region28
          $region27: #{vae_forward.3} parent=23 // pred_region
            // Predicated region
            $region29: #{vae_forward.3} parent=27 // pred_check
              _
            $region30: #{vae_forward.3} parent=27 // pred_check_branch
              %172 = sbr.rel (0) target = $region32
            $region31: #{vae_forward.3} parent=27 // pred_region
              loop: start=0, step=1, limit=1
              $region33: #{vae_forward.3} parent=31 // loop_pre_header
                _
              $region34: #{vae_forward.3} parent=31 // loop_header
                %s174 = sphi 0, %s178
                %p175 = scmp.ge.s32.totalorder %s174, 1
                %s179 = sphi %s168, %s168
                %s180 = sphi %s165, %s165
              $region35: #{vae_forward.3} parent=31 // loop_header_branch
                %177 = sbr.rel (%p175) target = $region39
              $region36: #{vae_forward.3} parent=31 // loop_body
                %v181 = vld [vmem:[%s179] sm:$0xff]
                %182 = vst [vmem:[%s180] sm:$0xff] %v181
                %v183 = vld [vmem:[%s179 + $0x8] sm:$0xff]
                %184 = vst [vmem:[%s180 + $0x8] sm:$0xff] %v183
                %v185 = vld [vmem:[%s179 + $0x20] sm:$0xff]
                %186 = vst [vmem:[%s180 + $0x10] sm:$0xff] %v185
                %v187 = vld [vmem:[%s179 + $0x28] sm:$0xff]
                %188 = vst [vmem:[%s180 + $0x18] sm:$0xff] %v187
                %v189 = vld [vmem:[%s179 + $0x40] sm:$0xff]
                %190 = vst [vmem:[%s180 + $0x20] sm:$0xff] %v189
                %v191 = vld [vmem:[%s179 + $0x48] sm:$0xff]
                %192 = vst [vmem:[%s180 + $0x28] sm:$0xff] %v191
                %v193 = vld [vmem:[%s179 + $0x60] sm:$0xff]
                %194 = vst [vmem:[%s180 + $0x30] sm:$0xff] %v193
                %v195 = vld [vmem:[%s179 + $0x68] sm:$0xff]
                %196 = vst [vmem:[%s180 + $0x38] sm:$0xff] %v195
                %v197 = vld [vmem:[%s179 + $0x80] sm:$0xff]
                %198 = vst [vmem:[%s180 + $0x40] sm:$0xff] %v197
                %v199 = vld [vmem:[%s179 + $0x88] sm:$0xff]
                %200 = vst [vmem:[%s180 + $0x48] sm:$0xff] %v199
                %v201 = vld [vmem:[%s179 + $0xa0] sm:$0xff]
                %202 = vst [vmem:[%s180 + $0x50] sm:$0xff] %v201
                %v203 = vld [vmem:[%s179 + $0xa8] sm:$0xff]
                %204 = vst [vmem:[%s180 + $0x58] sm:$0xff] %v203
                %v205 = vld [vmem:[%s179 + $0xc0] sm:$0xff]
                %206 = vst [vmem:[%s180 + $0x60] sm:$0xff] %v205
                %v207 = vld [vmem:[%s179 + $0xc8] sm:$0xff]
                %208 = vst [vmem:[%s180 + $0x68] sm:$0xff] %v207
                %v209 = vld [vmem:[%s179 + $0xe0] sm:$0xff]
                %210 = vst [vmem:[%s180 + $0x70] sm:$0xff] %v209
                %v211 = vld [vmem:[%s179 + $0xe8] sm:$0xff]
                %212 = vst [vmem:[%s180 + $0x78] sm:$0xff] %v211
                %v213 = vld [vmem:[%s179 + $0x100] sm:$0xff]
                %214 = vst [vmem:[%s180 + $0x80] sm:$0xff] %v213
                %v215 = vld [vmem:[%s179 + $0x108] sm:$0xff]
                %216 = vst [vmem:[%s180 + $0x88] sm:$0xff] %v215
                %v217 = vld [vmem:[%s179 + $0x120] sm:$0xff]
                %218 = vst [vmem:[%s180 + $0x90] sm:$0xff] %v217
                %v219 = vld [vmem:[%s179 + $0x128] sm:$0xff]
                %220 = vst [vmem:[%s180 + $0x98] sm:$0xff] %v219
                %v221 = vld [vmem:[%s179 + $0x140] sm:$0xff]
                %222 = vst [vmem:[%s180 + $0xa0] sm:$0xff] %v221
                %v223 = vld [vmem:[%s179 + $0x148] sm:$0xff]
                %224 = vst [vmem:[%s180 + $0xa8] sm:$0xff] %v223
                %v225 = vld [vmem:[%s179 + $0x160] sm:$0xff]
                %226 = vst [vmem:[%s180 + $0xb0] sm:$0xff] %v225
                %v227 = vld [vmem:[%s179 + $0x168] sm:$0xff]
                %228 = vst [vmem:[%s180 + $0xb8] sm:$0xff] %v227
                %v229 = vld [vmem:[%s179 + $0x180] sm:$0xff]
                %230 = vst [vmem:[%s180 + $0xc0] sm:$0xff] %v229
                %v231 = vld [vmem:[%s179 + $0x188] sm:$0xff]
                %232 = vst [vmem:[%s180 + $0xc8] sm:$0xff] %v231
                %v233 = vld [vmem:[%s179 + $0x1a0] sm:$0xff]
                %234 = vst [vmem:[%s180 + $0xd0] sm:$0xff] %v233
                %v235 = vld [vmem:[%s179 + $0x1a8] sm:$0xff]
                %236 = vst [vmem:[%s180 + $0xd8] sm:$0xff] %v235
                %v237 = vld [vmem:[%s179 + $0x1c0] sm:$0xff]
                %238 = vst [vmem:[%s180 + $0xe0] sm:$0xff] %v237
                %v239 = vld [vmem:[%s179 + $0x1c8] sm:$0xff]
                %240 = vst [vmem:[%s180 + $0xe8] sm:$0xff] %v239
                %v241 = vld [vmem:[%s179 + $0x1e0] sm:$0xff]
                %242 = vst [vmem:[%s180 + $0xf0] sm:$0xff] %v241
                %v243 = vld [vmem:[%s179 + $0x1e8] sm:$0xff]
                %244 = vst [vmem:[%s180 + $0xf8] sm:$0xff] %v243
                %v245 = vld [vmem:[%s179 + $0x200] sm:$0xff]
                %246 = vst [vmem:[%s180 + $0x100] sm:$0xff] %v245
                %v247 = vld [vmem:[%s179 + $0x208] sm:$0xff]
                %248 = vst [vmem:[%s180 + $0x108] sm:$0xff] %v247
                %v249 = vld [vmem:[%s179 + $0x220] sm:$0xff]
                %250 = vst [vmem:[%s180 + $0x110] sm:$0xff] %v249
                %v251 = vld [vmem:[%s179 + $0x228] sm:$0xff]
                %252 = vst [vmem:[%s180 + $0x118] sm:$0xff] %v251
                %v253 = vld [vmem:[%s179 + $0x240] sm:$0xff]
                %254 = vst [vmem:[%s180 + $0x120] sm:$0xff] %v253
                %v255 = vld [vmem:[%s179 + $0x248] sm:$0xff]
                %256 = vst [vmem:[%s180 + $0x128] sm:$0xff] %v255
                %v257 = vld [vmem:[%s179 + $0x260] sm:$0xff]
                %258 = vst [vmem:[%s180 + $0x130] sm:$0xff] %v257
                %v259 = vld [vmem:[%s179 + $0x268] sm:$0xff]
                %260 = vst [vmem:[%s180 + $0x138] sm:$0xff] %v259
                %v261 = vld [vmem:[%s179 + $0x280] sm:$0xff]
                %262 = vst [vmem:[%s180 + $0x140] sm:$0xff] %v261
                %v263 = vld [vmem:[%s179 + $0x288] sm:$0xff]
                %264 = vst [vmem:[%s180 + $0x148] sm:$0xff] %v263
                %v265 = vld [vmem:[%s179 + $0x2a0] sm:$0xff]
                %266 = vst [vmem:[%s180 + $0x150] sm:$0xff] %v265
                %v267 = vld [vmem:[%s179 + $0x2a8] sm:$0xff]
                %268 = vst [vmem:[%s180 + $0x158] sm:$0xff] %v267
                %v269 = vld [vmem:[%s179 + $0x2c0] sm:$0xff]
                %270 = vst [vmem:[%s180 + $0x160] sm:$0xff] %v269
                %v271 = vld [vmem:[%s179 + $0x2c8] sm:$0xff]
                %272 = vst [vmem:[%s180 + $0x168] sm:$0xff] %v271
                %v273 = vld [vmem:[%s179 + $0x2e0] sm:$0xff]
                %274 = vst [vmem:[%s180 + $0x170] sm:$0xff] %v273
                %v275 = vld [vmem:[%s179 + $0x2e8] sm:$0xff]
                %276 = vst [vmem:[%s180 + $0x178] sm:$0xff] %v275
                %v277 = vld [vmem:[%s179 + $0x300] sm:$0xff]
                %278 = vst [vmem:[%s180 + $0x180] sm:$0xff] %v277
                %v279 = vld [vmem:[%s179 + $0x308] sm:$0xff]
                %280 = vst [vmem:[%s180 + $0x188] sm:$0xff] %v279
                %v281 = vld [vmem:[%s179 + $0x320] sm:$0xff]
                %282 = vst [vmem:[%s180 + $0x190] sm:$0xff] %v281
                %v283 = vld [vmem:[%s179 + $0x328] sm:$0xff]
                %284 = vst [vmem:[%s180 + $0x198] sm:$0xff] %v283
                %v285 = vld [vmem:[%s179 + $0x340] sm:$0xff]
                %286 = vst [vmem:[%s180 + $0x1a0] sm:$0xff] %v285
                %v287 = vld [vmem:[%s179 + $0x348] sm:$0xff]
                %288 = vst [vmem:[%s180 + $0x1a8] sm:$0xff] %v287
                %v289 = vld [vmem:[%s179 + $0x360] sm:$0xff]
                %290 = vst [vmem:[%s180 + $0x1b0] sm:$0xff] %v289
                %v291 = vld [vmem:[%s179 + $0x368] sm:$0xff]
                %292 = vst [vmem:[%s180 + $0x1b8] sm:$0xff] %v291
                %v293 = vld [vmem:[%s179 + $0x380] sm:$0xff]
                %294 = vst [vmem:[%s180 + $0x1c0] sm:$0xff] %v293
                %v295 = vld [vmem:[%s179 + $0x388] sm:$0xff]
                %296 = vst [vmem:[%s180 + $0x1c8] sm:$0xff] %v295
                %v297 = vld [vmem:[%s179 + $0x3a0] sm:$0xff]
                %298 = vst [vmem:[%s180 + $0x1d0] sm:$0xff] %v297
                %v299 = vld [vmem:[%s179 + $0x3a8] sm:$0xff]
                %300 = vst [vmem:[%s180 + $0x1d8] sm:$0xff] %v299
                %v301 = vld [vmem:[%s179 + $0x3c0] sm:$0xff]
                %302 = vst [vmem:[%s180 + $0x1e0] sm:$0xff] %v301
                %v303 = vld [vmem:[%s179 + $0x3c8] sm:$0xff]
                %304 = vst [vmem:[%s180 + $0x1e8] sm:$0xff] %v303
                %v305 = vld [vmem:[%s179 + $0x3e0] sm:$0xff]
                %306 = vst [vmem:[%s180 + $0x1f0] sm:$0xff] %v305
                %v307 = vld [vmem:[%s179 + $0x3e8] sm:$0xff]
                %308 = vst [vmem:[%s180 + $0x1f8] sm:$0xff] %v307
              $region37: #{vae_forward.3} parent=31 // loop_footer
                %s178 = sadd.s32 1, %s174
              $region38: #{vae_forward.3} parent=31 // loop_footer_branch
                %173 = sbr.rel target = $region34
              $region39: #{vae_forward.3} parent=31 // loop_exit
                _
            $region32: #{vae_forward.3} parent=27 // pred_fallthru
              _
            // Predicated region
            $region40: #{vae_forward.3} parent=27 // pred_check
              _
            $region41: #{vae_forward.3} parent=27 // pred_check_branch
              %310 = sbr.rel target = $region43
            $region42: #{vae_forward.3} parent=27 // pred_region
              _
            $region43: #{vae_forward.3} parent=27 // pred_fallthru
              _
          $region28: #{vae_forward.3} parent=23 // pred_fallthru
            _
          %311 = vnop
        $region24: #{vae_forward.3} parent=15 // pred_fallthru
          _
        // Predicated region
        $region44: #{vae_forward.3} parent=15 // pred_check
          %p312 = pneg %p96
        $region45: #{vae_forward.3} parent=15 // pred_check_branch
          %314 = sbr.rel (%p312) target = $region47
        $region46: #{vae_forward.3} parent=15 // pred_region
          %s315 = smul.u32 4, %s20
          %p316 = scmp.lt.s32.totalorder %s315, 7
          %s317 = scalar_select %p316, %s315, 7
          %s318 = scalar_lea.vmem %s2, %s317
          %s319 = smul.u32 4, %s20
        $region47: #{vae_forward.3} parent=15 // pred_fallthru
          _
      $region16: #{vae_forward.3} parent=5 // pred_fallthru
        _
      %p320 = scmp.le.s32.totalorder 1, %s12
      %p321 = scmp.lt.s32.totalorder %s12, 5
      %p322 = pnand %p320, %p321
      %p323 = pneg %p322
      // Predicated region
      $region48: #{vae_forward.3} parent=5 // pred_check
        _
      $region49: #{vae_forward.3} parent=5 // pred_check_branch
        %325 = sbr.rel (%p322) target = $region51
      $region50: #{vae_forward.3} parent=5 // pred_region
        %s326 = ssub.s32 %s12, 1
        %s327 = sand.u32 %s63, 1
        %s328 = sand.u32 %s63, 1
        %s329 = smul.addr %s328, 512
        %s330 = scalar_lea.vmem [#allocation2], %s329
        // Predicated region
        $region52: #{vae_forward.3} parent=50 // pred_check
          %p331 = pneg %p76
        $region53: #{vae_forward.3} parent=50 // pred_check_branch
          %333 = sbr.rel (%p331) target = $region55
        $region54: #{vae_forward.3} parent=50 // pred_region
          _
        $region55: #{vae_forward.3} parent=50 // pred_fallthru
          _
        %s334 = smul.u32 16, %s21
        %p335 = scmp.lt.s32.totalorder %s334, 31
        %s336 = scalar_select %p335, %s334, 31
        %s337 = smul.addr %s336, 2
        %s338 = smul.addr %s337, 4
        %s339 = scalar_lea.vmem %s0, %s338
        %p340 = pneg %p50
        %p341 = pneg %p47
        %s342 = sand.u32 %s63, 1
        %s343 = sand.u32 %s63, 1
        %s344 = smul.addr %s343, 512
        %s345 = scalar_lea.vmem [#allocation2], %s344
        %p346 = pneg %p76
        %p347 = pneg %p73
        %s348 = smul.u32 4, %s22
        %p349 = scmp.lt.s32.totalorder %s348, 7
        %s350 = scalar_select %p349, %s348, 7
        %s351 = scalar_lea.vmem %s2, %s350
        %p352 = pneg %p102
        %p353 = pneg %p99
        %p354 = pneg %p130
        %p355 = pneg %p127
        %s356 = sand.u32 %s117, 1
        %s357 = scalar_lea.sflag [#allocation4], %s356
        %s358 = sand.u32 %s117, 1
        %s359 = smul.addr %s358, 512
        %s360 = scalar_lea.vmem [#allocation3], %s359
        %s361 = smul.u32 16, %s21
        %p362 = scmp.lt.s32.totalorder %s361, 31
        %s363 = scalar_select %p362, %s361, 31
        %s364 = smul.addr %s363, 2
        %s365 = smul.addr %s364, 4
        %s366 = scalar_lea.vmem %s0, %s365
        %s367 = smul.u32 16, %s21
        %s368 = smul.u32 4, %s22
        %s369 = smul.u32 4, %s22
        %p370 = scmp.lt.s32.totalorder %s369, 7
        %s371 = scalar_select %p370, %s369, 7
        %s372 = scalar_lea.vmem %s2, %s371
        %s373 = smul.u32 4, %s22
        %s374 = smul.u32 16, %s21
        %s375 = smul.u32 4, %s22
        %v376 = vld [vmem:[%s366] sm:$0xff]
        %v377 = vld [vmem:[%s366 + $0x8] sm:$0xff]
        %v378 = vld [vmem:[%s366 + $0x10] sm:$0xff]
        %v379 = vld [vmem:[%s366 + $0x18] sm:$0xff]
        %v380 = vld [vmem:[%s366 + $0x20] sm:$0xff]
        %v381 = vld [vmem:[%s366 + $0x28] sm:$0xff]
        %v382 = vld [vmem:[%s366 + $0x30] sm:$0xff]
        %v383 = vld [vmem:[%s366 + $0x38] sm:$0xff]
        %v384 = vld [vmem:[%s366 + $0x40] sm:$0xff]
        %v385 = vld [vmem:[%s366 + $0x48] sm:$0xff]
        %v386 = vld [vmem:[%s366 + $0x50] sm:$0xff]
        %v387 = vld [vmem:[%s366 + $0x58] sm:$0xff]
        %v388 = vld [vmem:[%s366 + $0x60] sm:$0xff]
        %v389 = vld [vmem:[%s366 + $0x68] sm:$0xff]
        %v390 = vld [vmem:[%s366 + $0x70] sm:$0xff]
        %v391 = vld [vmem:[%s366 + $0x78] sm:$0xff]
        %v392 = vld [vmem:[%s330] sm:$0xff]
        %v393 = vld [vmem:[%s330 + $0x8] sm:$0xff]
        %v394 = vld [vmem:[%s330 + $0x10] sm:$0xff]
        %v395 = vld [vmem:[%s330 + $0x18] sm:$0xff]
        %v396 = vld [vmem:[%s330 + $0x20] sm:$0xff]
        %v397 = vld [vmem:[%s330 + $0x28] sm:$0xff]
        %v398 = vld [vmem:[%s330 + $0x30] sm:$0xff]
        %v399 = vld [vmem:[%s330 + $0x38] sm:$0xff]
        %v400 = vld [vmem:[%s330 + $0x40] sm:$0xff]
        %v401 = vld [vmem:[%s330 + $0x48] sm:$0xff]
        %v402 = vld [vmem:[%s330 + $0x50] sm:$0xff]
        %v403 = vld [vmem:[%s330 + $0x58] sm:$0xff]
        %v404 = vld [vmem:[%s330 + $0x60] sm:$0xff]
        %v405 = vld [vmem:[%s330 + $0x68] sm:$0xff]
        %v406 = vld [vmem:[%s330 + $0x70] sm:$0xff]
        %v407 = vld [vmem:[%s330 + $0x78] sm:$0xff]
        %v408 = vld [vmem:[%s330 + $0x80] sm:$0xff]
        %v409 = vld [vmem:[%s330 + $0x88] sm:$0xff]
        %v410 = vld [vmem:[%s330 + $0x90] sm:$0xff]
        %v411 = vld [vmem:[%s330 + $0x98] sm:$0xff]
        %v412 = vld [vmem:[%s330 + $0xa0] sm:$0xff]
        %v413 = vld [vmem:[%s330 + $0xa8] sm:$0xff]
        %v414 = vld [vmem:[%s330 + $0xb0] sm:$0xff]
        %v415 = vld [vmem:[%s330 + $0xb8] sm:$0xff]
        %v416 = vld [vmem:[%s330 + $0xc0] sm:$0xff]
        %v417 = vld [vmem:[%s330 + $0xc8] sm:$0xff]
        %v418 = vld [vmem:[%s330 + $0xd0] sm:$0xff]
        %v419 = vld [vmem:[%s330 + $0xd8] sm:$0xff]
        %v420 = vld [vmem:[%s330 + $0xe0] sm:$0xff]
        %v421 = vld [vmem:[%s330 + $0xe8] sm:$0xff]
        %v422 = vld [vmem:[%s330 + $0xf0] sm:$0xff]
        %v423 = vld [vmem:[%s330 + $0xf8] sm:$0xff]
        %v424 = vld [vmem:[%s330 + $0x100] sm:$0xff]
        %v425 = vld [vmem:[%s330 + $0x108] sm:$0xff]
        %v426 = vld [vmem:[%s330 + $0x110] sm:$0xff]
        %v427 = vld [vmem:[%s330 + $0x118] sm:$0xff]
        %v428 = vld [vmem:[%s330 + $0x120] sm:$0xff]
        %v429 = vld [vmem:[%s330 + $0x128] sm:$0xff]
        %v430 = vld [vmem:[%s330 + $0x130] sm:$0xff]
        %v431 = vld [vmem:[%s330 + $0x138] sm:$0xff]
        %v432 = vld [vmem:[%s330 + $0x140] sm:$0xff]
        %v433 = vld [vmem:[%s330 + $0x148] sm:$0xff]
        %v434 = vld [vmem:[%s330 + $0x150] sm:$0xff]
        %v435 = vld [vmem:[%s330 + $0x158] sm:$0xff]
        %v436 = vld [vmem:[%s330 + $0x160] sm:$0xff]
        %v437 = vld [vmem:[%s330 + $0x168] sm:$0xff]
        %v438 = vld [vmem:[%s330 + $0x170] sm:$0xff]
        %v439 = vld [vmem:[%s330 + $0x178] sm:$0xff]
        %v440 = vld [vmem:[%s330 + $0x180] sm:$0xff]
        %v441 = vld [vmem:[%s330 + $0x188] sm:$0xff]
        %v442 = vld [vmem:[%s330 + $0x190] sm:$0xff]
        %v443 = vld [vmem:[%s330 + $0x198] sm:$0xff]
        %v444 = vld [vmem:[%s330 + $0x1a0] sm:$0xff]
        %v445 = vld [vmem:[%s330 + $0x1a8] sm:$0xff]
        %v446 = vld [vmem:[%s330 + $0x1b0] sm:$0xff]
        %v447 = vld [vmem:[%s330 + $0x1b8] sm:$0xff]
        %v448 = vld [vmem:[%s330 + $0x1c0] sm:$0xff]
        %v449 = vld [vmem:[%s330 + $0x1c8] sm:$0xff]
        %v450 = vld [vmem:[%s330 + $0x1d0] sm:$0xff]
        %v451 = vld [vmem:[%s330 + $0x1d8] sm:$0xff]
        %v452 = vld [vmem:[%s330 + $0x1e0] sm:$0xff]
        %v453 = vld [vmem:[%s330 + $0x1e8] sm:$0xff]
        %v454 = vld [vmem:[%s330 + $0x1f0] sm:$0xff]
        %v455 = vld [vmem:[%s330 + $0x1f8] sm:$0xff]
        %v456 = vld [vmem:[%s372] sm:$0xf]
        %v458 = vperm.slane %v456, 0
        %v459 = vperm.slane %v456, 1
        %v460 = vperm.slane %v456, 2
        %v461 = vperm.slane %v456, 3
        %v482 = vunpack.c.l.b16 %v376
        %v483 = vunpack.c.h.b16 %v376
        %v484 = vunpack.c.l.b16 %v377
        %v485 = vunpack.c.h.b16 %v377
        %v486 = vunpack.c.l.b16 %v378
        %v487 = vunpack.c.h.b16 %v378
        %v488 = vunpack.c.l.b16 %v379
        %v489 = vunpack.c.h.b16 %v379
        %v490 = vunpack.c.l.b16 %v380
        %v491 = vunpack.c.h.b16 %v380
        %v492 = vunpack.c.l.b16 %v381
        %v493 = vunpack.c.h.b16 %v381
        %v494 = vunpack.c.l.b16 %v382
        %v495 = vunpack.c.h.b16 %v382
        %v496 = vunpack.c.l.b16 %v383
        %v497 = vunpack.c.h.b16 %v383
        %v498 = vunpack.c.l.b16 %v384
        %v499 = vunpack.c.h.b16 %v384
        %v500 = vunpack.c.l.b16 %v385
        %v501 = vunpack.c.h.b16 %v385
        %v502 = vunpack.c.l.b16 %v386
        %v503 = vunpack.c.h.b16 %v386
        %v504 = vunpack.c.l.b16 %v387
        %v505 = vunpack.c.h.b16 %v387
        %v506 = vunpack.c.l.b16 %v388
        %v507 = vunpack.c.h.b16 %v388
        %v508 = vunpack.c.l.b16 %v389
        %v509 = vunpack.c.h.b16 %v389
        %v510 = vunpack.c.l.b16 %v390
        %v511 = vunpack.c.h.b16 %v390
        %v512 = vunpack.c.l.b16 %v391
        %v513 = vunpack.c.h.b16 %v391
        %v514 = vpack.c.b16 %v484, %v482
        %v515 = vpack.c.b16 %v485, %v483
        %v516 = vpack.c.b16 %v488, %v486
        %v517 = vpack.c.b16 %v489, %v487
        %v518 = vpack.c.b16 %v492, %v490
        %v519 = vpack.c.b16 %v493, %v491
        %v520 = vpack.c.b16 %v496, %v494
        %v521 = vpack.c.b16 %v497, %v495
        %v522 = vpack.c.b16 %v500, %v498
        %v523 = vpack.c.b16 %v501, %v499
        %v524 = vpack.c.b16 %v504, %v502
        %v525 = vpack.c.b16 %v505, %v503
        %v526 = vpack.c.b16 %v508, %v506
        %v527 = vpack.c.b16 %v509, %v507
        %v528 = vpack.c.b16 %v512, %v510
        %v529 = vpack.c.b16 %v513, %v511
        %v610 = vunpack.c.l.b16 %v392
        %v611 = vunpack.c.h.b16 %v392
        %v612 = vunpack.c.l.b16 %v393
        %v613 = vunpack.c.h.b16 %v393
        %v614 = vunpack.c.l.b16 %v394
        %v615 = vunpack.c.h.b16 %v394
        %v616 = vunpack.c.l.b16 %v395
        %v617 = vunpack.c.h.b16 %v395
        %v618 = vunpack.c.l.b16 %v396
        %v619 = vunpack.c.h.b16 %v396
        %v620 = vunpack.c.l.b16 %v397
        %v621 = vunpack.c.h.b16 %v397
        %v622 = vunpack.c.l.b16 %v398
        %v623 = vunpack.c.h.b16 %v398
        %v624 = vunpack.c.l.b16 %v399
        %v625 = vunpack.c.h.b16 %v399
        %v626 = vunpack.c.l.b16 %v400
        %v627 = vunpack.c.h.b16 %v400
        %v628 = vunpack.c.l.b16 %v401
        %v629 = vunpack.c.h.b16 %v401
        %v630 = vunpack.c.l.b16 %v402
        %v631 = vunpack.c.h.b16 %v402
        %v632 = vunpack.c.l.b16 %v403
        %v633 = vunpack.c.h.b16 %v403
        %v634 = vunpack.c.l.b16 %v404
        %v635 = vunpack.c.h.b16 %v404
        %v636 = vunpack.c.l.b16 %v405
        %v637 = vunpack.c.h.b16 %v405
        %v638 = vunpack.c.l.b16 %v406
        %v639 = vunpack.c.h.b16 %v406
        %v640 = vunpack.c.l.b16 %v407
        %v641 = vunpack.c.h.b16 %v407
        %v642 = vunpack.c.l.b16 %v408
        %v643 = vunpack.c.h.b16 %v408
        %v644 = vunpack.c.l.b16 %v409
        %v645 = vunpack.c.h.b16 %v409
        %v646 = vunpack.c.l.b16 %v410
        %v647 = vunpack.c.h.b16 %v410
        %v648 = vunpack.c.l.b16 %v411
        %v649 = vunpack.c.h.b16 %v411
        %v650 = vunpack.c.l.b16 %v412
        %v651 = vunpack.c.h.b16 %v412
        %v652 = vunpack.c.l.b16 %v413
        %v653 = vunpack.c.h.b16 %v413
        %v654 = vunpack.c.l.b16 %v414
        %v655 = vunpack.c.h.b16 %v414
        %v656 = vunpack.c.l.b16 %v415
        %v657 = vunpack.c.h.b16 %v415
        %v658 = vunpack.c.l.b16 %v416
        %v659 = vunpack.c.h.b16 %v416
        %v660 = vunpack.c.l.b16 %v417
        %v661 = vunpack.c.h.b16 %v417
        %v662 = vunpack.c.l.b16 %v418
        %v663 = vunpack.c.h.b16 %v418
        %v664 = vunpack.c.l.b16 %v419
        %v665 = vunpack.c.h.b16 %v419
        %v666 = vunpack.c.l.b16 %v420
        %v667 = vunpack.c.h.b16 %v420
        %v668 = vunpack.c.l.b16 %v421
        %v669 = vunpack.c.h.b16 %v421
        %v670 = vunpack.c.l.b16 %v422
        %v671 = vunpack.c.h.b16 %v422
        %v672 = vunpack.c.l.b16 %v423
        %v673 = vunpack.c.h.b16 %v423
        %v674 = vunpack.c.l.b16 %v424
        %v675 = vunpack.c.h.b16 %v424
        %v676 = vunpack.c.l.b16 %v425
        %v677 = vunpack.c.h.b16 %v425
        %v678 = vunpack.c.l.b16 %v426
        %v679 = vunpack.c.h.b16 %v426
        %v680 = vunpack.c.l.b16 %v427
        %v681 = vunpack.c.h.b16 %v427
        %v682 = vunpack.c.l.b16 %v428
        %v683 = vunpack.c.h.b16 %v428
        %v684 = vunpack.c.l.b16 %v429
        %v685 = vunpack.c.h.b16 %v429
        %v686 = vunpack.c.l.b16 %v430
        %v687 = vunpack.c.h.b16 %v430
        %v688 = vunpack.c.l.b16 %v431
        %v689 = vunpack.c.h.b16 %v431
        %v690 = vunpack.c.l.b16 %v432
        %v691 = vunpack.c.h.b16 %v432
        %v692 = vunpack.c.l.b16 %v433
        %v693 = vunpack.c.h.b16 %v433
        %v694 = vunpack.c.l.b16 %v434
        %v695 = vunpack.c.h.b16 %v434
        %v696 = vunpack.c.l.b16 %v435
        %v697 = vunpack.c.h.b16 %v435
        %v698 = vunpack.c.l.b16 %v436
        %v699 = vunpack.c.h.b16 %v436
        %v700 = vunpack.c.l.b16 %v437
        %v701 = vunpack.c.h.b16 %v437
        %v702 = vunpack.c.l.b16 %v438
        %v703 = vunpack.c.h.b16 %v438
        %v704 = vunpack.c.l.b16 %v439
        %v705 = vunpack.c.h.b16 %v439
        %v706 = vunpack.c.l.b16 %v440
        %v707 = vunpack.c.h.b16 %v440
        %v708 = vunpack.c.l.b16 %v441
        %v709 = vunpack.c.h.b16 %v441
        %v710 = vunpack.c.l.b16 %v442
        %v711 = vunpack.c.h.b16 %v442
        %v712 = vunpack.c.l.b16 %v443
        %v713 = vunpack.c.h.b16 %v443
        %v714 = vunpack.c.l.b16 %v444
        %v715 = vunpack.c.h.b16 %v444
        %v716 = vunpack.c.l.b16 %v445
        %v717 = vunpack.c.h.b16 %v445
        %v718 = vunpack.c.l.b16 %v446
        %v719 = vunpack.c.h.b16 %v446
        %v720 = vunpack.c.l.b16 %v447
        %v721 = vunpack.c.h.b16 %v447
        %v722 = vunpack.c.l.b16 %v448
        %v723 = vunpack.c.h.b16 %v448
        %v724 = vunpack.c.l.b16 %v449
        %v725 = vunpack.c.h.b16 %v449
        %v726 = vunpack.c.l.b16 %v450
        %v727 = vunpack.c.h.b16 %v450
        %v728 = vunpack.c.l.b16 %v451
        %v729 = vunpack.c.h.b16 %v451
        %v730 = vunpack.c.l.b16 %v452
        %v731 = vunpack.c.h.b16 %v452
        %v732 = vunpack.c.l.b16 %v453
        %v733 = vunpack.c.h.b16 %v453
        %v734 = vunpack.c.l.b16 %v454
        %v735 = vunpack.c.h.b16 %v454
        %v736 = vunpack.c.l.b16 %v455
        %v737 = vunpack.c.h.b16 %v455
        %v738 = vpack.c.b16 %v614, %v610
        %v739 = vpack.c.b16 %v615, %v611
        %v740 = vpack.c.b16 %v616, %v612
        %v741 = vpack.c.b16 %v617, %v613
        %v742 = vpack.c.b16 %v622, %v618
        %v743 = vpack.c.b16 %v623, %v619
        %v744 = vpack.c.b16 %v624, %v620
        %v745 = vpack.c.b16 %v625, %v621
        %v746 = vpack.c.b16 %v630, %v626
        %v747 = vpack.c.b16 %v631, %v627
        %v748 = vpack.c.b16 %v632, %v628
        %v749 = vpack.c.b16 %v633, %v629
        %v750 = vpack.c.b16 %v638, %v634
        %v751 = vpack.c.b16 %v639, %v635
        %v752 = vpack.c.b16 %v640, %v636
        %v753 = vpack.c.b16 %v641, %v637
        %v754 = vpack.c.b16 %v646, %v642
        %v755 = vpack.c.b16 %v647, %v643
        %v756 = vpack.c.b16 %v648, %v644
        %v757 = vpack.c.b16 %v649, %v645
        %v758 = vpack.c.b16 %v654, %v650
        %v759 = vpack.c.b16 %v655, %v651
        %v760 = vpack.c.b16 %v656, %v652
        %v761 = vpack.c.b16 %v657, %v653
        %v762 = vpack.c.b16 %v662, %v658
        %v763 = vpack.c.b16 %v663, %v659
        %v764 = vpack.c.b16 %v664, %v660
        %v765 = vpack.c.b16 %v665, %v661
        %v766 = vpack.c.b16 %v670, %v666
        %v767 = vpack.c.b16 %v671, %v667
        %v768 = vpack.c.b16 %v672, %v668
        %v769 = vpack.c.b16 %v673, %v669
        %v770 = vpack.c.b16 %v678, %v674
        %v771 = vpack.c.b16 %v679, %v675
        %v772 = vpack.c.b16 %v680, %v676
        %v773 = vpack.c.b16 %v681, %v677
        %v774 = vpack.c.b16 %v686, %v682
        %v775 = vpack.c.b16 %v687, %v683
        %v776 = vpack.c.b16 %v688, %v684
        %v777 = vpack.c.b16 %v689, %v685
        %v778 = vpack.c.b16 %v694, %v690
        %v779 = vpack.c.b16 %v695, %v691
        %v780 = vpack.c.b16 %v696, %v692
        %v781 = vpack.c.b16 %v697, %v693
        %v782 = vpack.c.b16 %v702, %v698
        %v783 = vpack.c.b16 %v703, %v699
        %v784 = vpack.c.b16 %v704, %v700
        %v785 = vpack.c.b16 %v705, %v701
        %v786 = vpack.c.b16 %v710, %v706
        %v787 = vpack.c.b16 %v711, %v707
        %v788 = vpack.c.b16 %v712, %v708
        %v789 = vpack.c.b16 %v713, %v709
        %v790 = vpack.c.b16 %v718, %v714
        %v791 = vpack.c.b16 %v719, %v715
        %v792 = vpack.c.b16 %v720, %v716
        %v793 = vpack.c.b16 %v721, %v717
        %v794 = vpack.c.b16 %v726, %v722
        %v795 = vpack.c.b16 %v727, %v723
        %v796 = vpack.c.b16 %v728, %v724
        %v797 = vpack.c.b16 %v729, %v725
        %v798 = vpack.c.b16 %v734, %v730
        %v799 = vpack.c.b16 %v735, %v731
        %v800 = vpack.c.b16 %v736, %v732
        %v801 = vpack.c.b16 %v737, %v733
        %866 = vmatpush.bf16.msra.mxu0 %v766
        %867 = vmatpush.bf16.msra.mxu0 %v762
        %868 = vmatpush.bf16.msra.mxu0 %v758
        %869 = vmatpush.bf16.msra.mxu0 %v754
        %870 = vmatpush.bf16.msra.mxu0 %v750
        %871 = vmatpush.bf16.msra.mxu0 %v746
        %872 = vmatpush.bf16.msra.mxu0 %v742
        %873 = vmatpush.bf16.msra.mxu0 %v738
        %874 = vmatmul.bf16.gmra.mxu0 %v514
        %v875 = vpop.f32.mrf.mxu0
        %v876 = vadd.f32 %v458, %v875
        %v877 = vpop.f32.mrf.mxu0
        %v878 = vadd.f32 %v458, %v877
        %879 = vmatmul.bf16.gmra.mxu0 %v516
        %v880 = vpop.f32.mrf.mxu0
        %v881 = vadd.f32 %v458, %v880
        %v882 = vpop.f32.mrf.mxu0
        %v883 = vadd.f32 %v458, %v882
        %884 = vmatmul.bf16.gmra.mxu0 %v518
        %v885 = vpop.f32.mrf.mxu0
        %v886 = vadd.f32 %v458, %v885
        %v887 = vpop.f32.mrf.mxu0
        %v888 = vadd.f32 %v458, %v887
        %889 = vmatmul.bf16.gmra.mxu0 %v520
        %v890 = vpop.f32.mrf.mxu0
        %v891 = vadd.f32 %v458, %v890
        %v892 = vpop.f32.mrf.mxu0
        %v893 = vadd.f32 %v458, %v892
        %894 = vmatmul.bf16.gmra.mxu0 %v522
        %v895 = vpop.f32.mrf.mxu0
        %v896 = vadd.f32 %v458, %v895
        %v897 = vpop.f32.mrf.mxu0
        %v898 = vadd.f32 %v458, %v897
        %899 = vmatmul.bf16.gmra.mxu0 %v524
        %v900 = vpop.f32.mrf.mxu0
        %v901 = vadd.f32 %v458, %v900
        %v902 = vpop.f32.mrf.mxu0
        %v903 = vadd.f32 %v458, %v902
        %904 = vmatmul.bf16.gmra.mxu0 %v526
        %v905 = vpop.f32.mrf.mxu0
        %v906 = vadd.f32 %v458, %v905
        %v907 = vpop.f32.mrf.mxu0
        %v908 = vadd.f32 %v458, %v907
        %909 = vmatmul.bf16.gmra.mxu0 %v528
        %v910 = vpop.f32.mrf.mxu0
        %v911 = vadd.f32 %v458, %v910
        %v912 = vpop.f32.mrf.mxu0
        %v913 = vadd.f32 %v458, %v912
        %914 = vdwg.mxu0
        %915 = vmatpush.bf16.msra.mxu0 %v798
        %916 = vmatpush.bf16.msra.mxu0 %v794
        %917 = vmatpush.bf16.msra.mxu0 %v790
        %918 = vmatpush.bf16.msra.mxu0 %v786
        %919 = vmatpush.bf16.msra.mxu0 %v782
        %920 = vmatpush.bf16.msra.mxu0 %v778
        %921 = vmatpush.bf16.msra.mxu0 %v774
        %922 = vmatpush.bf16.msra.mxu0 %v770
        %923 = vmatmul.bf16.gmra.mxu0 %v515
        %v924 = vpop.f32.mrf.mxu0
        %v925 = vadd.f32 %v876, %v924
        %v926 = vpop.f32.mrf.mxu0
        %v927 = vadd.f32 %v878, %v926
        %928 = vmatmul.bf16.gmra.mxu0 %v517
        %v929 = vpop.f32.mrf.mxu0
        %v930 = vadd.f32 %v881, %v929
        %v931 = vpop.f32.mrf.mxu0
        %v932 = vadd.f32 %v883, %v931
        %933 = vmatmul.bf16.gmra.mxu0 %v519
        %v934 = vpop.f32.mrf.mxu0
        %v935 = vadd.f32 %v886, %v934
        %v936 = vpop.f32.mrf.mxu0
        %v937 = vadd.f32 %v888, %v936
        %938 = vmatmul.bf16.gmra.mxu0 %v521
        %v939 = vpop.f32.mrf.mxu0
        %v940 = vadd.f32 %v891, %v939
        %v941 = vpop.f32.mrf.mxu0
        %v942 = vadd.f32 %v893, %v941
        %943 = vmatmul.bf16.gmra.mxu0 %v523
        %v944 = vpop.f32.mrf.mxu0
        %v945 = vadd.f32 %v896, %v944
        %v946 = vpop.f32.mrf.mxu0
        %v947 = vadd.f32 %v898, %v946
        %948 = vmatmul.bf16.gmra.mxu0 %v525
        %v949 = vpop.f32.mrf.mxu0
        %v950 = vadd.f32 %v901, %v949
        %v951 = vpop.f32.mrf.mxu0
        %v952 = vadd.f32 %v903, %v951
        %953 = vmatmul.bf16.gmra.mxu0 %v527
        %v954 = vpop.f32.mrf.mxu0
        %v955 = vadd.f32 %v906, %v954
        %v956 = vpop.f32.mrf.mxu0
        %v957 = vadd.f32 %v908, %v956
        %958 = vmatmul.bf16.gmra.mxu0 %v529
        %v959 = vpop.f32.mrf.mxu0
        %v960 = vadd.f32 %v911, %v959
        %v961 = vpop.f32.mrf.mxu0
        %v962 = vadd.f32 %v913, %v961
        %963 = vdwg.mxu0
        %964 = vmatpush.bf16.msra.mxu0 %v767
        %965 = vmatpush.bf16.msra.mxu0 %v763
        %966 = vmatpush.bf16.msra.mxu0 %v759
        %967 = vmatpush.bf16.msra.mxu0 %v755
        %968 = vmatpush.bf16.msra.mxu0 %v751
        %969 = vmatpush.bf16.msra.mxu0 %v747
        %970 = vmatpush.bf16.msra.mxu0 %v743
        %971 = vmatpush.bf16.msra.mxu0 %v739
        %972 = vmatmul.bf16.gmra.mxu0 %v514
        %v973 = vpop.f32.mrf.mxu0
        %v974 = vadd.f32 %v459, %v973
        %v975 = vpop.f32.mrf.mxu0
        %v976 = vadd.f32 %v459, %v975
        %977 = vmatmul.bf16.gmra.mxu0 %v516
        %v978 = vpop.f32.mrf.mxu0
        %v979 = vadd.f32 %v459, %v978
        %v980 = vpop.f32.mrf.mxu0
        %v981 = vadd.f32 %v459, %v980
        %982 = vmatmul.bf16.gmra.mxu0 %v518
        %v983 = vpop.f32.mrf.mxu0
        %v984 = vadd.f32 %v459, %v983
        %v985 = vpop.f32.mrf.mxu0
        %v986 = vadd.f32 %v459, %v985
        %987 = vmatmul.bf16.gmra.mxu0 %v520
        %v988 = vpop.f32.mrf.mxu0
        %v989 = vadd.f32 %v459, %v988
        %v990 = vpop.f32.mrf.mxu0
        %v991 = vadd.f32 %v459, %v990
        %992 = vmatmul.bf16.gmra.mxu0 %v522
        %v993 = vpop.f32.mrf.mxu0
        %v994 = vadd.f32 %v459, %v993
        %v995 = vpop.f32.mrf.mxu0
        %v996 = vadd.f32 %v459, %v995
        %997 = vmatmul.bf16.gmra.mxu0 %v524
        %v998 = vpop.f32.mrf.mxu0
        %v999 = vadd.f32 %v459, %v998
        %v1000 = vpop.f32.mrf.mxu0
        %v1001 = vadd.f32 %v459, %v1000
        %1002 = vmatmul.bf16.gmra.mxu0 %v526
        %v1003 = vpop.f32.mrf.mxu0
        %v1004 = vadd.f32 %v459, %v1003
        %v1005 = vpop.f32.mrf.mxu0
        %v1006 = vadd.f32 %v459, %v1005
        %1007 = vmatmul.bf16.gmra.mxu0 %v528
        %v1008 = vpop.f32.mrf.mxu0
        %v1009 = vadd.f32 %v459, %v1008
        %v1010 = vpop.f32.mrf.mxu0
        %v1011 = vadd.f32 %v459, %v1010
        %1012 = vdwg.mxu0
        %1013 = vmatpush.bf16.msra.mxu0 %v799
        %1014 = vmatpush.bf16.msra.mxu0 %v795
        %1015 = vmatpush.bf16.msra.mxu0 %v791
        %1016 = vmatpush.bf16.msra.mxu0 %v787
        %1017 = vmatpush.bf16.msra.mxu0 %v783
        %1018 = vmatpush.bf16.msra.mxu0 %v779
        %1019 = vmatpush.bf16.msra.mxu0 %v775
        %1020 = vmatpush.bf16.msra.mxu0 %v771
        %1021 = vmatmul.bf16.gmra.mxu0 %v515
        %v1022 = vpop.f32.mrf.mxu0
        %v1023 = vadd.f32 %v974, %v1022
        %v1024 = vpop.f32.mrf.mxu0
        %v1025 = vadd.f32 %v976, %v1024
        %1026 = vmatmul.bf16.gmra.mxu0 %v517
        %v1027 = vpop.f32.mrf.mxu0
        %v1028 = vadd.f32 %v979, %v1027
        %v1029 = vpop.f32.mrf.mxu0
        %v1030 = vadd.f32 %v981, %v1029
        %1031 = vmatmul.bf16.gmra.mxu0 %v519
        %v1032 = vpop.f32.mrf.mxu0
        %v1033 = vadd.f32 %v984, %v1032
        %v1034 = vpop.f32.mrf.mxu0
        %v1035 = vadd.f32 %v986, %v1034
        %1036 = vmatmul.bf16.gmra.mxu0 %v521
        %v1037 = vpop.f32.mrf.mxu0
        %v1038 = vadd.f32 %v989, %v1037
        %v1039 = vpop.f32.mrf.mxu0
        %v1040 = vadd.f32 %v991, %v1039
        %1041 = vmatmul.bf16.gmra.mxu0 %v523
        %v1042 = vpop.f32.mrf.mxu0
        %v1043 = vadd.f32 %v994, %v1042
        %v1044 = vpop.f32.mrf.mxu0
        %v1045 = vadd.f32 %v996, %v1044
        %1046 = vmatmul.bf16.gmra.mxu0 %v525
        %v1047 = vpop.f32.mrf.mxu0
        %v1048 = vadd.f32 %v999, %v1047
        %v1049 = vpop.f32.mrf.mxu0
        %v1050 = vadd.f32 %v1001, %v1049
        %1051 = vmatmul.bf16.gmra.mxu0 %v527
        %v1052 = vpop.f32.mrf.mxu0
        %v1053 = vadd.f32 %v1004, %v1052
        %v1054 = vpop.f32.mrf.mxu0
        %v1055 = vadd.f32 %v1006, %v1054
        %1056 = vmatmul.bf16.gmra.mxu0 %v529
        %v1057 = vpop.f32.mrf.mxu0
        %v1058 = vadd.f32 %v1009, %v1057
        %v1059 = vpop.f32.mrf.mxu0
        %v1060 = vadd.f32 %v1011, %v1059
        %1061 = vdwg.mxu0
        %1062 = vmatpush.bf16.msra.mxu0 %v768
        %1063 = vmatpush.bf16.msra.mxu0 %v764
        %1064 = vmatpush.bf16.msra.mxu0 %v760
        %1065 = vmatpush.bf16.msra.mxu0 %v756
        %1066 = vmatpush.bf16.msra.mxu0 %v752
        %1067 = vmatpush.bf16.msra.mxu0 %v748
        %1068 = vmatpush.bf16.msra.mxu0 %v744
        %1069 = vmatpush.bf16.msra.mxu0 %v740
        %1070 = vmatmul.bf16.gmra.mxu0 %v514
        %v1071 = vpop.f32.mrf.mxu0
        %v1072 = vadd.f32 %v460, %v1071
        %v1073 = vpop.f32.mrf.mxu0
        %v1074 = vadd.f32 %v460, %v1073
        %1075 = vmatmul.bf16.gmra.mxu0 %v516
        %v1076 = vpop.f32.mrf.mxu0
        %v1077 = vadd.f32 %v460, %v1076
        %v1078 = vpop.f32.mrf.mxu0
        %v1079 = vadd.f32 %v460, %v1078
        %1080 = vmatmul.bf16.gmra.mxu0 %v518
        %v1081 = vpop.f32.mrf.mxu0
        %v1082 = vadd.f32 %v460, %v1081
        %v1083 = vpop.f32.mrf.mxu0
        %v1084 = vadd.f32 %v460, %v1083
        %1085 = vmatmul.bf16.gmra.mxu0 %v520
        %v1086 = vpop.f32.mrf.mxu0
        %v1087 = vadd.f32 %v460, %v1086
        %v1088 = vpop.f32.mrf.mxu0
        %v1089 = vadd.f32 %v460, %v1088
        %1090 = vmatmul.bf16.gmra.mxu0 %v522
        %v1091 = vpop.f32.mrf.mxu0
        %v1092 = vadd.f32 %v460, %v1091
        %v1093 = vpop.f32.mrf.mxu0
        %v1094 = vadd.f32 %v460, %v1093
        %1095 = vmatmul.bf16.gmra.mxu0 %v524
        %v1096 = vpop.f32.mrf.mxu0
        %v1097 = vadd.f32 %v460, %v1096
        %v1098 = vpop.f32.mrf.mxu0
        %v1099 = vadd.f32 %v460, %v1098
        %1100 = vmatmul.bf16.gmra.mxu0 %v526
        %v1101 = vpop.f32.mrf.mxu0
        %v1102 = vadd.f32 %v460, %v1101
        %v1103 = vpop.f32.mrf.mxu0
        %v1104 = vadd.f32 %v460, %v1103
        %1105 = vmatmul.bf16.gmra.mxu0 %v528
        %v1106 = vpop.f32.mrf.mxu0
        %v1107 = vadd.f32 %v460, %v1106
        %v1108 = vpop.f32.mrf.mxu0
        %v1109 = vadd.f32 %v460, %v1108
        %1110 = vdwg.mxu0
        %1111 = vmatpush.bf16.msra.mxu0 %v800
        %1112 = vmatpush.bf16.msra.mxu0 %v796
        %1113 = vmatpush.bf16.msra.mxu0 %v792
        %1114 = vmatpush.bf16.msra.mxu0 %v788
        %1115 = vmatpush.bf16.msra.mxu0 %v784
        %1116 = vmatpush.bf16.msra.mxu0 %v780
        %1117 = vmatpush.bf16.msra.mxu0 %v776
        %1118 = vmatpush.bf16.msra.mxu0 %v772
        %1119 = vmatmul.bf16.gmra.mxu0 %v515
        %v1120 = vpop.f32.mrf.mxu0
        %v1121 = vadd.f32 %v1072, %v1120
        %v1122 = vpop.f32.mrf.mxu0
        %v1123 = vadd.f32 %v1074, %v1122
        %1124 = vmatmul.bf16.gmra.mxu0 %v517
        %v1125 = vpop.f32.mrf.mxu0
        %v1126 = vadd.f32 %v1077, %v1125
        %v1127 = vpop.f32.mrf.mxu0
        %v1128 = vadd.f32 %v1079, %v1127
        %1129 = vmatmul.bf16.gmra.mxu0 %v519
        %v1130 = vpop.f32.mrf.mxu0
        %v1131 = vadd.f32 %v1082, %v1130
        %v1132 = vpop.f32.mrf.mxu0
        %v1133 = vadd.f32 %v1084, %v1132
        %1134 = vmatmul.bf16.gmra.mxu0 %v521
        %v1135 = vpop.f32.mrf.mxu0
        %v1136 = vadd.f32 %v1087, %v1135
        %v1137 = vpop.f32.mrf.mxu0
        %v1138 = vadd.f32 %v1089, %v1137
        %1139 = vmatmul.bf16.gmra.mxu0 %v523
        %v1140 = vpop.f32.mrf.mxu0
        %v1141 = vadd.f32 %v1092, %v1140
        %v1142 = vpop.f32.mrf.mxu0
        %v1143 = vadd.f32 %v1094, %v1142
        %1144 = vmatmul.bf16.gmra.mxu0 %v525
        %v1145 = vpop.f32.mrf.mxu0
        %v1146 = vadd.f32 %v1097, %v1145
        %v1147 = vpop.f32.mrf.mxu0
        %v1148 = vadd.f32 %v1099, %v1147
        %1149 = vmatmul.bf16.gmra.mxu0 %v527
        %v1150 = vpop.f32.mrf.mxu0
        %v1151 = vadd.f32 %v1102, %v1150
        %v1152 = vpop.f32.mrf.mxu0
        %v1153 = vadd.f32 %v1104, %v1152
        %1154 = vmatmul.bf16.gmra.mxu0 %v529
        %v1155 = vpop.f32.mrf.mxu0
        %v1156 = vadd.f32 %v1107, %v1155
        %v1157 = vpop.f32.mrf.mxu0
        %v1158 = vadd.f32 %v1109, %v1157
        %1159 = vdwg.mxu0
        %1160 = vmatpush.bf16.msra.mxu0 %v769
        %1161 = vmatpush.bf16.msra.mxu0 %v765
        %1162 = vmatpush.bf16.msra.mxu0 %v761
        %1163 = vmatpush.bf16.msra.mxu0 %v757
        %1164 = vmatpush.bf16.msra.mxu0 %v753
        %1165 = vmatpush.bf16.msra.mxu0 %v749
        %1166 = vmatpush.bf16.msra.mxu0 %v745
        %1167 = vmatpush.bf16.msra.mxu0 %v741
        %1168 = vmatmul.bf16.gmra.mxu0 %v514
        %v1169 = vpop.f32.mrf.mxu0
        %v1170 = vadd.f32 %v461, %v1169
        %v1171 = vpop.f32.mrf.mxu0
        %v1172 = vadd.f32 %v461, %v1171
        %1173 = vmatmul.bf16.gmra.mxu0 %v516
        %v1174 = vpop.f32.mrf.mxu0
        %v1175 = vadd.f32 %v461, %v1174
        %v1176 = vpop.f32.mrf.mxu0
        %v1177 = vadd.f32 %v461, %v1176
        %1178 = vmatmul.bf16.gmra.mxu0 %v518
        %v1179 = vpop.f32.mrf.mxu0
        %v1180 = vadd.f32 %v461, %v1179
        %v1181 = vpop.f32.mrf.mxu0
        %v1182 = vadd.f32 %v461, %v1181
        %1183 = vmatmul.bf16.gmra.mxu0 %v520
        %v1184 = vpop.f32.mrf.mxu0
        %v1185 = vadd.f32 %v461, %v1184
        %v1186 = vpop.f32.mrf.mxu0
        %v1187 = vadd.f32 %v461, %v1186
        %1188 = vmatmul.bf16.gmra.mxu0 %v522
        %v1189 = vpop.f32.mrf.mxu0
        %v1190 = vadd.f32 %v461, %v1189
        %v1191 = vpop.f32.mrf.mxu0
        %v1192 = vadd.f32 %v461, %v1191
        %1193 = vmatmul.bf16.gmra.mxu0 %v524
        %v1194 = vpop.f32.mrf.mxu0
        %v1195 = vadd.f32 %v461, %v1194
        %v1196 = vpop.f32.mrf.mxu0
        %v1197 = vadd.f32 %v461, %v1196
        %1198 = vmatmul.bf16.gmra.mxu0 %v526
        %v1199 = vpop.f32.mrf.mxu0
        %v1200 = vadd.f32 %v461, %v1199
        %v1201 = vpop.f32.mrf.mxu0
        %v1202 = vadd.f32 %v461, %v1201
        %1203 = vmatmul.bf16.gmra.mxu0 %v528
        %v1204 = vpop.f32.mrf.mxu0
        %v1205 = vadd.f32 %v461, %v1204
        %v1206 = vpop.f32.mrf.mxu0
        %v1207 = vadd.f32 %v461, %v1206
        %1208 = vdwg.mxu0
        %1209 = vmatpush.bf16.msra.mxu0 %v801
        %1210 = vmatpush.bf16.msra.mxu0 %v797
        %1211 = vmatpush.bf16.msra.mxu0 %v793
        %1212 = vmatpush.bf16.msra.mxu0 %v789
        %1213 = vmatpush.bf16.msra.mxu0 %v785
        %1214 = vmatpush.bf16.msra.mxu0 %v781
        %1215 = vmatpush.bf16.msra.mxu0 %v777
        %1216 = vmatpush.bf16.msra.mxu0 %v773
        %1217 = vmatmul.bf16.gmra.mxu0 %v515
        %v1218 = vpop.f32.mrf.mxu0
        %v1219 = vadd.f32 %v1170, %v1218
        %v1220 = vpop.f32.mrf.mxu0
        %v1221 = vadd.f32 %v1172, %v1220
        %1222 = vmatmul.bf16.gmra.mxu0 %v517
        %v1223 = vpop.f32.mrf.mxu0
        %v1224 = vadd.f32 %v1175, %v1223
        %v1225 = vpop.f32.mrf.mxu0
        %v1226 = vadd.f32 %v1177, %v1225
        %1227 = vmatmul.bf16.gmra.mxu0 %v519
        %v1228 = vpop.f32.mrf.mxu0
        %v1229 = vadd.f32 %v1180, %v1228
        %v1230 = vpop.f32.mrf.mxu0
        %v1231 = vadd.f32 %v1182, %v1230
        %1232 = vmatmul.bf16.gmra.mxu0 %v521
        %v1233 = vpop.f32.mrf.mxu0
        %v1234 = vadd.f32 %v1185, %v1233
        %v1235 = vpop.f32.mrf.mxu0
        %v1236 = vadd.f32 %v1187, %v1235
        %1237 = vmatmul.bf16.gmra.mxu0 %v523
        %v1238 = vpop.f32.mrf.mxu0
        %v1239 = vadd.f32 %v1190, %v1238
        %v1240 = vpop.f32.mrf.mxu0
        %v1241 = vadd.f32 %v1192, %v1240
        %1242 = vmatmul.bf16.gmra.mxu0 %v525
        %v1243 = vpop.f32.mrf.mxu0
        %v1244 = vadd.f32 %v1195, %v1243
        %v1245 = vpop.f32.mrf.mxu0
        %v1246 = vadd.f32 %v1197, %v1245
        %1247 = vmatmul.bf16.gmra.mxu0 %v527
        %v1248 = vpop.f32.mrf.mxu0
        %v1249 = vadd.f32 %v1200, %v1248
        %v1250 = vpop.f32.mrf.mxu0
        %v1251 = vadd.f32 %v1202, %v1250
        %1252 = vmatmul.bf16.gmra.mxu0 %v529
        %v1253 = vpop.f32.mrf.mxu0
        %v1254 = vadd.f32 %v1205, %v1253
        %v1255 = vpop.f32.mrf.mxu0
        %v1256 = vadd.f32 %v1207, %v1255
        %1257 = vdwg.mxu0
        %1258 = vst [vmem:[%s360] sm:$0xff] %v925
        %1259 = vst [vmem:[%s360 + $0x8] sm:$0xff] %v1023
        %1260 = vst [vmem:[%s360 + $0x10] sm:$0xff] %v1121
        %1261 = vst [vmem:[%s360 + $0x18] sm:$0xff] %v1219
        %1262 = vst [vmem:[%s360 + $0x20] sm:$0xff] %v927
        %1263 = vst [vmem:[%s360 + $0x28] sm:$0xff] %v1025
        %1264 = vst [vmem:[%s360 + $0x30] sm:$0xff] %v1123
        %1265 = vst [vmem:[%s360 + $0x38] sm:$0xff] %v1221
        %1266 = vst [vmem:[%s360 + $0x40] sm:$0xff] %v930
        %1267 = vst [vmem:[%s360 + $0x48] sm:$0xff] %v1028
        %1268 = vst [vmem:[%s360 + $0x50] sm:$0xff] %v1126
        %1269 = vst [vmem:[%s360 + $0x58] sm:$0xff] %v1224
        %1270 = vst [vmem:[%s360 + $0x60] sm:$0xff] %v932
        %1271 = vst [vmem:[%s360 + $0x68] sm:$0xff] %v1030
        %1272 = vst [vmem:[%s360 + $0x70] sm:$0xff] %v1128
        %1273 = vst [vmem:[%s360 + $0x78] sm:$0xff] %v1226
        %1274 = vst [vmem:[%s360 + $0x80] sm:$0xff] %v935
        %1275 = vst [vmem:[%s360 + $0x88] sm:$0xff] %v1033
        %1276 = vst [vmem:[%s360 + $0x90] sm:$0xff] %v1131
        %1277 = vst [vmem:[%s360 + $0x98] sm:$0xff] %v1229
        %1278 = vst [vmem:[%s360 + $0xa0] sm:$0xff] %v937
        %1279 = vst [vmem:[%s360 + $0xa8] sm:$0xff] %v1035
        %1280 = vst [vmem:[%s360 + $0xb0] sm:$0xff] %v1133
        %1281 = vst [vmem:[%s360 + $0xb8] sm:$0xff] %v1231
        %1282 = vst [vmem:[%s360 + $0xc0] sm:$0xff] %v940
        %1283 = vst [vmem:[%s360 + $0xc8] sm:$0xff] %v1038
        %1284 = vst [vmem:[%s360 + $0xd0] sm:$0xff] %v1136
        %1285 = vst [vmem:[%s360 + $0xd8] sm:$0xff] %v1234
        %1286 = vst [vmem:[%s360 + $0xe0] sm:$0xff] %v942
        %1287 = vst [vmem:[%s360 + $0xe8] sm:$0xff] %v1040
        %1288 = vst [vmem:[%s360 + $0xf0] sm:$0xff] %v1138
        %1289 = vst [vmem:[%s360 + $0xf8] sm:$0xff] %v1236
        %1290 = vst [vmem:[%s360 + $0x100] sm:$0xff] %v945
        %1291 = vst [vmem:[%s360 + $0x108] sm:$0xff] %v1043
        %1292 = vst [vmem:[%s360 + $0x110] sm:$0xff] %v1141
        %1293 = vst [vmem:[%s360 + $0x118] sm:$0xff] %v1239
        %1294 = vst [vmem:[%s360 + $0x120] sm:$0xff] %v947
        %1295 = vst [vmem:[%s360 + $0x128] sm:$0xff] %v1045
        %1296 = vst [vmem:[%s360 + $0x130] sm:$0xff] %v1143
        %1297 = vst [vmem:[%s360 + $0x138] sm:$0xff] %v1241
        %1298 = vst [vmem:[%s360 + $0x140] sm:$0xff] %v950
        %1299 = vst [vmem:[%s360 + $0x148] sm:$0xff] %v1048
        %1300 = vst [vmem:[%s360 + $0x150] sm:$0xff] %v1146
        %1301 = vst [vmem:[%s360 + $0x158] sm:$0xff] %v1244
        %1302 = vst [vmem:[%s360 + $0x160] sm:$0xff] %v952
        %1303 = vst [vmem:[%s360 + $0x168] sm:$0xff] %v1050
        %1304 = vst [vmem:[%s360 + $0x170] sm:$0xff] %v1148
        %1305 = vst [vmem:[%s360 + $0x178] sm:$0xff] %v1246
        %1306 = vst [vmem:[%s360 + $0x180] sm:$0xff] %v955
        %1307 = vst [vmem:[%s360 + $0x188] sm:$0xff] %v1053
        %1308 = vst [vmem:[%s360 + $0x190] sm:$0xff] %v1151
        %1309 = vst [vmem:[%s360 + $0x198] sm:$0xff] %v1249
        %1310 = vst [vmem:[%s360 + $0x1a0] sm:$0xff] %v957
        %1311 = vst [vmem:[%s360 + $0x1a8] sm:$0xff] %v1055
        %1312 = vst [vmem:[%s360 + $0x1b0] sm:$0xff] %v1153
        %1313 = vst [vmem:[%s360 + $0x1b8] sm:$0xff] %v1251
        %1314 = vst [vmem:[%s360 + $0x1c0] sm:$0xff] %v960
        %1315 = vst [vmem:[%s360 + $0x1c8] sm:$0xff] %v1058
        %1316 = vst [vmem:[%s360 + $0x1d0] sm:$0xff] %v1156
        %1317 = vst [vmem:[%s360 + $0x1d8] sm:$0xff] %v1254
        %1318 = vst [vmem:[%s360 + $0x1e0] sm:$0xff] %v962
        %1319 = vst [vmem:[%s360 + $0x1e8] sm:$0xff] %v1060
        %1320 = vst [vmem:[%s360 + $0x1f0] sm:$0xff] %v1158
        %1321 = vst [vmem:[%s360 + $0x1f8] sm:$0xff] %v1256
        %s1322 = sand.u32 %s117, 1
        %s1323 = scalar_lea.sflag [#allocation4], %s1322
        %s1324 = sand.u32 %s117, 1
        %s1325 = smul.addr %s1324, 512
        %s1326 = scalar_lea.vmem [#allocation3], %s1325
        // Predicated region
        $region56: #{vae_forward.3} parent=50 // pred_check
          %p1327 = pneg %p127
        $region57: #{vae_forward.3} parent=50 // pred_check_branch
          %1329 = sbr.rel (%p1327) target = $region59
        $region58: #{vae_forward.3} parent=50 // pred_region
          %s1330 = smul.u32 16, %s21
          %s1331 = smul.u32 4, %s22
          %1333 = vsyncadd %s1323, 0
          %s1334 = smul.addr %s1330, 8
          %s1335 = sadd.s32 %s1331, %s1334
          %s1336 = smul.addr %s1335, 8
          %s1337 = scalar_lea.hbm %s3, %s1336
          %s1338 = sshll.u32 %s1326, 4
          %s1339 = int_to_ptr.vmem [resolvable:$true] %s1338
          %s1340 = sshll.u32 %s1337, 4
          %s1341 = int_to_ptr.hbm [resolvable:$true] %s1340
          %1346 = dma.vmem_to_hbm [thread:$0]  %s1339, 8192, %s1341, %s1323, 512, 1024, 32
        $region59: #{vae_forward.3} parent=50 // pred_fallthru
          _
      $region51: #{vae_forward.3} parent=5 // pred_fallthru
        _
      %p1347 = scmp.le.s32.totalorder 2, %s12
      // Predicated region
      $region60: #{vae_forward.3} parent=5 // pred_check
        %p1348 = pneg %p1347
      $region61: #{vae_forward.3} parent=5 // pred_check_branch
        %1350 = sbr.rel (%p1348) target = $region63
      $region62: #{vae_forward.3} parent=5 // pred_region
        %s1351 = ssub.s32 %s12, 2
        // Predicated region
        $region64: #{vae_forward.3} parent=62 // pred_check
          %p1352 = pneg %p133
        $region65: #{vae_forward.3} parent=62 // pred_check_branch
          %1354 = sbr.rel (%p1352) target = $region67
        $region66: #{vae_forward.3} parent=62 // pred_region
          %s1355 = sand.u32 %s118, 1
          %s1356 = scalar_lea.sflag [#allocation4], %s1355
          %s1357 = sand.u32 %s118, 1
          %s1358 = smul.addr %s1357, 512
          %s1359 = scalar_lea.vmem [#allocation3], %s1358
          %1361 = dma.done %s1356, 8192
        $region67: #{vae_forward.3} parent=62 // pred_fallthru
          _
      $region63: #{vae_forward.3} parent=5 // pred_fallthru
        _
    $region6: #{vae_forward.3} parent=1 // loop_footer
      %s16 = sadd.s32 1, %s12
    $region7: #{vae_forward.3} parent=1 // loop_footer_branch
      %11 = sbr.rel target = $region3
    $region8: #{vae_forward.3} parent=1 // loop_exit
      _
    %1362 = vsyncpa [#allocation4], 1
    %s1363 = scalar_lea.sflag [#allocation4], 1
    %1364 = vsyncpa %s1363, 1

// kernel: vae_forward.2
$region0: #{vae_forward.2}
  #allocation0 [shape = 'u32[]', space=smem, size = 0x4, offset = 0x4, fixed_abs, tag = 'smem constant byte address 0x4 - core index']
  #allocation1 [shape = 'u32[72,128]{1,0:T(1,128)}', space=vmem, size = 0x9000, scoped, tag = 'internal scratch']
  #allocation2 [shape = 'f32[128,256]{1,0:T(8,128)}', space=vmem, size = 0x20000, scoped, tag = 'scratch operand']
  %s0 = inlined_call_operand.vmem [shape: bf16[256,1024], index: 0, kind: input, shape index: {}]
  %s1 = inlined_call_operand.vmem [shape: bf16[1024,256], index: 1, kind: input, shape index: {}]
  %s2 = inlined_call_operand.vmem [shape: f32[1,256], index: 2, kind: input, shape index: {}]
  %s3 = inlined_call_operand.vmem [shape: bf16[256,256], index: 3, kind: input, shape index: {}]
  %s4 = inlined_call_operand.vmem [shape: f32[1,256], index: 4, kind: input, shape index: {}]
  %s5 = inlined_call_operand.vmem [shape: bf16[128,256], index: 5, kind: input, shape index: {}]
  %s6 = inlined_call_operand.vmem [shape: f32[1,256], index: 6, kind: input, shape index: {}]
  %s7 = inlined_call_operand.vmem [shape: f32[256,128], index: 7, kind: input, shape index: {}]
  %s8 = inlined_call_operand.vmem [shape: bf16[256,256], index: 8, kind: output, shape index: {0}]
  %s9 = inlined_call_operand.vmem [shape: f32[2,1,128], index: 9, kind: output, shape index: {1}]
  %10 = xla_tuple %s8, %s9
  %s11 = sld [smem:[#allocation0]]
  $region108: #{vae_forward.2} parent=0
    _
  %s13 = ssub.s32 1, %s11
  %s14 = scalar_select 0, %s13, %s11
  $region1: #{vae_forward.2} parent=0
    #allocation3 [shape = 'u8[262144]{0}', space=vmem, size = 0x40000, scoped, tag = 'input window, operand 0']
    loop: start=0, step=1, limit=6
    $region2: #{vae_forward.2} parent=1 // loop_pre_header
      _
    $region3: #{vae_forward.2} parent=1 // loop_header
      %s16 = sphi 0, %s20
      %p17 = scmp.ge.s32.totalorder %s16, 6
      %s23 = sphi 0, %s35
      %s24 = sphi 0, %s31
      %s25 = sphi 0, %s23
      %s26 = sphi 0, %s24
      %s27 = sphi 0, %s25
      %s28 = sphi 0, %s26
      %s40 = sphi 0, %s42
      %s43 = sphi 0, %s40
      %s44 = sphi 0, %s43
      %s60 = sphi 0, %s44
      %s66 = sphi 0, %s68
      %s69 = sphi 0, %s66
      %s70 = sphi 0, %s69
      %s86 = sphi 0, %s70
      %s90 = sphi 0, %s90
      %s92 = sphi 0, %s90
      %s93 = sphi 0, %s92
      %s107 = sphi 0, %s93
      %s111 = sphi 0, %s111
      %s113 = sphi 0, %s111
      %s114 = sphi 0, %s113
      %s128 = sphi 0, %s114
      %s132 = sphi 0, %s132
      %s134 = sphi 0, %s132
      %s135 = sphi 0, %s134
      %s149 = sphi 0, %s135
      %s153 = sphi 0, %s153
      %s155 = sphi 0, %s153
      %s156 = sphi 0, %s155
      %s170 = sphi 0, %s156
      %s174 = sphi 0, %s174
      %s176 = sphi 0, %s174
      %s177 = sphi 0, %s176
      %s191 = sphi 0, %s177
      %s197 = sphi 0, %s199
      %s200 = sphi 0, %s197
      %s201 = sphi 0, %s200
      %s217 = sphi 0, %s201
      %s223 = sphi 0, %s225
      %s226 = sphi 0, %s223
      %s227 = sphi 0, %s226
      %s243 = sphi 0, %s227
      %s249 = sphi 0, %s251
      %s252 = sphi 0, %s249
      %s253 = sphi 0, %s252
      %s269 = sphi 0, %s253
    $region4: #{vae_forward.2} parent=1 // loop_header_branch
      %19 = sbr.rel (%p17) target = $region8
    $region5: #{vae_forward.2} parent=1 // loop_body
      %s21 = ssub.s32 %s16, 1
      %s22 = ssub.s32 %s16, 2
      %s29 = sadd.s32 1, %s24
      %p30 = scmp.ge.s32.totalorder %s29, 2
      %s31 = scalar_select %p30, 0, %s29
      %s32 = sadd.s32 1, %s23
      %s33 = scalar_select %p30, %s32, %s23
      %p34 = scmp.ge.s32.totalorder %s33, 2
      %s35 = scalar_select %p34, 0, %s33
      %s36 = ssub.s32 %s23, %s35
      %s37 = ssub.s32 %s24, %s31
      %s38 = sor.u32 %s36, %s37
      %p39 = scmp.eq.s32.totalorder %s38, 0
      %s41 = sadd.s32 %s40, 1
      %s42 = scalar_select %p39, %s40, %s41
      %p45 = pneg %p39
      %p46 = scmp.eq.s32.totalorder %s16, 3
      %p47 = por %p45, %p46
      %p48 = scmp.ne.s32.totalorder %s40, %s43
      %p49 = scmp.eq.s32.totalorder %s16, 0
      %p50 = por %p48, %p49
      %p51 = scmp.ne.s32.totalorder %s40, %s43
      %p52 = scmp.eq.s32.totalorder %s21, 3
      %p53 = por %p51, %p52
      %p54 = scmp.ne.s32.totalorder %s43, %s44
      %p55 = scmp.eq.s32.totalorder %s21, 0
      %p56 = por %p54, %p55
      %p57 = scmp.ne.s32.totalorder %s43, %s44
      %p58 = scmp.eq.s32.totalorder %s22, 3
      %p59 = por %p57, %p58
      %p61 = scmp.ne.s32.totalorder %s44, %s60
      %p62 = scmp.eq.s32.totalorder %s22, 0
      %p63 = por %p61, %p62
      %s64 = ssub.s32 %s24, %s31
      %p65 = scmp.eq.s32.totalorder %s64, 0
      %s67 = sadd.s32 %s66, 1
      %s68 = scalar_select %p65, %s66, %s67
      %p71 = pneg %p65
      %p72 = scmp.eq.s32.totalorder %s16, 3
      %p73 = por %p71, %p72
      %p74 = scmp.ne.s32.totalorder %s66, %s69
      %p75 = scmp.eq.s32.totalorder %s16, 0
      %p76 = por %p74, %p75
      %p77 = scmp.ne.s32.totalorder %s66, %s69
      %p78 = scmp.eq.s32.totalorder %s21, 3
      %p79 = por %p77, %p78
      %p80 = scmp.ne.s32.totalorder %s69, %s70
      %p81 = scmp.eq.s32.totalorder %s21, 0
      %p82 = por %p80, %p81
      %p83 = scmp.ne.s32.totalorder %s69, %s70
      %p84 = scmp.eq.s32.totalorder %s22, 3
      %p85 = por %p83, %p84
      %p87 = scmp.ne.s32.totalorder %s70, %s86
      %p88 = scmp.eq.s32.totalorder %s22, 0
      %p89 = por %p87, %p88
      %s91 = sadd.s32 %s90, 1
      %p94 = scmp.eq.s32.totalorder %s16, 3
      %p95 = scmp.ne.s32.totalorder %s90, %s92
      %p96 = scmp.eq.s32.totalorder %s16, 0
      %p97 = por %p95, %p96
      %p98 = scmp.ne.s32.totalorder %s90, %s92
      %p99 = scmp.eq.s32.totalorder %s21, 3
      %p100 = por %p98, %p99
      %p101 = scmp.ne.s32.totalorder %s92, %s93
      %p102 = scmp.eq.s32.totalorder %s21, 0
      %p103 = por %p101, %p102
      %p104 = scmp.ne.s32.totalorder %s92, %s93
      %p105 = scmp.eq.s32.totalorder %s22, 3
      %p106 = por %p104, %p105
      %p108 = scmp.ne.s32.totalorder %s93, %s107
      %p109 = scmp.eq.s32.totalorder %s22, 0
      %p110 = por %p108, %p109
      %s112 = sadd.s32 %s111, 1
      %p115 = scmp.eq.s32.totalorder %s16, 3
      %p116 = scmp.ne.s32.totalorder %s111, %s113
      %p117 = scmp.eq.s32.totalorder %s16, 0
      %p118 = por %p116, %p117
      %p119 = scmp.ne.s32.totalorder %s111, %s113
      %p120 = scmp.eq.s32.totalorder %s21, 3
      %p121 = por %p119, %p120
      %p122 = scmp.ne.s32.totalorder %s113, %s114
      %p123 = scmp.eq.s32.totalorder %s21, 0
      %p124 = por %p122, %p123
      %p125 = scmp.ne.s32.totalorder %s113, %s114
      %p126 = scmp.eq.s32.totalorder %s22, 3
      %p127 = por %p125, %p126
      %p129 = scmp.ne.s32.totalorder %s114, %s128
      %p130 = scmp.eq.s32.totalorder %s22, 0
      %p131 = por %p129, %p130
      %s133 = sadd.s32 %s132, 1
      %p136 = scmp.eq.s32.totalorder %s16, 3
      %p137 = scmp.ne.s32.totalorder %s132, %s134
      %p138 = scmp.eq.s32.totalorder %s16, 0
      %p139 = por %p137, %p138
      %p140 = scmp.ne.s32.totalorder %s132, %s134
      %p141 = scmp.eq.s32.totalorder %s21, 3
      %p142 = por %p140, %p141
      %p143 = scmp.ne.s32.totalorder %s134, %s135
      %p144 = scmp.eq.s32.totalorder %s21, 0
      %p145 = por %p143, %p144
      %p146 = scmp.ne.s32.totalorder %s134, %s135
      %p147 = scmp.eq.s32.totalorder %s22, 3
      %p148 = por %p146, %p147
      %p150 = scmp.ne.s32.totalorder %s135, %s149
      %p151 = scmp.eq.s32.totalorder %s22, 0
      %p152 = por %p150, %p151
      %s154 = sadd.s32 %s153, 1
      %p157 = scmp.eq.s32.totalorder %s16, 3
      %p158 = scmp.ne.s32.totalorder %s153, %s155
      %p159 = scmp.eq.s32.totalorder %s16, 0
      %p160 = por %p158, %p159
      %p161 = scmp.ne.s32.totalorder %s153, %s155
      %p162 = scmp.eq.s32.totalorder %s21, 3
      %p163 = por %p161, %p162
      %p164 = scmp.ne.s32.totalorder %s155, %s156
      %p165 = scmp.eq.s32.totalorder %s21, 0
      %p166 = por %p164, %p165
      %p167 = scmp.ne.s32.totalorder %s155, %s156
      %p168 = scmp.eq.s32.totalorder %s22, 3
      %p169 = por %p167, %p168
      %p171 = scmp.ne.s32.totalorder %s156, %s170
      %p172 = scmp.eq.s32.totalorder %s22, 0
      %p173 = por %p171, %p172
      %s175 = sadd.s32 %s174, 1
      %p178 = scmp.eq.s32.totalorder %s16, 3
      %p179 = scmp.ne.s32.totalorder %s174, %s176
      %p180 = scmp.eq.s32.totalorder %s16, 0
      %p181 = por %p179, %p180
      %p182 = scmp.ne.s32.totalorder %s174, %s176
      %p183 = scmp.eq.s32.totalorder %s21, 3
      %p184 = por %p182, %p183
      %p185 = scmp.ne.s32.totalorder %s176, %s177
      %p186 = scmp.eq.s32.totalorder %s21, 0
      %p187 = por %p185, %p186
      %p188 = scmp.ne.s32.totalorder %s176, %s177
      %p189 = scmp.eq.s32.totalorder %s22, 3
      %p190 = por %p188, %p189
      %p192 = scmp.ne.s32.totalorder %s177, %s191
      %p193 = scmp.eq.s32.totalorder %s22, 0
      %p194 = por %p192, %p193
      %s195 = ssub.s32 %s23, %s35
      %p196 = scmp.eq.s32.totalorder %s195, 0
      %s198 = sadd.s32 %s197, 1
      %s199 = scalar_select %p196, %s197, %s198
      %p202 = pneg %p196
      %p203 = scmp.eq.s32.totalorder %s16, 3
      %p204 = por %p202, %p203
      %p205 = scmp.ne.s32.totalorder %s197, %s200
      %p206 = scmp.eq.s32.totalorder %s16, 0
      %p207 = por %p205, %p206
      %p208 = scmp.ne.s32.totalorder %s197, %s200
      %p209 = scmp.eq.s32.totalorder %s21, 3
      %p210 = por %p208, %p209
      %p211 = scmp.ne.s32.totalorder %s200, %s201
      %p212 = scmp.eq.s32.totalorder %s21, 0
      %p213 = por %p211, %p212
      %p214 = scmp.ne.s32.totalorder %s200, %s201
      %p215 = scmp.eq.s32.totalorder %s22, 3
      %p216 = por %p214, %p215
      %p218 = scmp.ne.s32.totalorder %s201, %s217
      %p219 = scmp.eq.s32.totalorder %s22, 0
      %p220 = por %p218, %p219
      %s221 = ssub.s32 %s23, %s35
      %p222 = scmp.eq.s32.totalorder %s221, 0
      %s224 = sadd.s32 %s223, 1
      %s225 = scalar_select %p222, %s223, %s224
      %p228 = pneg %p222
      %p229 = scmp.eq.s32.totalorder %s16, 3
      %p230 = por %p228, %p229
      %p231 = scmp.ne.s32.totalorder %s223, %s226
      %p232 = scmp.eq.s32.totalorder %s16, 0
      %p233 = por %p231, %p232
      %p234 = scmp.ne.s32.totalorder %s223, %s226
      %p235 = scmp.eq.s32.totalorder %s21, 3
      %p236 = por %p234, %p235
      %p237 = scmp.ne.s32.totalorder %s226, %s227
      %p238 = scmp.eq.s32.totalorder %s21, 0
      %p239 = por %p237, %p238
      %p240 = scmp.ne.s32.totalorder %s226, %s227
      %p241 = scmp.eq.s32.totalorder %s22, 3
      %p242 = por %p240, %p241
      %p244 = scmp.ne.s32.totalorder %s227, %s243
      %p245 = scmp.eq.s32.totalorder %s22, 0
      %p246 = por %p244, %p245
      %s247 = ssub.s32 %s23, %s35
      %p248 = scmp.eq.s32.totalorder %s247, 0
      %s250 = sadd.s32 %s249, 1
      %s251 = scalar_select %p248, %s249, %s250
      %p254 = pneg %p248
      %p255 = scmp.eq.s32.totalorder %s16, 3
      %p256 = por %p254, %p255
      %p257 = scmp.ne.s32.totalorder %s249, %s252
      %p258 = scmp.eq.s32.totalorder %s16, 0
      %p259 = por %p257, %p258
      %p260 = scmp.ne.s32.totalorder %s249, %s252
      %p261 = scmp.eq.s32.totalorder %s21, 3
      %p262 = por %p260, %p261
      %p263 = scmp.ne.s32.totalorder %s252, %s253
      %p264 = scmp.eq.s32.totalorder %s21, 0
      %p265 = por %p263, %p264
      %p266 = scmp.ne.s32.totalorder %s252, %s253
      %p267 = scmp.eq.s32.totalorder %s22, 3
      %p268 = por %p266, %p267
      %p270 = scmp.ne.s32.totalorder %s253, %s269
      %p271 = scmp.eq.s32.totalorder %s22, 0
      %p272 = por %p270, %p271
      %p273 = scmp.le.s32.totalorder 1, %s16
      %p274 = scmp.lt.s32.totalorder %s16, 5
      %p275 = pnand %p273, %p274
      %p276 = pneg %p275
      // Predicated region
      $region9: #{vae_forward.2} parent=5 // pred_check
        _
      $region10: #{vae_forward.2} parent=5 // pred_check_branch
        %278 = sbr.rel (%p275) target = $region12
      $region11: #{vae_forward.2} parent=5 // pred_region
        %s279 = ssub.s32 %s16, 1
        // Predicated region
        $region13: #{vae_forward.2} parent=11 // pred_check
          %p280 = pneg %p103
        $region14: #{vae_forward.2} parent=11 // pred_check_branch
          %282 = sbr.rel (%p280) target = $region16
        $region15: #{vae_forward.2} parent=11 // pred_region
          _
        $region16: #{vae_forward.2} parent=11 // pred_fallthru
          _
        // Predicated region
        $region17: #{vae_forward.2} parent=11 // pred_check
          %p283 = pneg %p124
        $region18: #{vae_forward.2} parent=11 // pred_check_branch
          %285 = sbr.rel (%p283) target = $region20
        $region19: #{vae_forward.2} parent=11 // pred_region
          _
        $region20: #{vae_forward.2} parent=11 // pred_fallthru
          _
        // Predicated region
        $region21: #{vae_forward.2} parent=11 // pred_check
          %p286 = pneg %p145
        $region22: #{vae_forward.2} parent=11 // pred_check_branch
          %288 = sbr.rel (%p286) target = $region24
        $region23: #{vae_forward.2} parent=11 // pred_region
          _
        $region24: #{vae_forward.2} parent=11 // pred_fallthru
          _
        // Predicated region
        $region25: #{vae_forward.2} parent=11 // pred_check
          %p289 = pneg %p166
        $region26: #{vae_forward.2} parent=11 // pred_check_branch
          %291 = sbr.rel (%p289) target = $region28
        $region27: #{vae_forward.2} parent=11 // pred_region
          _
        $region28: #{vae_forward.2} parent=11 // pred_fallthru
          _
        // Predicated region
        $region29: #{vae_forward.2} parent=11 // pred_check
          %p292 = pneg %p187
        $region30: #{vae_forward.2} parent=11 // pred_check_branch
          %294 = sbr.rel (%p292) target = $region32
        $region31: #{vae_forward.2} parent=11 // pred_region
          _
        $region32: #{vae_forward.2} parent=11 // pred_fallthru
          _
      $region12: #{vae_forward.2} parent=5 // pred_fallthru
        _
      %p295 = scmp.lt.s32.totalorder %s16, 4
      // Predicated region
      $region33: #{vae_forward.2} parent=5 // pred_check
        %p296 = pneg %p295
      $region34: #{vae_forward.2} parent=5 // pred_check_branch
        %298 = sbr.rel (%p296) target = $region36
      $region35: #{vae_forward.2} parent=5 // pred_region
        // Predicated region
        $region37: #{vae_forward.2} parent=35 // pred_check
          %p299 = pneg %p50
        $region38: #{vae_forward.2} parent=35 // pred_check_branch
          %301 = sbr.rel (%p299) target = $region40
        $region39: #{vae_forward.2} parent=35 // pred_region
          %s302 = sand.u32 %s40, 1
          %s303 = sand.u32 %s40, 1
          %s304 = smul.addr %s303, 256
          %s305 = scalar_lea.vmem [#allocation3], %s304
          %s306 = smul.u32 16, %s23
          %s307 = smul.u32 4, %s24
          %s308 = smul.addr %s306, 8
          %s309 = sadd.s32 %s307, %s308
          %s310 = smul.addr %s309, 4
          %s311 = scalar_lea.vmem %s0, %s310
          // Predicated region
          $region41: #{vae_forward.2} parent=39 // pred_check
            _
          $region42: #{vae_forward.2} parent=39 // pred_check_branch
            %313 = sbr.rel (0) target = $region44
          $region43: #{vae_forward.2} parent=39 // pred_region
            // Predicated region
            $region45: #{vae_forward.2} parent=43 // pred_check
              _
            $region46: #{vae_forward.2} parent=43 // pred_check_branch
              %315 = sbr.rel (0) target = $region48
            $region47: #{vae_forward.2} parent=43 // pred_region
              loop: start=0, step=1, limit=1
              $region49: #{vae_forward.2} parent=47 // loop_pre_header
                _
              $region50: #{vae_forward.2} parent=47 // loop_header
                %s317 = sphi 0, %s321
                %p318 = scmp.ge.s32.totalorder %s317, 1
                %s322 = sphi %s311, %s311
                %s323 = sphi %s305, %s305
              $region51: #{vae_forward.2} parent=47 // loop_header_branch
                %320 = sbr.rel (%p318) target = $region55
              $region52: #{vae_forward.2} parent=47 // loop_body
                %v324 = vld [vmem:[%s322] sm:$0xff]
                %325 = vst [vmem:[%s323] sm:$0xff] %v324
                %v326 = vld [vmem:[%s322 + $0x8] sm:$0xff]
                %327 = vst [vmem:[%s323 + $0x8] sm:$0xff] %v326
                %v328 = vld [vmem:[%s322 + $0x20] sm:$0xff]
                %329 = vst [vmem:[%s323 + $0x10] sm:$0xff] %v328
                %v330 = vld [vmem:[%s322 + $0x28] sm:$0xff]
                %331 = vst [vmem:[%s323 + $0x18] sm:$0xff] %v330
                %v332 = vld [vmem:[%s322 + $0x40] sm:$0xff]
                %333 = vst [vmem:[%s323 + $0x20] sm:$0xff] %v332
                %v334 = vld [vmem:[%s322 + $0x48] sm:$0xff]
                %335 = vst [vmem:[%s323 + $0x28] sm:$0xff] %v334
                %v336 = vld [vmem:[%s322 + $0x60] sm:$0xff]
                %337 = vst [vmem:[%s323 + $0x30] sm:$0xff] %v336
                %v338 = vld [vmem:[%s322 + $0x68] sm:$0xff]
                %339 = vst [vmem:[%s323 + $0x38] sm:$0xff] %v338
                %v340 = vld [vmem:[%s322 + $0x80] sm:$0xff]
                %341 = vst [vmem:[%s323 + $0x40] sm:$0xff] %v340
                %v342 = vld [vmem:[%s322 + $0x88] sm:$0xff]
                %343 = vst [vmem:[%s323 + $0x48] sm:$0xff] %v342
                %v344 = vld [vmem:[%s322 + $0xa0] sm:$0xff]
                %345 = vst [vmem:[%s323 + $0x50] sm:$0xff] %v344
                %v346 = vld [vmem:[%s322 + $0xa8] sm:$0xff]
                %347 = vst [vmem:[%s323 + $0x58] sm:$0xff] %v346
                %v348 = vld [vmem:[%s322 + $0xc0] sm:$0xff]
                %349 = vst [vmem:[%s323 + $0x60] sm:$0xff] %v348
                %v350 = vld [vmem:[%s322 + $0xc8] sm:$0xff]
                %351 = vst [vmem:[%s323 + $0x68] sm:$0xff] %v350
                %v352 = vld [vmem:[%s322 + $0xe0] sm:$0xff]
                %353 = vst [vmem:[%s323 + $0x70] sm:$0xff] %v352
                %v354 = vld [vmem:[%s322 + $0xe8] sm:$0xff]
                %355 = vst [vmem:[%s323 + $0x78] sm:$0xff] %v354
                %v356 = vld [vmem:[%s322 + $0x100] sm:$0xff]
                %357 = vst [vmem:[%s323 + $0x80] sm:$0xff] %v356
                %v358 = vld [vmem:[%s322 + $0x108] sm:$0xff]
                %359 = vst [vmem:[%s323 + $0x88] sm:$0xff] %v358
                %v360 = vld [vmem:[%s322 + $0x120] sm:$0xff]
                %361 = vst [vmem:[%s323 + $0x90] sm:$0xff] %v360
                %v362 = vld [vmem:[%s322 + $0x128] sm:$0xff]
                %363 = vst [vmem:[%s323 + $0x98] sm:$0xff] %v362
                %v364 = vld [vmem:[%s322 + $0x140] sm:$0xff]
                %365 = vst [vmem:[%s323 + $0xa0] sm:$0xff] %v364
                %v366 = vld [vmem:[%s322 + $0x148] sm:$0xff]
                %367 = vst [vmem:[%s323 + $0xa8] sm:$0xff] %v366
                %v368 = vld [vmem:[%s322 + $0x160] sm:$0xff]
                %369 = vst [vmem:[%s323 + $0xb0] sm:$0xff] %v368
                %v370 = vld [vmem:[%s322 + $0x168] sm:$0xff]
                %371 = vst [vmem:[%s323 + $0xb8] sm:$0xff] %v370
                %v372 = vld [vmem:[%s322 + $0x180] sm:$0xff]
                %373 = vst [vmem:[%s323 + $0xc0] sm:$0xff] %v372
                %v374 = vld [vmem:[%s322 + $0x188] sm:$0xff]
                %375 = vst [vmem:[%s323 + $0xc8] sm:$0xff] %v374
                %v376 = vld [vmem:[%s322 + $0x1a0] sm:$0xff]
                %377 = vst [vmem:[%s323 + $0xd0] sm:$0xff] %v376
                %v378 = vld [vmem:[%s322 + $0x1a8] sm:$0xff]
                %379 = vst [vmem:[%s323 + $0xd8] sm:$0xff] %v378
                %v380 = vld [vmem:[%s322 + $0x1c0] sm:$0xff]
                %381 = vst [vmem:[%s323 + $0xe0] sm:$0xff] %v380
                %v382 = vld [vmem:[%s322 + $0x1c8] sm:$0xff]
                %383 = vst [vmem:[%s323 + $0xe8] sm:$0xff] %v382
                %v384 = vld [vmem:[%s322 + $0x1e0] sm:$0xff]
                %385 = vst [vmem:[%s323 + $0xf0] sm:$0xff] %v384
                %v386 = vld [vmem:[%s322 + $0x1e8] sm:$0xff]
                %387 = vst [vmem:[%s323 + $0xf8] sm:$0xff] %v386
              $region53: #{vae_forward.2} parent=47 // loop_footer
                %s321 = sadd.s32 1, %s317
              $region54: #{vae_forward.2} parent=47 // loop_footer_branch
                %316 = sbr.rel target = $region50
              $region55: #{vae_forward.2} parent=47 // loop_exit
                _
            $region48: #{vae_forward.2} parent=43 // pred_fallthru
              _
            // Predicated region
            $region56: #{vae_forward.2} parent=43 // pred_check
              _
            $region57: #{vae_forward.2} parent=43 // pred_check_branch
              %389 = sbr.rel target = $region59
            $region58: #{vae_forward.2} parent=43 // pred_region
              _
            $region59: #{vae_forward.2} parent=43 // pred_fallthru
              _
          $region44: #{vae_forward.2} parent=39 // pred_fallthru
            _
          %390 = vnop
        $region40: #{vae_forward.2} parent=35 // pred_fallthru
          _
        // Predicated region
        $region60: #{vae_forward.2} parent=35 // pred_check
          %p391 = pneg %p76
        $region61: #{vae_forward.2} parent=35 // pred_check_branch
          %393 = sbr.rel (%p391) target = $region63
        $region62: #{vae_forward.2} parent=35 // pred_region
          %s394 = smul.u32 64, %s24
          %p395 = scmp.lt.s32.totalorder %s394, 127
          %s396 = scalar_select %p395, %s394, 127
          %s397 = smul.addr %s396, 2
          %s398 = smul.addr %s397, 4
          %s399 = scalar_lea.vmem %s1, %s398
          %s400 = smul.u32 64, %s24
        $region63: #{vae_forward.2} parent=35 // pred_fallthru
          _
        // Predicated region
        $region64: #{vae_forward.2} parent=35 // pred_check
          %p401 = pneg %p207
        $region65: #{vae_forward.2} parent=35 // pred_check_branch
          %403 = sbr.rel (%p401) target = $region67
        $region66: #{vae_forward.2} parent=35 // pred_region
          %s404 = smul.u32 16, %s23
          %p405 = scmp.lt.s32.totalorder %s404, 31
          %s406 = scalar_select %p405, %s404, 31
          %s407 = smul.addr %s406, 8
          %s408 = scalar_lea.vmem %s7, %s407
          %s409 = smul.u32 16, %s23
        $region67: #{vae_forward.2} parent=35 // pred_fallthru
          _
      $region36: #{vae_forward.2} parent=5 // pred_fallthru
        _
      %p410 = scmp.le.s32.totalorder 1, %s16
      %p411 = scmp.lt.s32.totalorder %s16, 5
      %p412 = pnand %p410, %p411
      %p413 = pneg %p412
      // Predicated region
      $region68: #{vae_forward.2} parent=5 // pred_check
        _
      $region69: #{vae_forward.2} parent=5 // pred_check_branch
        %415 = sbr.rel (%p412) target = $region71
      $region70: #{vae_forward.2} parent=5 // pred_region
        %s416 = ssub.s32 %s16, 1
        %s417 = sand.u32 %s43, 1
        %s418 = sand.u32 %s43, 1
        %s419 = smul.addr %s418, 256
        %s420 = scalar_lea.vmem [#allocation3], %s419
        // Predicated region
        $region72: #{vae_forward.2} parent=70 // pred_check
          %p421 = pneg %p56
        $region73: #{vae_forward.2} parent=70 // pred_check_branch
          %423 = sbr.rel (%p421) target = $region75
        $region74: #{vae_forward.2} parent=70 // pred_region
          _
        $region75: #{vae_forward.2} parent=70 // pred_fallthru
          _
        %s424 = sand.u32 %s43, 1
        %s425 = sand.u32 %s43, 1
        %s426 = smul.addr %s425, 256
        %s427 = scalar_lea.vmem [#allocation3], %s426
        %p428 = pneg %p56
        %p429 = pneg %p53
        %s430 = smul.u32 64, %s26
        %p431 = scmp.lt.s32.totalorder %s430, 127
        %s432 = scalar_select %p431, %s430, 127
        %s433 = smul.addr %s432, 2
        %s434 = smul.addr %s433, 4
        %s435 = scalar_lea.vmem %s1, %s434
        %p436 = pneg %p82
        %p437 = pneg %p79
        %p438 = pneg %p103
        %p439 = pneg %p100
        %p440 = pneg %p124
        %p441 = pneg %p121
        %p442 = pneg %p145
        %p443 = pneg %p142
        %p444 = pneg %p166
        %p445 = pneg %p163
        %p446 = pneg %p187
        %p447 = pneg %p184
        %s448 = smul.u32 16, %s25
        %p449 = scmp.lt.s32.totalorder %s448, 31
        %s450 = scalar_select %p449, %s448, 31
        %s451 = smul.addr %s450, 8
        %s452 = scalar_lea.vmem %s7, %s451
        %p453 = pneg %p213
        %p454 = pneg %p210
        %p455 = pneg %p239
        %p456 = pneg %p236
        %s457 = smul.u32 16, %s25
        %p458 = scmp.lt.s32.totalorder %s457, 31
        %s459 = scalar_select %p458, %s457, 31
        %s460 = smul.addr %s459, 2
        %s461 = smul.addr %s460, 4
        %s462 = scalar_lea.vmem %s8, %s461
        %p463 = pneg %p265
        %p464 = pneg %p262
        %p465 = scmp.lt.s32.totalorder %s25, 1
        %s466 = scalar_select %p465, %s25, 1
        %s467 = scalar_lea.vmem %s9, %s466
        %s468 = smul.u32 16, %s25
        %s469 = smul.u32 4, %s26
        %s470 = smul.u32 64, %s26
        %p471 = scmp.lt.s32.totalorder %s470, 127
        %s472 = scalar_select %p471, %s470, 127
        %s473 = smul.addr %s472, 2
        %s474 = smul.addr %s473, 4
        %s475 = scalar_lea.vmem %s1, %s474
        %s476 = smul.u32 64, %s26
        %s477 = smul.u32 16, %s25
        %p478 = scmp.lt.s32.totalorder %s477, 31
        %s479 = scalar_select %p478, %s477, 31
        %s480 = smul.addr %s479, 8
        %s481 = scalar_lea.vmem %s7, %s480
        %s482 = smul.u32 16, %s25
        %s483 = smul.u32 16, %s25
        %p484 = scmp.lt.s32.totalorder %s483, 31
        %s485 = scalar_select %p484, %s483, 31
        %s486 = smul.addr %s485, 2
        %s487 = smul.addr %s486, 4
        %s488 = scalar_lea.vmem %s8, %s487
        %s489 = smul.u32 16, %s25
        %p490 = scmp.lt.s32.totalorder %s25, 1
        %s491 = scalar_select %p490, %s25, 1
        %s492 = scalar_lea.vmem %s9, %s491
        %v493 = vld [vmem:[%s420] sm:$0xff]
        %v494 = vld [vmem:[%s420 + $0x8] sm:$0xff]
        %v495 = vld [vmem:[%s420 + $0x10] sm:$0xff]
        %v496 = vld [vmem:[%s420 + $0x18] sm:$0xff]
        %v497 = vld [vmem:[%s420 + $0x20] sm:$0xff]
        %v498 = vld [vmem:[%s420 + $0x28] sm:$0xff]
        %v499 = vld [vmem:[%s420 + $0x30] sm:$0xff]
        %v500 = vld [vmem:[%s420 + $0x38] sm:$0xff]
        %v501 = vld [vmem:[%s420 + $0x40] sm:$0xff]
        %v502 = vld [vmem:[%s420 + $0x48] sm:$0xff]
        %v503 = vld [vmem:[%s420 + $0x50] sm:$0xff]
        %v504 = vld [vmem:[%s420 + $0x58] sm:$0xff]
        %v505 = vld [vmem:[%s420 + $0x60] sm:$0xff]
        %v506 = vld [vmem:[%s420 + $0x68] sm:$0xff]
        %v507 = vld [vmem:[%s420 + $0x70] sm:$0xff]
        %v508 = vld [vmem:[%s420 + $0x78] sm:$0xff]
        %v509 = vld [vmem:[%s420 + $0x80] sm:$0xff]
        %v510 = vld [vmem:[%s420 + $0x88] sm:$0xff]
        %v511 = vld [vmem:[%s420 + $0x90] sm:$0xff]
        %v512 = vld [vmem:[%s420 + $0x98] sm:$0xff]
        %v513 = vld [vmem:[%s420 + $0xa0] sm:$0xff]
        %v514 = vld [vmem:[%s420 + $0xa8] sm:$0xff]
        %v515 = vld [vmem:[%s420 + $0xb0] sm:$0xff]
        %v516 = vld [vmem:[%s420 + $0xb8] sm:$0xff]
        %v517 = vld [vmem:[%s420 + $0xc0] sm:$0xff]
        %v518 = vld [vmem:[%s420 + $0xc8] sm:$0xff]
        %v519 = vld [vmem:[%s420 + $0xd0] sm:$0xff]
        %v520 = vld [vmem:[%s420 + $0xd8] sm:$0xff]
        %v521 = vld [vmem:[%s420 + $0xe0] sm:$0xff]
        %v522 = vld [vmem:[%s420 + $0xe8] sm:$0xff]
        %v523 = vld [vmem:[%s420 + $0xf0] sm:$0xff]
        %v524 = vld [vmem:[%s420 + $0xf8] sm:$0xff]
        %v525 = vld [vmem:[%s475] sm:$0xff]
        %v526 = vld [vmem:[%s475 + $0x8] sm:$0xff]
        %v527 = vld [vmem:[%s475 + $0x10] sm:$0xff]
        %v528 = vld [vmem:[%s475 + $0x18] sm:$0xff]
        %v529 = vld [vmem:[%s475 + $0x20] sm:$0xff]
        %v530 = vld [vmem:[%s475 + $0x28] sm:$0xff]
        %v531 = vld [vmem:[%s475 + $0x30] sm:$0xff]
        %v532 = vld [vmem:[%s475 + $0x38] sm:$0xff]
        %v533 = vld [vmem:[%s475 + $0x40] sm:$0xff]
        %v534 = vld [vmem:[%s475 + $0x48] sm:$0xff]
        %v535 = vld [vmem:[%s475 + $0x50] sm:$0xff]
        %v536 = vld [vmem:[%s475 + $0x58] sm:$0xff]
        %v537 = vld [vmem:[%s475 + $0x60] sm:$0xff]
        %v538 = vld [vmem:[%s475 + $0x68] sm:$0xff]
        %v539 = vld [vmem:[%s475 + $0x70] sm:$0xff]
        %v540 = vld [vmem:[%s475 + $0x78] sm:$0xff]
        %v541 = vld [vmem:[%s475 + $0x80] sm:$0xff]
        %v542 = vld [vmem:[%s475 + $0x88] sm:$0xff]
        %v543 = vld [vmem:[%s475 + $0x90] sm:$0xff]
        %v544 = vld [vmem:[%s475 + $0x98] sm:$0xff]
        %v545 = vld [vmem:[%s475 + $0xa0] sm:$0xff]
        %v546 = vld [vmem:[%s475 + $0xa8] sm:$0xff]
        %v547 = vld [vmem:[%s475 + $0xb0] sm:$0xff]
        %v548 = vld [vmem:[%s475 + $0xb8] sm:$0xff]
        %v549 = vld [vmem:[%s475 + $0xc0] sm:$0xff]
        %v550 = vld [vmem:[%s475 + $0xc8] sm:$0xff]
        %v551 = vld [vmem:[%s475 + $0xd0] sm:$0xff]
        %v552 = vld [vmem:[%s475 + $0xd8] sm:$0xff]
        %v553 = vld [vmem:[%s475 + $0xe0] sm:$0xff]
        %v554 = vld [vmem:[%s475 + $0xe8] sm:$0xff]
        %v555 = vld [vmem:[%s475 + $0xf0] sm:$0xff]
        %v556 = vld [vmem:[%s475 + $0xf8] sm:$0xff]
        %v557 = vld [vmem:[%s475 + $0x100] sm:$0xff]
        %v558 = vld [vmem:[%s475 + $0x108] sm:$0xff]
        %v559 = vld [vmem:[%s475 + $0x110] sm:$0xff]
        %v560 = vld [vmem:[%s475 + $0x118] sm:$0xff]
        %v561 = vld [vmem:[%s475 + $0x120] sm:$0xff]
        %v562 = vld [vmem:[%s475 + $0x128] sm:$0xff]
        %v563 = vld [vmem:[%s475 + $0x130] sm:$0xff]
        %v564 = vld [vmem:[%s475 + $0x138] sm:$0xff]
        %v565 = vld [vmem:[%s475 + $0x140] sm:$0xff]
        %v566 = vld [vmem:[%s475 + $0x148] sm:$0xff]
        %v567 = vld [vmem:[%s475 + $0x150] sm:$0xff]
        %v568 = vld [vmem:[%s475 + $0x158] sm:$0xff]
        %v569 = vld [vmem:[%s475 + $0x160] sm:$0xff]
        %v570 = vld [vmem:[%s475 + $0x168] sm:$0xff]
        %v571 = vld [vmem:[%s475 + $0x170] sm:$0xff]
        %v572 = vld [vmem:[%s475 + $0x178] sm:$0xff]
        %v573 = vld [vmem:[%s475 + $0x180] sm:$0xff]
        %v574 = vld [vmem:[%s475 + $0x188] sm:$0xff]
        %v575 = vld [vmem:[%s475 + $0x190] sm:$0xff]
        %v576 = vld [vmem:[%s475 + $0x198] sm:$0xff]
        %v577 = vld [vmem:[%s475 + $0x1a0] sm:$0xff]
        %v578 = vld [vmem:[%s475 + $0x1a8] sm:$0xff]
        %v579 = vld [vmem:[%s475 + $0x1b0] sm:$0xff]
        %v580 = vld [vmem:[%s475 + $0x1b8] sm:$0xff]
        %v581 = vld [vmem:[%s475 + $0x1c0] sm:$0xff]
        %v582 = vld [vmem:[%s475 + $0x1c8] sm:$0xff]
        %v583 = vld [vmem:[%s475 + $0x1d0] sm:$0xff]
        %v584 = vld [vmem:[%s475 + $0x1d8] sm:$0xff]
        %v585 = vld [vmem:[%s475 + $0x1e0] sm:$0xff]
        %v586 = vld [vmem:[%s475 + $0x1e8] sm:$0xff]
        %v587 = vld [vmem:[%s475 + $0x1f0] sm:$0xff]
        %v588 = vld [vmem:[%s475 + $0x1f8] sm:$0xff]
        %v621 = vunpack.c.l.b16 %v493
        %v622 = vunpack.c.h.b16 %v493
        %v623 = vunpack.c.l.b16 %v494
        %v624 = vunpack.c.h.b16 %v494
        %v625 = vunpack.c.l.b16 %v495
        %v626 = vunpack.c.h.b16 %v495
        %v627 = vunpack.c.l.b16 %v496
        %v628 = vunpack.c.h.b16 %v496
        %v629 = vunpack.c.l.b16 %v497
        %v630 = vunpack.c.h.b16 %v497
        %v631 = vunpack.c.l.b16 %v498
        %v632 = vunpack.c.h.b16 %v498
        %v633 = vunpack.c.l.b16 %v499
        %v634 = vunpack.c.h.b16 %v499
        %v635 = vunpack.c.l.b16 %v500
        %v636 = vunpack.c.h.b16 %v500
        %v637 = vunpack.c.l.b16 %v501
        %v638 = vunpack.c.h.b16 %v501
        %v639 = vunpack.c.l.b16 %v502
        %v640 = vunpack.c.h.b16 %v502
        %v641 = vunpack.c.l.b16 %v503
        %v642 = vunpack.c.h.b16 %v503
        %v643 = vunpack.c.l.b16 %v504
        %v644 = vunpack.c.h.b16 %v504
        %v645 = vunpack.c.l.b16 %v505
        %v646 = vunpack.c.h.b16 %v505
        %v647 = vunpack.c.l.b16 %v506
        %v648 = vunpack.c.h.b16 %v506
        %v649 = vunpack.c.l.b16 %v507
        %v650 = vunpack.c.h.b16 %v507
        %v651 = vunpack.c.l.b16 %v508
        %v652 = vunpack.c.h.b16 %v508
        %v653 = vunpack.c.l.b16 %v509
        %v654 = vunpack.c.h.b16 %v509
        %v655 = vunpack.c.l.b16 %v510
        %v656 = vunpack.c.h.b16 %v510
        %v657 = vunpack.c.l.b16 %v511
        %v658 = vunpack.c.h.b16 %v511
        %v659 = vunpack.c.l.b16 %v512
        %v660 = vunpack.c.h.b16 %v512
        %v661 = vunpack.c.l.b16 %v513
        %v662 = vunpack.c.h.b16 %v513
        %v663 = vunpack.c.l.b16 %v514
        %v664 = vunpack.c.h.b16 %v514
        %v665 = vunpack.c.l.b16 %v515
        %v666 = vunpack.c.h.b16 %v515
        %v667 = vunpack.c.l.b16 %v516
        %v668 = vunpack.c.h.b16 %v516
        %v669 = vunpack.c.l.b16 %v517
        %v670 = vunpack.c.h.b16 %v517
        %v671 = vunpack.c.l.b16 %v518
        %v672 = vunpack.c.h.b16 %v518
        %v673 = vunpack.c.l.b16 %v519
        %v674 = vunpack.c.h.b16 %v519
        %v675 = vunpack.c.l.b16 %v520
        %v676 = vunpack.c.h.b16 %v520
        %v677 = vunpack.c.l.b16 %v521
        %v678 = vunpack.c.h.b16 %v521
        %v679 = vunpack.c.l.b16 %v522
        %v680 = vunpack.c.h.b16 %v522
        %v681 = vunpack.c.l.b16 %v523
        %v682 = vunpack.c.h.b16 %v523
        %v683 = vunpack.c.l.b16 %v524
        %v684 = vunpack.c.h.b16 %v524
        %v685 = vpack.c.b16 %v625, %v621
        %v686 = vpack.c.b16 %v626, %v622
        %v687 = vpack.c.b16 %v627, %v623
        %v688 = vpack.c.b16 %v628, %v624
        %v689 = vpack.c.b16 %v633, %v629
        %v690 = vpack.c.b16 %v634, %v630
        %v691 = vpack.c.b16 %v635, %v631
        %v692 = vpack.c.b16 %v636, %v632
        %v693 = vpack.c.b16 %v641, %v637
        %v694 = vpack.c.b16 %v642, %v638
        %v695 = vpack.c.b16 %v643, %v639
        %v696 = vpack.c.b16 %v644, %v640
        %v697 = vpack.c.b16 %v649, %v645
        %v698 = vpack.c.b16 %v650, %v646
        %v699 = vpack.c.b16 %v651, %v647
        %v700 = vpack.c.b16 %v652, %v648
        %v701 = vpack.c.b16 %v657, %v653
        %v702 = vpack.c.b16 %v658, %v654
        %v703 = vpack.c.b16 %v659, %v655
        %v704 = vpack.c.b16 %v660, %v656
        %v705 = vpack.c.b16 %v665, %v661
        %v706 = vpack.c.b16 %v666, %v662
        %v707 = vpack.c.b16 %v667, %v663
        %v708 = vpack.c.b16 %v668, %v664
        %v709 = vpack.c.b16 %v673, %v669
        %v710 = vpack.c.b16 %v674, %v670
        %v711 = vpack.c.b16 %v675, %v671
        %v712 = vpack.c.b16 %v676, %v672
        %v713 = vpack.c.b16 %v681, %v677
        %v714 = vpack.c.b16 %v682, %v678
        %v715 = vpack.c.b16 %v683, %v679
        %v716 = vpack.c.b16 %v684, %v680
        %v813 = vunpack.c.l.b16 %v525
        %v814 = vunpack.c.h.b16 %v525
        %v815 = vunpack.c.l.b16 %v526
        %v816 = vunpack.c.h.b16 %v526
        %v817 = vunpack.c.l.b16 %v527
        %v818 = vunpack.c.h.b16 %v527
        %v819 = vunpack.c.l.b16 %v528
        %v820 = vunpack.c.h.b16 %v528
        %v821 = vunpack.c.l.b16 %v529
        %v822 = vunpack.c.h.b16 %v529
        %v823 = vunpack.c.l.b16 %v530
        %v824 = vunpack.c.h.b16 %v530
        %v825 = vunpack.c.l.b16 %v531
        %v826 = vunpack.c.h.b16 %v531
        %v827 = vunpack.c.l.b16 %v532
        %v828 = vunpack.c.h.b16 %v532
        %v829 = vunpack.c.l.b16 %v533
        %v830 = vunpack.c.h.b16 %v533
        %v831 = vunpack.c.l.b16 %v534
        %v832 = vunpack.c.h.b16 %v534
        %v833 = vunpack.c.l.b16 %v535
        %v834 = vunpack.c.h.b16 %v535
        %v835 = vunpack.c.l.b16 %v536
        %v836 = vunpack.c.h.b16 %v536
        %v837 = vunpack.c.l.b16 %v537
        %v838 = vunpack.c.h.b16 %v537
        %v839 = vunpack.c.l.b16 %v538
        %v840 = vunpack.c.h.b16 %v538
        %v841 = vunpack.c.l.b16 %v539
        %v842 = vunpack.c.h.b16 %v539
        %v843 = vunpack.c.l.b16 %v540
        %v844 = vunpack.c.h.b16 %v540
        %v845 = vunpack.c.l.b16 %v541
        %v846 = vunpack.c.h.b16 %v541
        %v847 = vunpack.c.l.b16 %v542
        %v848 = vunpack.c.h.b16 %v542
        %v849 = vunpack.c.l.b16 %v543
        %v850 = vunpack.c.h.b16 %v543
        %v851 = vunpack.c.l.b16 %v544
        %v852 = vunpack.c.h.b16 %v544
        %v853 = vunpack.c.l.b16 %v545
        %v854 = vunpack.c.h.b16 %v545
        %v855 = vunpack.c.l.b16 %v546
        %v856 = vunpack.c.h.b16 %v546
        %v857 = vunpack.c.l.b16 %v547
        %v858 = vunpack.c.h.b16 %v547
        %v859 = vunpack.c.l.b16 %v548
        %v860 = vunpack.c.h.b16 %v548
        %v861 = vunpack.c.l.b16 %v549
        %v862 = vunpack.c.h.b16 %v549
        %v863 = vunpack.c.l.b16 %v550
        %v864 = vunpack.c.h.b16 %v550
        %v865 = vunpack.c.l.b16 %v551
        %v866 = vunpack.c.h.b16 %v551
        %v867 = vunpack.c.l.b16 %v552
        %v868 = vunpack.c.h.b16 %v552
        %v869 = vunpack.c.l.b16 %v553
        %v870 = vunpack.c.h.b16 %v553
        %v871 = vunpack.c.l.b16 %v554
        %v872 = vunpack.c.h.b16 %v554
        %v873 = vunpack.c.l.b16 %v555
        %v874 = vunpack.c.h.b16 %v555
        %v875 = vunpack.c.l.b16 %v556
        %v876 = vunpack.c.h.b16 %v556
        %v877 = vunpack.c.l.b16 %v557
        %v878 = vunpack.c.h.b16 %v557
        %v879 = vunpack.c.l.b16 %v558
        %v880 = vunpack.c.h.b16 %v558
        %v881 = vunpack.c.l.b16 %v559
        %v882 = vunpack.c.h.b16 %v559
        %v883 = vunpack.c.l.b16 %v560
        %v884 = vunpack.c.h.b16 %v560
        %v885 = vunpack.c.l.b16 %v561
        %v886 = vunpack.c.h.b16 %v561
        %v887 = vunpack.c.l.b16 %v562
        %v888 = vunpack.c.h.b16 %v562
        %v889 = vunpack.c.l.b16 %v563
        %v890 = vunpack.c.h.b16 %v563
        %v891 = vunpack.c.l.b16 %v564
        %v892 = vunpack.c.h.b16 %v564
        %v893 = vunpack.c.l.b16 %v565
        %v894 = vunpack.c.h.b16 %v565
        %v895 = vunpack.c.l.b16 %v566
        %v896 = vunpack.c.h.b16 %v566
        %v897 = vunpack.c.l.b16 %v567
        %v898 = vunpack.c.h.b16 %v567
        %v899 = vunpack.c.l.b16 %v568
        %v900 = vunpack.c.h.b16 %v568
        %v901 = vunpack.c.l.b16 %v569
        %v902 = vunpack.c.h.b16 %v569
        %v903 = vunpack.c.l.b16 %v570
        %v904 = vunpack.c.h.b16 %v570
        %v905 = vunpack.c.l.b16 %v571
        %v906 = vunpack.c.h.b16 %v571
        %v907 = vunpack.c.l.b16 %v572
        %v908 = vunpack.c.h.b16 %v572
        %v909 = vunpack.c.l.b16 %v573
        %v910 = vunpack.c.h.b16 %v573
        %v911 = vunpack.c.l.b16 %v574
        %v912 = vunpack.c.h.b16 %v574
        %v913 = vunpack.c.l.b16 %v575
        %v914 = vunpack.c.h.b16 %v575
        %v915 = vunpack.c.l.b16 %v576
        %v916 = vunpack.c.h.b16 %v576
        %v917 = vunpack.c.l.b16 %v577
        %v918 = vunpack.c.h.b16 %v577
        %v919 = vunpack.c.l.b16 %v578
        %v920 = vunpack.c.h.b16 %v578
        %v921 = vunpack.c.l.b16 %v579
        %v922 = vunpack.c.h.b16 %v579
        %v923 = vunpack.c.l.b16 %v580
        %v924 = vunpack.c.h.b16 %v580
        %v925 = vunpack.c.l.b16 %v581
        %v926 = vunpack.c.h.b16 %v581
        %v927 = vunpack.c.l.b16 %v582
        %v928 = vunpack.c.h.b16 %v582
        %v929 = vunpack.c.l.b16 %v583
        %v930 = vunpack.c.h.b16 %v583
        %v931 = vunpack.c.l.b16 %v584
        %v932 = vunpack.c.h.b16 %v584
        %v933 = vunpack.c.l.b16 %v585
        %v934 = vunpack.c.h.b16 %v585
        %v935 = vunpack.c.l.b16 %v586
        %v936 = vunpack.c.h.b16 %v586
        %v937 = vunpack.c.l.b16 %v587
        %v938 = vunpack.c.h.b16 %v587
        %v939 = vunpack.c.l.b16 %v588
        %v940 = vunpack.c.h.b16 %v588
        %v941 = vpack.c.b16 %v815, %v813
        %v942 = vpack.c.b16 %v816, %v814
        %v943 = vpack.c.b16 %v819, %v817
        %v944 = vpack.c.b16 %v820, %v818
        %v945 = vpack.c.b16 %v823, %v821
        %v946 = vpack.c.b16 %v824, %v822
        %v947 = vpack.c.b16 %v827, %v825
        %v948 = vpack.c.b16 %v828, %v826
        %v949 = vpack.c.b16 %v831, %v829
        %v950 = vpack.c.b16 %v832, %v830
        %v951 = vpack.c.b16 %v835, %v833
        %v952 = vpack.c.b16 %v836, %v834
        %v953 = vpack.c.b16 %v839, %v837
        %v954 = vpack.c.b16 %v840, %v838
        %v955 = vpack.c.b16 %v843, %v841
        %v956 = vpack.c.b16 %v844, %v842
        %v957 = vpack.c.b16 %v847, %v845
        %v958 = vpack.c.b16 %v848, %v846
        %v959 = vpack.c.b16 %v851, %v849
        %v960 = vpack.c.b16 %v852, %v850
        %v961 = vpack.c.b16 %v855, %v853
        %v962 = vpack.c.b16 %v856, %v854
        %v963 = vpack.c.b16 %v859, %v857
        %v964 = vpack.c.b16 %v860, %v858
        %v965 = vpack.c.b16 %v863, %v861
        %v966 = vpack.c.b16 %v864, %v862
        %v967 = vpack.c.b16 %v867, %v865
        %v968 = vpack.c.b16 %v868, %v866
        %v969 = vpack.c.b16 %v871, %v869
        %v970 = vpack.c.b16 %v872, %v870
        %v971 = vpack.c.b16 %v875, %v873
        %v972 = vpack.c.b16 %v876, %v874
        %v973 = vpack.c.b16 %v879, %v877
        %v974 = vpack.c.b16 %v880, %v878
        %v975 = vpack.c.b16 %v883, %v881
        %v976 = vpack.c.b16 %v884, %v882
        %v977 = vpack.c.b16 %v887, %v885
        %v978 = vpack.c.b16 %v888, %v886
        %v979 = vpack.c.b16 %v891, %v889
        %v980 = vpack.c.b16 %v892, %v890
        %v981 = vpack.c.b16 %v895, %v893
        %v982 = vpack.c.b16 %v896, %v894
        %v983 = vpack.c.b16 %v899, %v897
        %v984 = vpack.c.b16 %v900, %v898
        %v985 = vpack.c.b16 %v903, %v901
        %v986 = vpack.c.b16 %v904, %v902
        %v987 = vpack.c.b16 %v907, %v905
        %v988 = vpack.c.b16 %v908, %v906
        %v989 = vpack.c.b16 %v911, %v909
        %v990 = vpack.c.b16 %v912, %v910
        %v991 = vpack.c.b16 %v915, %v913
        %v992 = vpack.c.b16 %v916, %v914
        %v993 = vpack.c.b16 %v919, %v917
        %v994 = vpack.c.b16 %v920, %v918
        %v995 = vpack.c.b16 %v923, %v921
        %v996 = vpack.c.b16 %v924, %v922
        %v997 = vpack.c.b16 %v927, %v925
        %v998 = vpack.c.b16 %v928, %v926
        %v999 = vpack.c.b16 %v931, %v929
        %v1000 = vpack.c.b16 %v932, %v930
        %v1001 = vpack.c.b16 %v935, %v933
        %v1002 = vpack.c.b16 %v936, %v934
        %v1003 = vpack.c.b16 %v939, %v937
        %v1004 = vpack.c.b16 %v940, %v938
        %1069 = vmatpush.bf16.msra.mxu0 %v955
        %1070 = vmatpush.bf16.msra.mxu0 %v953
        %1071 = vmatpush.bf16.msra.mxu0 %v951
        %1072 = vmatpush.bf16.msra.mxu0 %v949
        %1073 = vmatpush.bf16.msra.mxu0 %v947
        %1074 = vmatpush.bf16.msra.mxu0 %v945
        %1075 = vmatpush.bf16.msra.mxu0 %v943
        %1076 = vmatpush.bf16.msra.mxu0 %v941
        %1077 = vmatmul.bf16.gmra.mxu0 %v685
        %v1078 = vpop.f32.mrf.mxu0
        %v1079 = vadd.f32 0.0, %v1078
        %v1080 = vpop.f32.mrf.mxu0
        %v1081 = vadd.f32 0.0, %v1080
        %1082 = vmatmul.bf16.gmra.mxu0 %v689
        %v1083 = vpop.f32.mrf.mxu0
        %v1084 = vadd.f32 0.0, %v1083
        %v1085 = vpop.f32.mrf.mxu0
        %v1086 = vadd.f32 0.0, %v1085
        %1087 = vmatmul.bf16.gmra.mxu0 %v693
        %v1088 = vpop.f32.mrf.mxu0
        %v1089 = vadd.f32 0.0, %v1088
        %v1090 = vpop.f32.mrf.mxu0
        %v1091 = vadd.f32 0.0, %v1090
        %1092 = vmatmul.bf16.gmra.mxu0 %v697
        %v1093 = vpop.f32.mrf.mxu0
        %v1094 = vadd.f32 0.0, %v1093
        %v1095 = vpop.f32.mrf.mxu0
        %v1096 = vadd.f32 0.0, %v1095
        %1097 = vmatmul.bf16.gmra.mxu0 %v701
        %v1098 = vpop.f32.mrf.mxu0
        %v1099 = vadd.f32 0.0, %v1098
        %v1100 = vpop.f32.mrf.mxu0
        %v1101 = vadd.f32 0.0, %v1100
        %1102 = vmatmul.bf16.gmra.mxu0 %v705
        %v1103 = vpop.f32.mrf.mxu0
        %v1104 = vadd.f32 0.0, %v1103
        %v1105 = vpop.f32.mrf.mxu0
        %v1106 = vadd.f32 0.0, %v1105
        %1107 = vmatmul.bf16.gmra.mxu0 %v709
        %v1108 = vpop.f32.mrf.mxu0
        %v1109 = vadd.f32 0.0, %v1108
        %v1110 = vpop.f32.mrf.mxu0
        %v1111 = vadd.f32 0.0, %v1110
        %1112 = vmatmul.bf16.gmra.mxu0 %v713
        %v1113 = vpop.f32.mrf.mxu0
        %v1114 = vadd.f32 0.0, %v1113
        %v1115 = vpop.f32.mrf.mxu0
        %v1116 = vadd.f32 0.0, %v1115
        %1117 = vdwg.mxu0
        %1118 = vmatpush.bf16.msra.mxu0 %v971
        %1119 = vmatpush.bf16.msra.mxu0 %v969
        %1120 = vmatpush.bf16.msra.mxu0 %v967
        %1121 = vmatpush.bf16.msra.mxu0 %v965
        %1122 = vmatpush.bf16.msra.mxu0 %v963
        %1123 = vmatpush.bf16.msra.mxu0 %v961
        %1124 = vmatpush.bf16.msra.mxu0 %v959
        %1125 = vmatpush.bf16.msra.mxu0 %v957
        %1126 = vmatmul.bf16.gmra.mxu0 %v686
        %v1127 = vpop.f32.mrf.mxu0
        %v1128 = vadd.f32 %v1079, %v1127
        %v1129 = vpop.f32.mrf.mxu0
        %v1130 = vadd.f32 %v1081, %v1129
        %1131 = vmatmul.bf16.gmra.mxu0 %v690
        %v1132 = vpop.f32.mrf.mxu0
        %v1133 = vadd.f32 %v1084, %v1132
        %v1134 = vpop.f32.mrf.mxu0
        %v1135 = vadd.f32 %v1086, %v1134
        %1136 = vmatmul.bf16.gmra.mxu0 %v694
        %v1137 = vpop.f32.mrf.mxu0
        %v1138 = vadd.f32 %v1089, %v1137
        %v1139 = vpop.f32.mrf.mxu0
        %v1140 = vadd.f32 %v1091, %v1139
        %1141 = vmatmul.bf16.gmra.mxu0 %v698
        %v1142 = vpop.f32.mrf.mxu0
        %v1143 = vadd.f32 %v1094, %v1142
        %v1144 = vpop.f32.mrf.mxu0
        %v1145 = vadd.f32 %v1096, %v1144
        %1146 = vmatmul.bf16.gmra.mxu0 %v702
        %v1147 = vpop.f32.mrf.mxu0
        %v1148 = vadd.f32 %v1099, %v1147
        %v1149 = vpop.f32.mrf.mxu0
        %v1150 = vadd.f32 %v1101, %v1149
        %1151 = vmatmul.bf16.gmra.mxu0 %v706
        %v1152 = vpop.f32.mrf.mxu0
        %v1153 = vadd.f32 %v1104, %v1152
        %v1154 = vpop.f32.mrf.mxu0
        %v1155 = vadd.f32 %v1106, %v1154
        %1156 = vmatmul.bf16.gmra.mxu0 %v710
        %v1157 = vpop.f32.mrf.mxu0
        %v1158 = vadd.f32 %v1109, %v1157
        %v1159 = vpop.f32.mrf.mxu0
        %v1160 = vadd.f32 %v1111, %v1159
        %1161 = vmatmul.bf16.gmra.mxu0 %v714
        %v1162 = vpop.f32.mrf.mxu0
        %v1163 = vadd.f32 %v1114, %v1162
        %v1164 = vpop.f32.mrf.mxu0
        %v1165 = vadd.f32 %v1116, %v1164
        %1166 = vdwg.mxu0
        %1167 = vmatpush.bf16.msra.mxu0 %v987
        %1168 = vmatpush.bf16.msra.mxu0 %v985
        %1169 = vmatpush.bf16.msra.mxu0 %v983
        %1170 = vmatpush.bf16.msra.mxu0 %v981
        %1171 = vmatpush.bf16.msra.mxu0 %v979
        %1172 = vmatpush.bf16.msra.mxu0 %v977
        %1173 = vmatpush.bf16.msra.mxu0 %v975
        %1174 = vmatpush.bf16.msra.mxu0 %v973
        %1175 = vmatmul.bf16.gmra.mxu0 %v687
        %v1176 = vpop.f32.mrf.mxu0
        %v1177 = vadd.f32 %v1128, %v1176
        %v1178 = vpop.f32.mrf.mxu0
        %v1179 = vadd.f32 %v1130, %v1178
        %1180 = vmatmul.bf16.gmra.mxu0 %v691
        %v1181 = vpop.f32.mrf.mxu0
        %v1182 = vadd.f32 %v1133, %v1181
        %v1183 = vpop.f32.mrf.mxu0
        %v1184 = vadd.f32 %v1135, %v1183
        %1185 = vmatmul.bf16.gmra.mxu0 %v695
        %v1186 = vpop.f32.mrf.mxu0
        %v1187 = vadd.f32 %v1138, %v1186
        %v1188 = vpop.f32.mrf.mxu0
        %v1189 = vadd.f32 %v1140, %v1188
        %1190 = vmatmul.bf16.gmra.mxu0 %v699
        %v1191 = vpop.f32.mrf.mxu0
        %v1192 = vadd.f32 %v1143, %v1191
        %v1193 = vpop.f32.mrf.mxu0
        %v1194 = vadd.f32 %v1145, %v1193
        %1195 = vmatmul.bf16.gmra.mxu0 %v703
        %v1196 = vpop.f32.mrf.mxu0
        %v1197 = vadd.f32 %v1148, %v1196
        %v1198 = vpop.f32.mrf.mxu0
        %v1199 = vadd.f32 %v1150, %v1198
        %1200 = vmatmul.bf16.gmra.mxu0 %v707
        %v1201 = vpop.f32.mrf.mxu0
        %v1202 = vadd.f32 %v1153, %v1201
        %v1203 = vpop.f32.mrf.mxu0
        %v1204 = vadd.f32 %v1155, %v1203
        %1205 = vmatmul.bf16.gmra.mxu0 %v711
        %v1206 = vpop.f32.mrf.mxu0
        %v1207 = vadd.f32 %v1158, %v1206
        %v1208 = vpop.f32.mrf.mxu0
        %v1209 = vadd.f32 %v1160, %v1208
        %1210 = vmatmul.bf16.gmra.mxu0 %v715
        %v1211 = vpop.f32.mrf.mxu0
        %v1212 = vadd.f32 %v1163, %v1211
        %v1213 = vpop.f32.mrf.mxu0
        %v1214 = vadd.f32 %v1165, %v1213
        %1215 = vdwg.mxu0
        %1216 = vmatpush.bf16.msra.mxu0 %v1003
        %1217 = vmatpush.bf16.msra.mxu0 %v1001
        %1218 = vmatpush.bf16.msra.mxu0 %v999
        %1219 = vmatpush.bf16.msra.mxu0 %v997
        %1220 = vmatpush.bf16.msra.mxu0 %v995
        %1221 = vmatpush.bf16.msra.mxu0 %v993
        %1222 = vmatpush.bf16.msra.mxu0 %v991
        %1223 = vmatpush.bf16.msra.mxu0 %v989
        %1224 = vmatmul.bf16.gmra.mxu0 %v688
        %v1225 = vpop.f32.mrf.mxu0
        %v1226 = vadd.f32 %v1177, %v1225
        %v1227 = vpop.f32.mrf.mxu0
        %v1228 = vadd.f32 %v1179, %v1227
        %1229 = vmatmul.bf16.gmra.mxu0 %v692
        %v1230 = vpop.f32.mrf.mxu0
        %v1231 = vadd.f32 %v1182, %v1230
        %v1232 = vpop.f32.mrf.mxu0
        %v1233 = vadd.f32 %v1184, %v1232
        %1234 = vmatmul.bf16.gmra.mxu0 %v696
        %v1235 = vpop.f32.mrf.mxu0
        %v1236 = vadd.f32 %v1187, %v1235
        %v1237 = vpop.f32.mrf.mxu0
        %v1238 = vadd.f32 %v1189, %v1237
        %1239 = vmatmul.bf16.gmra.mxu0 %v700
        %v1240 = vpop.f32.mrf.mxu0
        %v1241 = vadd.f32 %v1192, %v1240
        %v1242 = vpop.f32.mrf.mxu0
        %v1243 = vadd.f32 %v1194, %v1242
        %1244 = vmatmul.bf16.gmra.mxu0 %v704
        %v1245 = vpop.f32.mrf.mxu0
        %v1246 = vadd.f32 %v1197, %v1245
        %v1247 = vpop.f32.mrf.mxu0
        %v1248 = vadd.f32 %v1199, %v1247
        %1249 = vmatmul.bf16.gmra.mxu0 %v708
        %v1250 = vpop.f32.mrf.mxu0
        %v1251 = vadd.f32 %v1202, %v1250
        %v1252 = vpop.f32.mrf.mxu0
        %v1253 = vadd.f32 %v1204, %v1252
        %1254 = vmatmul.bf16.gmra.mxu0 %v712
        %v1255 = vpop.f32.mrf.mxu0
        %v1256 = vadd.f32 %v1207, %v1255
        %v1257 = vpop.f32.mrf.mxu0
        %v1258 = vadd.f32 %v1209, %v1257
        %1259 = vmatmul.bf16.gmra.mxu0 %v716
        %v1260 = vpop.f32.mrf.mxu0
        %v1261 = vadd.f32 %v1212, %v1260
        %v1262 = vpop.f32.mrf.mxu0
        %v1263 = vadd.f32 %v1214, %v1262
        %1264 = vdwg.mxu0
        %1265 = vmatpush.bf16.msra.mxu0 %v956
        %1266 = vmatpush.bf16.msra.mxu0 %v954
        %1267 = vmatpush.bf16.msra.mxu0 %v952
        %1268 = vmatpush.bf16.msra.mxu0 %v950
        %1269 = vmatpush.bf16.msra.mxu0 %v948
        %1270 = vmatpush.bf16.msra.mxu0 %v946
        %1271 = vmatpush.bf16.msra.mxu0 %v944
        %1272 = vmatpush.bf16.msra.mxu0 %v942
        %1273 = vmatmul.bf16.gmra.mxu0 %v685
        %v1274 = vpop.f32.mrf.mxu0
        %v1275 = vadd.f32 0.0, %v1274
        %v1276 = vpop.f32.mrf.mxu0
        %v1277 = vadd.f32 0.0, %v1276
        %1278 = vmatmul.bf16.gmra.mxu0 %v689
        %v1279 = vpop.f32.mrf.mxu0
        %v1280 = vadd.f32 0.0, %v1279
        %v1281 = vpop.f32.mrf.mxu0
        %v1282 = vadd.f32 0.0, %v1281
        %1283 = vmatmul.bf16.gmra.mxu0 %v693
        %v1284 = vpop.f32.mrf.mxu0
        %v1285 = vadd.f32 0.0, %v1284
        %v1286 = vpop.f32.mrf.mxu0
        %v1287 = vadd.f32 0.0, %v1286
        %1288 = vmatmul.bf16.gmra.mxu0 %v697
        %v1289 = vpop.f32.mrf.mxu0
        %v1290 = vadd.f32 0.0, %v1289
        %v1291 = vpop.f32.mrf.mxu0
        %v1292 = vadd.f32 0.0, %v1291
        %1293 = vmatmul.bf16.gmra.mxu0 %v701
        %v1294 = vpop.f32.mrf.mxu0
        %v1295 = vadd.f32 0.0, %v1294
        %v1296 = vpop.f32.mrf.mxu0
        %v1297 = vadd.f32 0.0, %v1296
        %1298 = vmatmul.bf16.gmra.mxu0 %v705
        %v1299 = vpop.f32.mrf.mxu0
        %v1300 = vadd.f32 0.0, %v1299
        %v1301 = vpop.f32.mrf.mxu0
        %v1302 = vadd.f32 0.0, %v1301
        %1303 = vmatmul.bf16.gmra.mxu0 %v709
        %v1304 = vpop.f32.mrf.mxu0
        %v1305 = vadd.f32 0.0, %v1304
        %v1306 = vpop.f32.mrf.mxu0
        %v1307 = vadd.f32 0.0, %v1306
        %1308 = vmatmul.bf16.gmra.mxu0 %v713
        %v1309 = vpop.f32.mrf.mxu0
        %v1310 = vadd.f32 0.0, %v1309
        %v1311 = vpop.f32.mrf.mxu0
        %v1312 = vadd.f32 0.0, %v1311
        %1313 = vdwg.mxu0
        %1314 = vmatpush.bf16.msra.mxu0 %v972
        %1315 = vmatpush.bf16.msra.mxu0 %v970
        %1316 = vmatpush.bf16.msra.mxu0 %v968
        %1317 = vmatpush.bf16.msra.mxu0 %v966
        %1318 = vmatpush.bf16.msra.mxu0 %v964
        %1319 = vmatpush.bf16.msra.mxu0 %v962
        %1320 = vmatpush.bf16.msra.mxu0 %v960
        %1321 = vmatpush.bf16.msra.mxu0 %v958
        %1322 = vmatmul.bf16.gmra.mxu0 %v686
        %v1323 = vpop.f32.mrf.mxu0
        %v1324 = vadd.f32 %v1275, %v1323
        %v1325 = vpop.f32.mrf.mxu0
        %v1326 = vadd.f32 %v1277, %v1325
        %1327 = vmatmul.bf16.gmra.mxu0 %v690
        %v1328 = vpop.f32.mrf.mxu0
        %v1329 = vadd.f32 %v1280, %v1328
        %v1330 = vpop.f32.mrf.mxu0
        %v1331 = vadd.f32 %v1282, %v1330
        %1332 = vmatmul.bf16.gmra.mxu0 %v694
        %v1333 = vpop.f32.mrf.mxu0
        %v1334 = vadd.f32 %v1285, %v1333
        %v1335 = vpop.f32.mrf.mxu0
        %v1336 = vadd.f32 %v1287, %v1335
        %1337 = vmatmul.bf16.gmra.mxu0 %v698
        %v1338 = vpop.f32.mrf.mxu0
        %v1339 = vadd.f32 %v1290, %v1338
        %v1340 = vpop.f32.mrf.mxu0
        %v1341 = vadd.f32 %v1292, %v1340
        %1342 = vmatmul.bf16.gmra.mxu0 %v702
        %v1343 = vpop.f32.mrf.mxu0
        %v1344 = vadd.f32 %v1295, %v1343
        %v1345 = vpop.f32.mrf.mxu0
        %v1346 = vadd.f32 %v1297, %v1345
        %1347 = vmatmul.bf16.gmra.mxu0 %v706
        %v1348 = vpop.f32.mrf.mxu0
        %v1349 = vadd.f32 %v1300, %v1348
        %v1350 = vpop.f32.mrf.mxu0
        %v1351 = vadd.f32 %v1302, %v1350
        %1352 = vmatmul.bf16.gmra.mxu0 %v710
        %v1353 = vpop.f32.mrf.mxu0
        %v1354 = vadd.f32 %v1305, %v1353
        %v1355 = vpop.f32.mrf.mxu0
        %v1356 = vadd.f32 %v1307, %v1355
        %1357 = vmatmul.bf16.gmra.mxu0 %v714
        %v1358 = vpop.f32.mrf.mxu0
        %v1359 = vadd.f32 %v1310, %v1358
        %v1360 = vpop.f32.mrf.mxu0
        %v1361 = vadd.f32 %v1312, %v1360
        %1362 = vdwg.mxu0
        %1363 = vmatpush.bf16.msra.mxu0 %v988
        %1364 = vmatpush.bf16.msra.mxu0 %v986
        %1365 = vmatpush.bf16.msra.mxu0 %v984
        %1366 = vmatpush.bf16.msra.mxu0 %v982
        %1367 = vmatpush.bf16.msra.mxu0 %v980
        %1368 = vmatpush.bf16.msra.mxu0 %v978
        %1369 = vmatpush.bf16.msra.mxu0 %v976
        %1370 = vmatpush.bf16.msra.mxu0 %v974
        %1371 = vmatmul.bf16.gmra.mxu0 %v687
        %v1372 = vpop.f32.mrf.mxu0
        %v1373 = vadd.f32 %v1324, %v1372
        %v1374 = vpop.f32.mrf.mxu0
        %v1375 = vadd.f32 %v1326, %v1374
        %1376 = vmatmul.bf16.gmra.mxu0 %v691
        %v1377 = vpop.f32.mrf.mxu0
        %v1378 = vadd.f32 %v1329, %v1377
        %v1379 = vpop.f32.mrf.mxu0
        %v1380 = vadd.f32 %v1331, %v1379
        %1381 = vmatmul.bf16.gmra.mxu0 %v695
        %v1382 = vpop.f32.mrf.mxu0
        %v1383 = vadd.f32 %v1334, %v1382
        %v1384 = vpop.f32.mrf.mxu0
        %v1385 = vadd.f32 %v1336, %v1384
        %1386 = vmatmul.bf16.gmra.mxu0 %v699
        %v1387 = vpop.f32.mrf.mxu0
        %v1388 = vadd.f32 %v1339, %v1387
        %v1389 = vpop.f32.mrf.mxu0
        %v1390 = vadd.f32 %v1341, %v1389
        %1391 = vmatmul.bf16.gmra.mxu0 %v703
        %v1392 = vpop.f32.mrf.mxu0
        %v1393 = vadd.f32 %v1344, %v1392
        %v1394 = vpop.f32.mrf.mxu0
        %v1395 = vadd.f32 %v1346, %v1394
        %1396 = vmatmul.bf16.gmra.mxu0 %v707
        %v1397 = vpop.f32.mrf.mxu0
        %v1398 = vadd.f32 %v1349, %v1397
        %v1399 = vpop.f32.mrf.mxu0
        %v1400 = vadd.f32 %v1351, %v1399
        %1401 = vmatmul.bf16.gmra.mxu0 %v711
        %v1402 = vpop.f32.mrf.mxu0
        %v1403 = vadd.f32 %v1354, %v1402
        %v1404 = vpop.f32.mrf.mxu0
        %v1405 = vadd.f32 %v1356, %v1404
        %1406 = vmatmul.bf16.gmra.mxu0 %v715
        %v1407 = vpop.f32.mrf.mxu0
        %v1408 = vadd.f32 %v1359, %v1407
        %v1409 = vpop.f32.mrf.mxu0
        %v1410 = vadd.f32 %v1361, %v1409
        %1411 = vdwg.mxu0
        %1412 = vmatpush.bf16.msra.mxu0 %v1004
        %1413 = vmatpush.bf16.msra.mxu0 %v1002
        %1414 = vmatpush.bf16.msra.mxu0 %v1000
        %1415 = vmatpush.bf16.msra.mxu0 %v998
        %1416 = vmatpush.bf16.msra.mxu0 %v996
        %1417 = vmatpush.bf16.msra.mxu0 %v994
        %1418 = vmatpush.bf16.msra.mxu0 %v992
        %1419 = vmatpush.bf16.msra.mxu0 %v990
        %1420 = vmatmul.bf16.gmra.mxu0 %v688
        %v1421 = vpop.f32.mrf.mxu0
        %v1422 = vadd.f32 %v1373, %v1421
        %v1423 = vpop.f32.mrf.mxu0
        %v1424 = vadd.f32 %v1375, %v1423
        %1425 = vmatmul.bf16.gmra.mxu0 %v692
        %v1426 = vpop.f32.mrf.mxu0
        %v1427 = vadd.f32 %v1378, %v1426
        %v1428 = vpop.f32.mrf.mxu0
        %v1429 = vadd.f32 %v1380, %v1428
        %1430 = vmatmul.bf16.gmra.mxu0 %v696
        %v1431 = vpop.f32.mrf.mxu0
        %v1432 = vadd.f32 %v1383, %v1431
        %v1433 = vpop.f32.mrf.mxu0
        %v1434 = vadd.f32 %v1385, %v1433
        %1435 = vmatmul.bf16.gmra.mxu0 %v700
        %v1436 = vpop.f32.mrf.mxu0
        %v1437 = vadd.f32 %v1388, %v1436
        %v1438 = vpop.f32.mrf.mxu0
        %v1439 = vadd.f32 %v1390, %v1438
        %1440 = vmatmul.bf16.gmra.mxu0 %v704
        %v1441 = vpop.f32.mrf.mxu0
        %v1442 = vadd.f32 %v1393, %v1441
        %v1443 = vpop.f32.mrf.mxu0
        %v1444 = vadd.f32 %v1395, %v1443
        %1445 = vmatmul.bf16.gmra.mxu0 %v708
        %v1446 = vpop.f32.mrf.mxu0
        %v1447 = vadd.f32 %v1398, %v1446
        %v1448 = vpop.f32.mrf.mxu0
        %v1449 = vadd.f32 %v1400, %v1448
        %1450 = vmatmul.bf16.gmra.mxu0 %v712
        %v1451 = vpop.f32.mrf.mxu0
        %v1452 = vadd.f32 %v1403, %v1451
        %v1453 = vpop.f32.mrf.mxu0
        %v1454 = vadd.f32 %v1405, %v1453
        %1455 = vmatmul.bf16.gmra.mxu0 %v716
        %v1456 = vpop.f32.mrf.mxu0
        %v1457 = vadd.f32 %v1408, %v1456
        %v1458 = vpop.f32.mrf.mxu0
        %v1459 = vadd.f32 %v1410, %v1458
        %1460 = vdwg.mxu0
        %p1461 = scmp.eq.s32.totalorder %s26, 0
        // Predicated region
        $region76: #{vae_forward.2} parent=70 // pred_check
          %p1462 = pneg %p1461
        $region77: #{vae_forward.2} parent=70 // pred_check_branch
          %1464 = sbr.rel (%p1462) target = $region79
        $region78: #{vae_forward.2} parent=70 // pred_region
          %1465 = vst [vmem:[#allocation2] sm:$0xff] %v1226
          %1466 = vst [vmem:[#allocation2 + $0x8] sm:$0xff] %v1422
          %1467 = vst [vmem:[#allocation2 + $0x10] sm:$0xff] %v1228
          %1468 = vst [vmem:[#allocation2 + $0x18] sm:$0xff] %v1424
          %1469 = vst [vmem:[#allocation2 + $0x20] sm:$0xff] %v1231
          %1470 = vst [vmem:[#allocation2 + $0x28] sm:$0xff] %v1427
          %1471 = vst [vmem:[#allocation2 + $0x30] sm:$0xff] %v1233
          %1472 = vst [vmem:[#allocation2 + $0x38] sm:$0xff] %v1429
          %1473 = vst [vmem:[#allocation2 + $0x40] sm:$0xff] %v1236
          %1474 = vst [vmem:[#allocation2 + $0x48] sm:$0xff] %v1432
          %1475 = vst [vmem:[#allocation2 + $0x50] sm:$0xff] %v1238
          %1476 = vst [vmem:[#allocation2 + $0x58] sm:$0xff] %v1434
          %1477 = vst [vmem:[#allocation2 + $0x60] sm:$0xff] %v1241
          %1478 = vst [vmem:[#allocation2 + $0x68] sm:$0xff] %v1437
          %1479 = vst [vmem:[#allocation2 + $0x70] sm:$0xff] %v1243
          %1480 = vst [vmem:[#allocation2 + $0x78] sm:$0xff] %v1439
          %1481 = vst [vmem:[#allocation2 + $0x80] sm:$0xff] %v1246
          %1482 = vst [vmem:[#allocation2 + $0x88] sm:$0xff] %v1442
          %1483 = vst [vmem:[#allocation2 + $0x90] sm:$0xff] %v1248
          %1484 = vst [vmem:[#allocation2 + $0x98] sm:$0xff] %v1444
          %1485 = vst [vmem:[#allocation2 + $0xa0] sm:$0xff] %v1251
          %1486 = vst [vmem:[#allocation2 + $0xa8] sm:$0xff] %v1447
          %1487 = vst [vmem:[#allocation2 + $0xb0] sm:$0xff] %v1253
          %1488 = vst [vmem:[#allocation2 + $0xb8] sm:$0xff] %v1449
          %1489 = vst [vmem:[#allocation2 + $0xc0] sm:$0xff] %v1256
          %1490 = vst [vmem:[#allocation2 + $0xc8] sm:$0xff] %v1452
          %1491 = vst [vmem:[#allocation2 + $0xd0] sm:$0xff] %v1258
          %1492 = vst [vmem:[#allocation2 + $0xd8] sm:$0xff] %v1454
          %1493 = vst [vmem:[#allocation2 + $0xe0] sm:$0xff] %v1261
          %1494 = vst [vmem:[#allocation2 + $0xe8] sm:$0xff] %v1457
          %1495 = vst [vmem:[#allocation2 + $0xf0] sm:$0xff] %v1263
          %1496 = vst [vmem:[#allocation2 + $0xf8] sm:$0xff] %v1459
        $region79: #{vae_forward.2} parent=70 // pred_fallthru
          _
        %p1497 = scmp.gt.s32.totalorder %s26, 0
        // Predicated region
        $region80: #{vae_forward.2} parent=70 // pred_check
          %p1498 = pneg %p1497
        $region81: #{vae_forward.2} parent=70 // pred_check_branch
          %1500 = sbr.rel (%p1498) target = $region83
        $region82: #{vae_forward.2} parent=70 // pred_region
          %v1501 = vld [vmem:[#allocation2] sm:$0xff]
          %v1502 = vld [vmem:[#allocation2 + $0x8] sm:$0xff]
          %v1503 = vld [vmem:[#allocation2 + $0x10] sm:$0xff]
          %v1504 = vld [vmem:[#allocation2 + $0x18] sm:$0xff]
          %v1505 = vld [vmem:[#allocation2 + $0x20] sm:$0xff]
          %v1506 = vld [vmem:[#allocation2 + $0x28] sm:$0xff]
          %v1507 = vld [vmem:[#allocation2 + $0x30] sm:$0xff]
          %v1508 = vld [vmem:[#allocation2 + $0x38] sm:$0xff]
          %v1509 = vld [vmem:[#allocation2 + $0x40] sm:$0xff]
          %v1510 = vld [vmem:[#allocation2 + $0x48] sm:$0xff]
          %v1511 = vld [vmem:[#allocation2 + $0x50] sm:$0xff]
          %v1512 = vld [vmem:[#allocation2 + $0x58] sm:$0xff]
          %v1513 = vld [vmem:[#allocation2 + $0x60] sm:$0xff]
          %v1514 = vld [vmem:[#allocation2 + $0x68] sm:$0xff]
          %v1515 = vld [vmem:[#allocation2 + $0x70] sm:$0xff]
          %v1516 = vld [vmem:[#allocation2 + $0x78] sm:$0xff]
          %v1517 = vld [vmem:[#allocation2 + $0x80] sm:$0xff]
          %v1518 = vld [vmem:[#allocation2 + $0x88] sm:$0xff]
          %v1519 = vld [vmem:[#allocation2 + $0x90] sm:$0xff]
          %v1520 = vld [vmem:[#allocation2 + $0x98] sm:$0xff]
          %v1521 = vld [vmem:[#allocation2 + $0xa0] sm:$0xff]
          %v1522 = vld [vmem:[#allocation2 + $0xa8] sm:$0xff]
          %v1523 = vld [vmem:[#allocation2 + $0xb0] sm:$0xff]
          %v1524 = vld [vmem:[#allocation2 + $0xb8] sm:$0xff]
          %v1525 = vld [vmem:[#allocation2 + $0xc0] sm:$0xff]
          %v1526 = vld [vmem:[#allocation2 + $0xc8] sm:$0xff]
          %v1527 = vld [vmem:[#allocation2 + $0xd0] sm:$0xff]
          %v1528 = vld [vmem:[#allocation2 + $0xd8] sm:$0xff]
          %v1529 = vld [vmem:[#allocation2 + $0xe0] sm:$0xff]
          %v1530 = vld [vmem:[#allocation2 + $0xe8] sm:$0xff]
          %v1531 = vld [vmem:[#allocation2 + $0xf0] sm:$0xff]
          %v1532 = vld [vmem:[#allocation2 + $0xf8] sm:$0xff]
          %v1533 = vadd.f32 %v1501, %v1226
          %v1534 = vadd.f32 %v1502, %v1422
          %v1535 = vadd.f32 %v1503, %v1228
          %v1536 = vadd.f32 %v1504, %v1424
          %v1537 = vadd.f32 %v1505, %v1231
          %v1538 = vadd.f32 %v1506, %v1427
          %v1539 = vadd.f32 %v1507, %v1233
          %v1540 = vadd.f32 %v1508, %v1429
          %v1541 = vadd.f32 %v1509, %v1236
          %v1542 = vadd.f32 %v1510, %v1432
          %v1543 = vadd.f32 %v1511, %v1238
          %v1544 = vadd.f32 %v1512, %v1434
          %v1545 = vadd.f32 %v1513, %v1241
          %v1546 = vadd.f32 %v1514, %v1437
          %v1547 = vadd.f32 %v1515, %v1243
          %v1548 = vadd.f32 %v1516, %v1439
          %v1549 = vadd.f32 %v1517, %v1246
          %v1550 = vadd.f32 %v1518, %v1442
          %v1551 = vadd.f32 %v1519, %v1248
          %v1552 = vadd.f32 %v1520, %v1444
          %v1553 = vadd.f32 %v1521, %v1251
          %v1554 = vadd.f32 %v1522, %v1447
          %v1555 = vadd.f32 %v1523, %v1253
          %v1556 = vadd.f32 %v1524, %v1449
          %v1557 = vadd.f32 %v1525, %v1256
          %v1558 = vadd.f32 %v1526, %v1452
          %v1559 = vadd.f32 %v1527, %v1258
          %v1560 = vadd.f32 %v1528, %v1454
          %v1561 = vadd.f32 %v1529, %v1261
          %v1562 = vadd.f32 %v1530, %v1457
          %v1563 = vadd.f32 %v1531, %v1263
          %v1564 = vadd.f32 %v1532, %v1459
          %1565 = vst [vmem:[#allocation2] sm:$0xff] %v1533
          %1566 = vst [vmem:[#allocation2 + $0x8] sm:$0xff] %v1534
          %1567 = vst [vmem:[#allocation2 + $0x10] sm:$0xff] %v1535
          %1568 = vst [vmem:[#allocation2 + $0x18] sm:$0xff] %v1536
          %1569 = vst [vmem:[#allocation2 + $0x20] sm:$0xff] %v1537
          %1570 = vst [vmem:[#allocation2 + $0x28] sm:$0xff] %v1538
          %1571 = vst [vmem:[#allocation2 + $0x30] sm:$0xff] %v1539
          %1572 = vst [vmem:[#allocation2 + $0x38] sm:$0xff] %v1540
          %1573 = vst [vmem:[#allocation2 + $0x40] sm:$0xff] %v1541
          %1574 = vst [vmem:[#allocation2 + $0x48] sm:$0xff] %v1542
          %1575 = vst [vmem:[#allocation2 + $0x50] sm:$0xff] %v1543
          %1576 = vst [vmem:[#allocation2 + $0x58] sm:$0xff] %v1544
          %1577 = vst [vmem:[#allocation2 + $0x60] sm:$0xff] %v1545
          %1578 = vst [vmem:[#allocation2 + $0x68] sm:$0xff] %v1546
          %1579 = vst [vmem:[#allocation2 + $0x70] sm:$0xff] %v1547
          %1580 = vst [vmem:[#allocation2 + $0x78] sm:$0xff] %v1548
          %1581 = vst [vmem:[#allocation2 + $0x80] sm:$0xff] %v1549
          %1582 = vst [vmem:[#allocation2 + $0x88] sm:$0xff] %v1550
          %1583 = vst [vmem:[#allocation2 + $0x90] sm:$0xff] %v1551
          %1584 = vst [vmem:[#allocation2 + $0x98] sm:$0xff] %v1552
          %1585 = vst [vmem:[#allocation2 + $0xa0] sm:$0xff] %v1553
          %1586 = vst [vmem:[#allocation2 + $0xa8] sm:$0xff] %v1554
          %1587 = vst [vmem:[#allocation2 + $0xb0] sm:$0xff] %v1555
          %1588 = vst [vmem:[#allocation2 + $0xb8] sm:$0xff] %v1556
          %1589 = vst [vmem:[#allocation2 + $0xc0] sm:$0xff] %v1557
          %1590 = vst [vmem:[#allocation2 + $0xc8] sm:$0xff] %v1558
          %1591 = vst [vmem:[#allocation2 + $0xd0] sm:$0xff] %v1559
          %1592 = vst [vmem:[#allocation2 + $0xd8] sm:$0xff] %v1560
          %1593 = vst [vmem:[#allocation2 + $0xe0] sm:$0xff] %v1561
          %1594 = vst [vmem:[#allocation2 + $0xe8] sm:$0xff] %v1562
          %1595 = vst [vmem:[#allocation2 + $0xf0] sm:$0xff] %v1563
          %1596 = vst [vmem:[#allocation2 + $0xf8] sm:$0xff] %v1564
        $region83: #{vae_forward.2} parent=70 // pred_fallthru
          _
        %p1597 = scmp.eq.s32.totalorder %s26, 1
        // Predicated region
        $region84: #{vae_forward.2} parent=70 // pred_check
          %p1598 = pneg %p1597
        $region85: #{vae_forward.2} parent=70 // pred_check_branch
          %1600 = sbr.rel (%p1598) target = $region87
        $region86: #{vae_forward.2} parent=70 // pred_region
          %v1601 = vld [vmem:[#allocation2] sm:$0xff]
          %v1602 = vld [vmem:[#allocation2 + $0x8] sm:$0xff]
          %v1603 = vld [vmem:[#allocation2 + $0x10] sm:$0xff]
          %v1604 = vld [vmem:[#allocation2 + $0x18] sm:$0xff]
          %v1605 = vld [vmem:[#allocation2 + $0x20] sm:$0xff]
          %v1606 = vld [vmem:[#allocation2 + $0x28] sm:$0xff]
          %v1607 = vld [vmem:[#allocation2 + $0x30] sm:$0xff]
          %v1608 = vld [vmem:[#allocation2 + $0x38] sm:$0xff]
          %v1609 = vld [vmem:[#allocation2 + $0x40] sm:$0xff]
          %v1610 = vld [vmem:[#allocation2 + $0x48] sm:$0xff]
          %v1611 = vld [vmem:[#allocation2 + $0x50] sm:$0xff]
          %v1612 = vld [vmem:[#allocation2 + $0x58] sm:$0xff]
          %v1613 = vld [vmem:[#allocation2 + $0x60] sm:$0xff]
          %v1614 = vld [vmem:[#allocation2 + $0x68] sm:$0xff]
          %v1615 = vld [vmem:[#allocation2 + $0x70] sm:$0xff]
          %v1616 = vld [vmem:[#allocation2 + $0x78] sm:$0xff]
          %v1617 = vld [vmem:[#allocation2 + $0x80] sm:$0xff]
          %v1618 = vld [vmem:[#allocation2 + $0x88] sm:$0xff]
          %v1619 = vld [vmem:[#allocation2 + $0x90] sm:$0xff]
          %v1620 = vld [vmem:[#allocation2 + $0x98] sm:$0xff]
          %v1621 = vld [vmem:[#allocation2 + $0xa0] sm:$0xff]
          %v1622 = vld [vmem:[#allocation2 + $0xa8] sm:$0xff]
          %v1623 = vld [vmem:[#allocation2 + $0xb0] sm:$0xff]
          %v1624 = vld [vmem:[#allocation2 + $0xb8] sm:$0xff]
          %v1625 = vld [vmem:[#allocation2 + $0xc0] sm:$0xff]
          %v1626 = vld [vmem:[#allocation2 + $0xc8] sm:$0xff]
          %v1627 = vld [vmem:[#allocation2 + $0xd0] sm:$0xff]
          %v1628 = vld [vmem:[#allocation2 + $0xd8] sm:$0xff]
          %v1629 = vld [vmem:[#allocation2 + $0xe0] sm:$0xff]
          %v1630 = vld [vmem:[#allocation2 + $0xe8] sm:$0xff]
          %v1631 = vld [vmem:[#allocation2 + $0xf0] sm:$0xff]
          %v1632 = vld [vmem:[#allocation2 + $0xf8] sm:$0xff]
          %v1633 = vld [vmem:[%s2] sm:$0x3]
          %v1635 = vperm.slane %v1633, 0
          %v1636 = vperm.slane %v1633, 1
          %v1639 = vadd.f32 %v1601, %v1635
          %v1640 = vadd.f32 %v1602, %v1636
          %v1641 = vadd.f32 %v1603, %v1635
          %v1642 = vadd.f32 %v1604, %v1636
          %v1643 = vadd.f32 %v1605, %v1635
          %v1644 = vadd.f32 %v1606, %v1636
          %v1645 = vadd.f32 %v1607, %v1635
          %v1646 = vadd.f32 %v1608, %v1636
          %v1647 = vadd.f32 %v1609, %v1635
          %v1648 = vadd.f32 %v1610, %v1636
          %v1649 = vadd.f32 %v1611, %v1635
          %v1650 = vadd.f32 %v1612, %v1636
          %v1651 = vadd.f32 %v1613, %v1635
          %v1652 = vadd.f32 %v1614, %v1636
          %v1653 = vadd.f32 %v1615, %v1635
          %v1654 = vadd.f32 %v1616, %v1636
          %v1655 = vadd.f32 %v1617, %v1635
          %v1656 = vadd.f32 %v1618, %v1636
          %v1657 = vadd.f32 %v1619, %v1635
          %v1658 = vadd.f32 %v1620, %v1636
          %v1659 = vadd.f32 %v1621, %v1635
          %v1660 = vadd.f32 %v1622, %v1636
          %v1661 = vadd.f32 %v1623, %v1635
          %v1662 = vadd.f32 %v1624, %v1636
          %v1663 = vadd.f32 %v1625, %v1635
          %v1664 = vadd.f32 %v1626, %v1636
          %v1665 = vadd.f32 %v1627, %v1635
          %v1666 = vadd.f32 %v1628, %v1636
          %v1667 = vadd.f32 %v1629, %v1635
          %v1668 = vadd.f32 %v1630, %v1636
          %v1669 = vadd.f32 %v1631, %v1635
          %v1670 = vadd.f32 %v1632, %v1636
          %v1671 = vtanh.pop %v1639
          %v1672 = vtanh.pop %v1640
          %v1673 = vtanh.pop %v1641
          %v1674 = vtanh.pop %v1642
          %v1675 = vtanh.pop %v1643
          %v1676 = vtanh.pop %v1644
          %v1677 = vtanh.pop %v1645
          %v1678 = vtanh.pop %v1646
          %v1679 = vtanh.pop %v1647
          %v1680 = vtanh.pop %v1648
          %v1681 = vtanh.pop %v1649
          %v1682 = vtanh.pop %v1650
          %v1683 = vtanh.pop %v1651
          %v1684 = vtanh.pop %v1652
          %v1685 = vtanh.pop %v1653
          %v1686 = vtanh.pop %v1654
          %v1687 = vtanh.pop %v1655
          %v1688 = vtanh.pop %v1656
          %v1689 = vtanh.pop %v1657
          %v1690 = vtanh.pop %v1658
          %v1691 = vtanh.pop %v1659
          %v1692 = vtanh.pop %v1660
          %v1693 = vtanh.pop %v1661
          %v1694 = vtanh.pop %v1662
          %v1695 = vtanh.pop %v1663
          %v1696 = vtanh.pop %v1664
          %v1697 = vtanh.pop %v1665
          %v1698 = vtanh.pop %v1666
          %v1699 = vtanh.pop %v1667
          %v1700 = vtanh.pop %v1668
          %v1701 = vtanh.pop %v1669
          %v1702 = vtanh.pop %v1670
          %v1703 = vpack.c.bf16 %v1673, %v1671
          %v1704 = vpack.c.bf16 %v1674, %v1672
          %v1705 = vpack.c.bf16 %v1677, %v1675
          %v1706 = vpack.c.bf16 %v1678, %v1676
          %v1707 = vpack.c.bf16 %v1681, %v1679
          %v1708 = vpack.c.bf16 %v1682, %v1680
          %v1709 = vpack.c.bf16 %v1685, %v1683
          %v1710 = vpack.c.bf16 %v1686, %v1684
          %v1711 = vpack.c.bf16 %v1689, %v1687
          %v1712 = vpack.c.bf16 %v1690, %v1688
          %v1713 = vpack.c.bf16 %v1693, %v1691
          %v1714 = vpack.c.bf16 %v1694, %v1692
          %v1715 = vpack.c.bf16 %v1697, %v1695
          %v1716 = vpack.c.bf16 %v1698, %v1696
          %v1717 = vpack.c.bf16 %v1701, %v1699
          %v1718 = vpack.c.bf16 %v1702, %v1700
          %v1719 = vld [vmem:[%s3] sm:$0xff]
          %v1720 = vld [vmem:[%s3 + $0x8] sm:$0xff]
          %v1721 = vld [vmem:[%s3 + $0x10] sm:$0xff]
          %v1722 = vld [vmem:[%s3 + $0x18] sm:$0xff]
          %v1723 = vld [vmem:[%s3 + $0x20] sm:$0xff]
          %v1724 = vld [vmem:[%s3 + $0x28] sm:$0xff]
          %v1725 = vld [vmem:[%s3 + $0x30] sm:$0xff]
          %v1726 = vld [vmem:[%s3 + $0x38] sm:$0xff]
          %v1727 = vld [vmem:[%s3 + $0x40] sm:$0xff]
          %v1728 = vld [vmem:[%s3 + $0x48] sm:$0xff]
          %v1729 = vld [vmem:[%s3 + $0x50] sm:$0xff]
          %v1730 = vld [vmem:[%s3 + $0x58] sm:$0xff]
          %v1731 = vld [vmem:[%s3 + $0x60] sm:$0xff]
          %v1732 = vld [vmem:[%s3 + $0x68] sm:$0xff]
          %v1733 = vld [vmem:[%s3 + $0x70] sm:$0xff]
          %v1734 = vld [vmem:[%s3 + $0x78] sm:$0xff]
          %v1735 = vld [vmem:[%s3 + $0x80] sm:$0xff]
          %v1736 = vld [vmem:[%s3 + $0x88] sm:$0xff]
          %v1737 = vld [vmem:[%s3 + $0x90] sm:$0xff]
          %v1738 = vld [vmem:[%s3 + $0x98] sm:$0xff]
          %v1739 = vld [vmem:[%s3 + $0xa0] sm:$0xff]
          %v1740 = vld [vmem:[%s3 + $0xa8] sm:$0xff]
          %v1741 = vld [vmem:[%s3 + $0xb0] sm:$0xff]
          %v1742 = vld [vmem:[%s3 + $0xb8] sm:$0xff]
          %v1743 = vld [vmem:[%s3 + $0xc0] sm:$0xff]
          %v1744 = vld [vmem:[%s3 + $0xc8] sm:$0xff]
          %v1745 = vld [vmem:[%s3 + $0xd0] sm:$0xff]
          %v1746 = vld [vmem:[%s3 + $0xd8] sm:$0xff]
          %v1747 = vld [vmem:[%s3 + $0xe0] sm:$0xff]
          %v1748 = vld [vmem:[%s3 + $0xe8] sm:$0xff]
          %v1749 = vld [vmem:[%s3 + $0xf0] sm:$0xff]
          %v1750 = vld [vmem:[%s3 + $0xf8] sm:$0xff]
          %v1751 = vld [vmem:[%s4] sm:$0x3]
          %v1753 = vperm.slane %v1751, 0
          %v1754 = vperm.slane %v1751, 1
          %v1789 = vunpack.c.l.b16 %v1719
          %v1790 = vunpack.c.h.b16 %v1719
          %v1791 = vunpack.c.l.b16 %v1720
          %v1792 = vunpack.c.h.b16 %v1720
          %v1793 = vunpack.c.l.b16 %v1721
          %v1794 = vunpack.c.h.b16 %v1721
          %v1795 = vunpack.c.l.b16 %v1722
          %v1796 = vunpack.c.h.b16 %v1722
          %v1797 = vunpack.c.l.b16 %v1723
          %v1798 = vunpack.c.h.b16 %v1723
          %v1799 = vunpack.c.l.b16 %v1724
          %v1800 = vunpack.c.h.b16 %v1724
          %v1801 = vunpack.c.l.b16 %v1725
          %v1802 = vunpack.c.h.b16 %v1725
          %v1803 = vunpack.c.l.b16 %v1726
          %v1804 = vunpack.c.h.b16 %v1726
          %v1805 = vunpack.c.l.b16 %v1727
          %v1806 = vunpack.c.h.b16 %v1727
          %v1807 = vunpack.c.l.b16 %v1728
          %v1808 = vunpack.c.h.b16 %v1728
          %v1809 = vunpack.c.l.b16 %v1729
          %v1810 = vunpack.c.h.b16 %v1729
          %v1811 = vunpack.c.l.b16 %v1730
          %v1812 = vunpack.c.h.b16 %v1730
          %v1813 = vunpack.c.l.b16 %v1731
          %v1814 = vunpack.c.h.b16 %v1731
          %v1815 = vunpack.c.l.b16 %v1732
          %v1816 = vunpack.c.h.b16 %v1732
          %v1817 = vunpack.c.l.b16 %v1733
          %v1818 = vunpack.c.h.b16 %v1733
          %v1819 = vunpack.c.l.b16 %v1734
          %v1820 = vunpack.c.h.b16 %v1734
          %v1821 = vunpack.c.l.b16 %v1735
          %v1822 = vunpack.c.h.b16 %v1735
          %v1823 = vunpack.c.l.b16 %v1736
          %v1824 = vunpack.c.h.b16 %v1736
          %v1825 = vunpack.c.l.b16 %v1737
          %v1826 = vunpack.c.h.b16 %v1737
          %v1827 = vunpack.c.l.b16 %v1738
          %v1828 = vunpack.c.h.b16 %v1738
          %v1829 = vunpack.c.l.b16 %v1739
          %v1830 = vunpack.c.h.b16 %v1739
          %v1831 = vunpack.c.l.b16 %v1740
          %v1832 = vunpack.c.h.b16 %v1740
          %v1833 = vunpack.c.l.b16 %v1741
          %v1834 = vunpack.c.h.b16 %v1741
          %v1835 = vunpack.c.l.b16 %v1742
          %v1836 = vunpack.c.h.b16 %v1742
          %v1837 = vunpack.c.l.b16 %v1743
          %v1838 = vunpack.c.h.b16 %v1743
          %v1839 = vunpack.c.l.b16 %v1744
          %v1840 = vunpack.c.h.b16 %v1744
          %v1841 = vunpack.c.l.b16 %v1745
          %v1842 = vunpack.c.h.b16 %v1745
          %v1843 = vunpack.c.l.b16 %v1746
          %v1844 = vunpack.c.h.b16 %v1746
          %v1845 = vunpack.c.l.b16 %v1747
          %v1846 = vunpack.c.h.b16 %v1747
          %v1847 = vunpack.c.l.b16 %v1748
          %v1848 = vunpack.c.h.b16 %v1748
          %v1849 = vunpack.c.l.b16 %v1749
          %v1850 = vunpack.c.h.b16 %v1749
          %v1851 = vunpack.c.l.b16 %v1750
          %v1852 = vunpack.c.h.b16 %v1750
          %v1853 = vpack.c.b16 %v1791, %v1789
          %v1854 = vpack.c.b16 %v1792, %v1790
          %v1855 = vpack.c.b16 %v1795, %v1793
          %v1856 = vpack.c.b16 %v1796, %v1794
          %v1857 = vpack.c.b16 %v1799, %v1797
          %v1858 = vpack.c.b16 %v1800, %v1798
          %v1859 = vpack.c.b16 %v1803, %v1801
          %v1860 = vpack.c.b16 %v1804, %v1802
          %v1861 = vpack.c.b16 %v1807, %v1805
          %v1862 = vpack.c.b16 %v1808, %v1806
          %v1863 = vpack.c.b16 %v1811, %v1809
          %v1864 = vpack.c.b16 %v1812, %v1810
          %v1865 = vpack.c.b16 %v1815, %v1813
          %v1866 = vpack.c.b16 %v1816, %v1814
          %v1867 = vpack.c.b16 %v1819, %v1817
          %v1868 = vpack.c.b16 %v1820, %v1818
          %v1869 = vpack.c.b16 %v1823, %v1821
          %v1870 = vpack.c.b16 %v1824, %v1822
          %v1871 = vpack.c.b16 %v1827, %v1825
          %v1872 = vpack.c.b16 %v1828, %v1826
          %v1873 = vpack.c.b16 %v1831, %v1829
          %v1874 = vpack.c.b16 %v1832, %v1830
          %v1875 = vpack.c.b16 %v1835, %v1833
          %v1876 = vpack.c.b16 %v1836, %v1834
          %v1877 = vpack.c.b16 %v1839, %v1837
          %v1878 = vpack.c.b16 %v1840, %v1838
          %v1879 = vpack.c.b16 %v1843, %v1841
          %v1880 = vpack.c.b16 %v1844, %v1842
          %v1881 = vpack.c.b16 %v1847, %v1845
          %v1882 = vpack.c.b16 %v1848, %v1846
          %v1883 = vpack.c.b16 %v1851, %v1849
          %v1884 = vpack.c.b16 %v1852, %v1850
          %1917 = vmatpush.bf16.msra.mxu0 %v1867
          %1918 = vmatpush.bf16.msra.mxu0 %v1865
          %1919 = vmatpush.bf16.msra.mxu0 %v1863
          %1920 = vmatpush.bf16.msra.mxu0 %v1861
          %1921 = vmatpush.bf16.msra.mxu0 %v1859
          %1922 = vmatpush.bf16.msra.mxu0 %v1857
          %1923 = vmatpush.bf16.msra.mxu0 %v1855
          %1924 = vmatpush.bf16.msra.mxu0 %v1853
          %1925 = vmatmul.bf16.gmra.mxu0 %v1703
          %v1926 = vpop.f32.mrf.mxu0
          %v1927 = vadd.f32 %v1753, %v1926
          %v1928 = vpop.f32.mrf.mxu0
          %v1929 = vadd.f32 %v1753, %v1928
          %1930 = vmatmul.bf16.gmra.mxu0 %v1705
          %v1931 = vpop.f32.mrf.mxu0
          %v1932 = vadd.f32 %v1753, %v1931
          %v1933 = vpop.f32.mrf.mxu0
          %v1934 = vadd.f32 %v1753, %v1933
          %1935 = vmatmul.bf16.gmra.mxu0 %v1707
          %v1936 = vpop.f32.mrf.mxu0
          %v1937 = vadd.f32 %v1753, %v1936
          %v1938 = vpop.f32.mrf.mxu0
          %v1939 = vadd.f32 %v1753, %v1938
          %1940 = vmatmul.bf16.gmra.mxu0 %v1709
          %v1941 = vpop.f32.mrf.mxu0
          %v1942 = vadd.f32 %v1753, %v1941
          %v1943 = vpop.f32.mrf.mxu0
          %v1944 = vadd.f32 %v1753, %v1943
          %1945 = vmatmul.bf16.gmra.mxu0 %v1711
          %v1946 = vpop.f32.mrf.mxu0
          %v1947 = vadd.f32 %v1753, %v1946
          %v1948 = vpop.f32.mrf.mxu0
          %v1949 = vadd.f32 %v1753, %v1948
          %1950 = vmatmul.bf16.gmra.mxu0 %v1713
          %v1951 = vpop.f32.mrf.mxu0
          %v1952 = vadd.f32 %v1753, %v1951
          %v1953 = vpop.f32.mrf.mxu0
          %v1954 = vadd.f32 %v1753, %v1953
          %1955 = vmatmul.bf16.gmra.mxu0 %v1715
          %v1956 = vpop.f32.mrf.mxu0
          %v1957 = vadd.f32 %v1753, %v1956
          %v1958 = vpop.f32.mrf.mxu0
          %v1959 = vadd.f32 %v1753, %v1958
          %1960 = vmatmul.bf16.gmra.mxu0 %v1717
          %v1961 = vpop.f32.mrf.mxu0
          %v1962 = vadd.f32 %v1753, %v1961
          %v1963 = vpop.f32.mrf.mxu0
          %v1964 = vadd.f32 %v1753, %v1963
          %1965 = vdwg.mxu0
          %1966 = vmatpush.bf16.msra.mxu0 %v1883
          %1967 = vmatpush.bf16.msra.mxu0 %v1881
          %1968 = vmatpush.bf16.msra.mxu0 %v1879
          %1969 = vmatpush.bf16.msra.mxu0 %v1877
          %1970 = vmatpush.bf16.msra.mxu0 %v1875
          %1971 = vmatpush.bf16.msra.mxu0 %v1873
          %1972 = vmatpush.bf16.msra.mxu0 %v1871
          %1973 = vmatpush.bf16.msra.mxu0 %v1869
          %1974 = vmatmul.bf16.gmra.mxu0 %v1704
          %v1975 = vpop.f32.mrf.mxu0
          %v1976 = vadd.f32 %v1927, %v1975
          %v1977 = vpop.f32.mrf.mxu0
          %v1978 = vadd.f32 %v1929, %v1977
          %1979 = vmatmul.bf16.gmra.mxu0 %v1706
          %v1980 = vpop.f32.mrf.mxu0
          %v1981 = vadd.f32 %v1932, %v1980
          %v1982 = vpop.f32.mrf.mxu0
          %v1983 = vadd.f32 %v1934, %v1982
          %1984 = vmatmul.bf16.gmra.mxu0 %v1708
          %v1985 = vpop.f32.mrf.mxu0
          %v1986 = vadd.f32 %v1937, %v1985
          %v1987 = vpop.f32.mrf.mxu0
          %v1988 = vadd.f32 %v1939, %v1987
          %1989 = vmatmul.bf16.gmra.mxu0 %v1710
          %v1990 = vpop.f32.mrf.mxu0
          %v1991 = vadd.f32 %v1942, %v1990
          %v1992 = vpop.f32.mrf.mxu0
          %v1993 = vadd.f32 %v1944, %v1992
          %1994 = vmatmul.bf16.gmra.mxu0 %v1712
          %v1995 = vpop.f32.mrf.mxu0
          %v1996 = vadd.f32 %v1947, %v1995
          %v1997 = vpop.f32.mrf.mxu0
          %v1998 = vadd.f32 %v1949, %v1997
          %1999 = vmatmul.bf16.gmra.mxu0 %v1714
          %v2000 = vpop.f32.mrf.mxu0
          %v2001 = vadd.f32 %v1952, %v2000
          %v2002 = vpop.f32.mrf.mxu0
          %v2003 = vadd.f32 %v1954, %v2002
          %2004 = vmatmul.bf16.gmra.mxu0 %v1716
          %v2005 = vpop.f32.mrf.mxu0
          %v2006 = vadd.f32 %v1957, %v2005
          %v2007 = vpop.f32.mrf.mxu0
          %v2008 = vadd.f32 %v1959, %v2007
          %2009 = vmatmul.bf16.gmra.mxu0 %v1718
          %v2010 = vpop.f32.mrf.mxu0
          %v2011 = vadd.f32 %v1962, %v2010
          %v2012 = vpop.f32.mrf.mxu0
          %v2013 = vadd.f32 %v1964, %v2012
          %2014 = vdwg.mxu0
          %2015 = vmatpush.bf16.msra.mxu0 %v1868
          %2016 = vmatpush.bf16.msra.mxu0 %v1866
          %2017 = vmatpush.bf16.msra.mxu0 %v1864
          %2018 = vmatpush.bf16.msra.mxu0 %v1862
          %2019 = vmatpush.bf16.msra.mxu0 %v1860
          %2020 = vmatpush.bf16.msra.mxu0 %v1858
          %2021 = vmatpush.bf16.msra.mxu0 %v1856
          %2022 = vmatpush.bf16.msra.mxu0 %v1854
          %2023 = vmatmul.bf16.gmra.mxu0 %v1703
          %v2024 = vpop.f32.mrf.mxu0
          %v2025 = vadd.f32 %v1754, %v2024
          %v2026 = vpop.f32.mrf.mxu0
          %v2027 = vadd.f32 %v1754, %v2026
          %2028 = vmatmul.bf16.gmra.mxu0 %v1705
          %v2029 = vpop.f32.mrf.mxu0
          %v2030 = vadd.f32 %v1754, %v2029
          %v2031 = vpop.f32.mrf.mxu0
          %v2032 = vadd.f32 %v1754, %v2031
          %2033 = vmatmul.bf16.gmra.mxu0 %v1707
          %v2034 = vpop.f32.mrf.mxu0
          %v2035 = vadd.f32 %v1754, %v2034
          %v2036 = vpop.f32.mrf.mxu0
          %v2037 = vadd.f32 %v1754, %v2036
          %2038 = vmatmul.bf16.gmra.mxu0 %v1709
          %v2039 = vpop.f32.mrf.mxu0
          %v2040 = vadd.f32 %v1754, %v2039
          %v2041 = vpop.f32.mrf.mxu0
          %v2042 = vadd.f32 %v1754, %v2041
          %2043 = vmatmul.bf16.gmra.mxu0 %v1711
          %v2044 = vpop.f32.mrf.mxu0
          %v2045 = vadd.f32 %v1754, %v2044
          %v2046 = vpop.f32.mrf.mxu0
          %v2047 = vadd.f32 %v1754, %v2046
          %2048 = vmatmul.bf16.gmra.mxu0 %v1713
          %v2049 = vpop.f32.mrf.mxu0
          %v2050 = vadd.f32 %v1754, %v2049
          %v2051 = vpop.f32.mrf.mxu0
          %v2052 = vadd.f32 %v1754, %v2051
          %2053 = vmatmul.bf16.gmra.mxu0 %v1715
          %v2054 = vpop.f32.mrf.mxu0
          %v2055 = vadd.f32 %v1754, %v2054
          %v2056 = vpop.f32.mrf.mxu0
          %v2057 = vadd.f32 %v1754, %v2056
          %2058 = vmatmul.bf16.gmra.mxu0 %v1717
          %v2059 = vpop.f32.mrf.mxu0
          %v2060 = vadd.f32 %v1754, %v2059
          %v2061 = vpop.f32.mrf.mxu0
          %v2062 = vadd.f32 %v1754, %v2061
          %2063 = vdwg.mxu0
          %2064 = vmatpush.bf16.msra.mxu0 %v1884
          %2065 = vmatpush.bf16.msra.mxu0 %v1882
          %2066 = vmatpush.bf16.msra.mxu0 %v1880
          %2067 = vmatpush.bf16.msra.mxu0 %v1878
          %2068 = vmatpush.bf16.msra.mxu0 %v1876
          %2069 = vmatpush.bf16.msra.mxu0 %v1874
          %2070 = vmatpush.bf16.msra.mxu0 %v1872
          %2071 = vmatpush.bf16.msra.mxu0 %v1870
          %2072 = vmatmul.bf16.gmra.mxu0 %v1704
          %v2073 = vpop.f32.mrf.mxu0
          %v2074 = vadd.f32 %v2025, %v2073
          %v2075 = vpop.f32.mrf.mxu0
          %v2076 = vadd.f32 %v2027, %v2075
          %2077 = vmatmul.bf16.gmra.mxu0 %v1706
          %v2078 = vpop.f32.mrf.mxu0
          %v2079 = vadd.f32 %v2030, %v2078
          %v2080 = vpop.f32.mrf.mxu0
          %v2081 = vadd.f32 %v2032, %v2080
          %2082 = vmatmul.bf16.gmra.mxu0 %v1708
          %v2083 = vpop.f32.mrf.mxu0
          %v2084 = vadd.f32 %v2035, %v2083
          %v2085 = vpop.f32.mrf.mxu0
          %v2086 = vadd.f32 %v2037, %v2085
          %2087 = vmatmul.bf16.gmra.mxu0 %v1710
          %v2088 = vpop.f32.mrf.mxu0
          %v2089 = vadd.f32 %v2040, %v2088
          %v2090 = vpop.f32.mrf.mxu0
          %v2091 = vadd.f32 %v2042, %v2090
          %2092 = vmatmul.bf16.gmra.mxu0 %v1712
          %v2093 = vpop.f32.mrf.mxu0
          %v2094 = vadd.f32 %v2045, %v2093
          %v2095 = vpop.f32.mrf.mxu0
          %v2096 = vadd.f32 %v2047, %v2095
          %2097 = vmatmul.bf16.gmra.mxu0 %v1714
          %v2098 = vpop.f32.mrf.mxu0
          %v2099 = vadd.f32 %v2050, %v2098
          %v2100 = vpop.f32.mrf.mxu0
          %v2101 = vadd.f32 %v2052, %v2100
          %2102 = vmatmul.bf16.gmra.mxu0 %v1716
          %v2103 = vpop.f32.mrf.mxu0
          %v2104 = vadd.f32 %v2055, %v2103
          %v2105 = vpop.f32.mrf.mxu0
          %v2106 = vadd.f32 %v2057, %v2105
          %2107 = vmatmul.bf16.gmra.mxu0 %v1718
          %v2108 = vpop.f32.mrf.mxu0
          %v2109 = vadd.f32 %v2060, %v2108
          %v2110 = vpop.f32.mrf.mxu0
          %v2111 = vadd.f32 %v2062, %v2110
          %2112 = vdwg.mxu0
          %v2113 = vmul.f32 %v2074, 0.5
          %v2114 = vmul.f32 %v2076, 0.5
          %v2115 = vmul.f32 %v2079, 0.5
          %v2116 = vmul.f32 %v2081, 0.5
          %v2117 = vmul.f32 %v2084, 0.5
          %v2118 = vmul.f32 %v2086, 0.5
          %v2119 = vmul.f32 %v2089, 0.5
          %v2120 = vmul.f32 %v2091, 0.5
          %v2121 = vmul.f32 %v2094, 0.5
          %v2122 = vmul.f32 %v2096, 0.5
          %v2123 = vmul.f32 %v2099, 0.5
          %v2124 = vmul.f32 %v2101, 0.5
          %v2125 = vmul.f32 %v2104, 0.5
          %v2126 = vmul.f32 %v2106, 0.5
          %v2127 = vmul.f32 %v2109, 0.5
          %v2128 = vmul.f32 %v2111, 0.5
          %v2129 = vmul.f32 %v2113, 1.442695
          %v2130 = vpow.pop %v2129
          %v2131 = vmul.f32 %v2114, 1.442695
          %v2132 = vpow.pop %v2131
          %v2133 = vmul.f32 %v2115, 1.442695
          %v2134 = vpow.pop %v2133
          %v2135 = vmul.f32 %v2116, 1.442695
          %v2136 = vpow.pop %v2135
          %v2137 = vmul.f32 %v2117, 1.442695
          %v2138 = vpow.pop %v2137
          %v2139 = vmul.f32 %v2118, 1.442695
          %v2140 = vpow.pop %v2139
          %v2141 = vmul.f32 %v2119, 1.442695
          %v2142 = vpow.pop %v2141
          %v2143 = vmul.f32 %v2120, 1.442695
          %v2144 = vpow.pop %v2143
          %v2145 = vmul.f32 %v2121, 1.442695
          %v2146 = vpow.pop %v2145
          %v2147 = vmul.f32 %v2122, 1.442695
          %v2148 = vpow.pop %v2147
          %v2149 = vmul.f32 %v2123, 1.442695
          %v2150 = vpow.pop %v2149
          %v2151 = vmul.f32 %v2124, 1.442695
          %v2152 = vpow.pop %v2151
          %v2153 = vmul.f32 %v2125, 1.442695
          %v2154 = vpow.pop %v2153
          %v2155 = vmul.f32 %v2126, 1.442695
          %v2156 = vpow.pop %v2155
          %v2157 = vmul.f32 %v2127, 1.442695
          %v2158 = vpow.pop %v2157
          %v2159 = vmul.f32 %v2128, 1.442695
          %v2160 = vpow.pop %v2159
          %v2161 = vmul.f32 %v2130, %v2130
          %v2162 = vmul.f32 %v2132, %v2132
          %v2163 = vmul.f32 %v2134, %v2134
          %v2164 = vmul.f32 %v2136, %v2136
          %v2165 = vmul.f32 %v2138, %v2138
          %v2166 = vmul.f32 %v2140, %v2140
          %v2167 = vmul.f32 %v2142, %v2142
          %v2168 = vmul.f32 %v2144, %v2144
          %v2169 = vmul.f32 %v2146, %v2146
          %v2170 = vmul.f32 %v2148, %v2148
          %v2171 = vmul.f32 %v2150, %v2150
          %v2172 = vmul.f32 %v2152, %v2152
          %v2173 = vmul.f32 %v2154, %v2154
          %v2174 = vmul.f32 %v2156, %v2156
          %v2175 = vmul.f32 %v2158, %v2158
          %v2176 = vmul.f32 %v2160, %v2160
          %v2177 = vld [vmem:[%s481] sm:$0xff]
          %v2178 = vld [vmem:[%s481 + $0x8] sm:$0xff]
          %v2179 = vld [vmem:[%s481 + $0x10] sm:$0xff]
          %v2180 = vld [vmem:[%s481 + $0x18] sm:$0xff]
          %v2181 = vld [vmem:[%s481 + $0x20] sm:$0xff]
          %v2182 = vld [vmem:[%s481 + $0x28] sm:$0xff]
          %v2183 = vld [vmem:[%s481 + $0x30] sm:$0xff]
          %v2184 = vld [vmem:[%s481 + $0x38] sm:$0xff]
          %v2185 = vld [vmem:[%s481 + $0x40] sm:$0xff]
          %v2186 = vld [vmem:[%s481 + $0x48] sm:$0xff]
          %v2187 = vld [vmem:[%s481 + $0x50] sm:$0xff]
          %v2188 = vld [vmem:[%s481 + $0x58] sm:$0xff]
          %v2189 = vld [vmem:[%s481 + $0x60] sm:$0xff]
          %v2190 = vld [vmem:[%s481 + $0x68] sm:$0xff]
          %v2191 = vld [vmem:[%s481 + $0x70] sm:$0xff]
          %v2192 = vld [vmem:[%s481 + $0x78] sm:$0xff]
          %v2193 = vmul.f32 %v2177, %v2130
          %v2194 = vmul.f32 %v2178, %v2132
          %v2195 = vmul.f32 %v2179, %v2134
          %v2196 = vmul.f32 %v2180, %v2136
          %v2197 = vmul.f32 %v2181, %v2138
          %v2198 = vmul.f32 %v2182, %v2140
          %v2199 = vmul.f32 %v2183, %v2142
          %v2200 = vmul.f32 %v2184, %v2144
          %v2201 = vmul.f32 %v2185, %v2146
          %v2202 = vmul.f32 %v2186, %v2148
          %v2203 = vmul.f32 %v2187, %v2150
          %v2204 = vmul.f32 %v2188, %v2152
          %v2205 = vmul.f32 %v2189, %v2154
          %v2206 = vmul.f32 %v2190, %v2156
          %v2207 = vmul.f32 %v2191, %v2158
          %v2208 = vmul.f32 %v2192, %v2160
          %v2209 = vadd.f32 %v1976, %v2193
          %v2210 = vadd.f32 %v1978, %v2194
          %v2211 = vadd.f32 %v1981, %v2195
          %v2212 = vadd.f32 %v1983, %v2196
          %v2213 = vadd.f32 %v1986, %v2197
          %v2214 = vadd.f32 %v1988, %v2198
          %v2215 = vadd.f32 %v1991, %v2199
          %v2216 = vadd.f32 %v1993, %v2200
          %v2217 = vadd.f32 %v1996, %v2201
          %v2218 = vadd.f32 %v1998, %v2202
          %v2219 = vadd.f32 %v2001, %v2203
          %v2220 = vadd.f32 %v2003, %v2204
          %v2221 = vadd.f32 %v2006, %v2205
          %v2222 = vadd.f32 %v2008, %v2206
          %v2223 = vadd.f32 %v2011, %v2207
          %v2224 = vadd.f32 %v2013, %v2208
          %v2225 = vpack.c.bf16 %v2210, %v2209
          %v2226 = vpack.c.bf16 %v2212, %v2211
          %v2227 = vpack.c.bf16 %v2214, %v2213
          %v2228 = vpack.c.bf16 %v2216, %v2215
          %v2229 = vpack.c.bf16 %v2218, %v2217
          %v2230 = vpack.c.bf16 %v2220, %v2219
          %v2231 = vpack.c.bf16 %v2222, %v2221
          %v2232 = vpack.c.bf16 %v2224, %v2223
          %v2233 = vld [vmem:[%s5] sm:$0xff]
          %v2234 = vld [vmem:[%s5 + $0x8] sm:$0xff]
          %v2235 = vld [vmem:[%s5 + $0x10] sm:$0xff]
          %v2236 = vld [vmem:[%s5 + $0x18] sm:$0xff]
          %v2237 = vld [vmem:[%s5 + $0x20] sm:$0xff]
          %v2238 = vld [vmem:[%s5 + $0x28] sm:$0xff]
          %v2239 = vld [vmem:[%s5 + $0x30] sm:$0xff]
          %v2240 = vld [vmem:[%s5 + $0x38] sm:$0xff]
          %v2241 = vld [vmem:[%s5 + $0x40] sm:$0xff]
          %v2242 = vld [vmem:[%s5 + $0x48] sm:$0xff]
          %v2243 = vld [vmem:[%s5 + $0x50] sm:$0xff]
          %v2244 = vld [vmem:[%s5 + $0x58] sm:$0xff]
          %v2245 = vld [vmem:[%s5 + $0x60] sm:$0xff]
          %v2246 = vld [vmem:[%s5 + $0x68] sm:$0xff]
          %v2247 = vld [vmem:[%s5 + $0x70] sm:$0xff]
          %v2248 = vld [vmem:[%s5 + $0x78] sm:$0xff]
          %v2249 = vld [vmem:[%s6] sm:$0x3]
          %v2251 = vperm.slane %v2249, 0
          %v2252 = vperm.slane %v2249, 1
          %v2271 = vunpack.c.l.b16 %v2233
          %v2272 = vunpack.c.h.b16 %v2233
          %v2273 = vunpack.c.l.b16 %v2234
          %v2274 = vunpack.c.h.b16 %v2234
          %v2275 = vunpack.c.l.b16 %v2235
          %v2276 = vunpack.c.h.b16 %v2235
          %v2277 = vunpack.c.l.b16 %v2236
          %v2278 = vunpack.c.h.b16 %v2236
          %v2279 = vunpack.c.l.b16 %v2237
          %v2280 = vunpack.c.h.b16 %v2237
          %v2281 = vunpack.c.l.b16 %v2238
          %v2282 = vunpack.c.h.b16 %v2238
          %v2283 = vunpack.c.l.b16 %v2239
          %v2284 = vunpack.c.h.b16 %v2239
          %v2285 = vunpack.c.l.b16 %v2240
          %v2286 = vunpack.c.h.b16 %v2240
          %v2287 = vunpack.c.l.b16 %v2241
          %v2288 = vunpack.c.h.b16 %v2241
          %v2289 = vunpack.c.l.b16 %v2242
          %v2290 = vunpack.c.h.b16 %v2242
          %v2291 = vunpack.c.l.b16 %v2243
          %v2292 = vunpack.c.h.b16 %v2243
          %v2293 = vunpack.c.l.b16 %v2244
          %v2294 = vunpack.c.h.b16 %v2244
          %v2295 = vunpack.c.l.b16 %v2245
          %v2296 = vunpack.c.h.b16 %v2245
          %v2297 = vunpack.c.l.b16 %v2246
          %v2298 = vunpack.c.h.b16 %v2246
          %v2299 = vunpack.c.l.b16 %v2247
          %v2300 = vunpack.c.h.b16 %v2247
          %v2301 = vunpack.c.l.b16 %v2248
          %v2302 = vunpack.c.h.b16 %v2248
          %v2303 = vpack.c.b16 %v2273, %v2271
          %v2304 = vpack.c.b16 %v2274, %v2272
          %v2305 = vpack.c.b16 %v2277, %v2275
          %v2306 = vpack.c.b16 %v2278, %v2276
          %v2307 = vpack.c.b16 %v2281, %v2279
          %v2308 = vpack.c.b16 %v2282, %v2280
          %v2309 = vpack.c.b16 %v2285, %v2283
          %v2310 = vpack.c.b16 %v2286, %v2284
          %v2311 = vpack.c.b16 %v2289, %v2287
          %v2312 = vpack.c.b16 %v2290, %v2288
          %v2313 = vpack.c.b16 %v2293, %v2291
          %v2314 = vpack.c.b16 %v2294, %v2292
          %v2315 = vpack.c.b16 %v2297, %v2295
          %v2316 = vpack.c.b16 %v2298, %v2296
          %v2317 = vpack.c.b16 %v2301, %v2299
          %v2318 = vpack.c.b16 %v2302, %v2300
          %2335 = vmatpush.bf16.msra.mxu0 %v2317
          %2336 = vmatpush.bf16.msra.mxu0 %v2315
          %2337 = vmatpush.bf16.msra.mxu0 %v2313
          %2338 = vmatpush.bf16.msra.mxu0 %v2311
          %2339 = vmatpush.bf16.msra.mxu0 %v2309
          %2340 = vmatpush.bf16.msra.mxu0 %v2307
          %2341 = vmatpush.bf16.msra.mxu0 %v2305
          %2342 = vmatpush.bf16.msra.mxu0 %v2303
          %2343 = vmatmul.bf16.gmra.mxu0 %v2225
          %v2344 = vpop.f32.mrf.mxu0
          %v2345 = vadd.f32 %v2251, %v2344
          %v2346 = vpop.f32.mrf.mxu0
          %v2347 = vadd.f32 %v2251, %v2346
          %2348 = vmatmul.bf16.gmra.mxu0 %v2226
          %v2349 = vpop.f32.mrf.mxu0
          %v2350 = vadd.f32 %v2251, %v2349
          %v2351 = vpop.f32.mrf.mxu0
          %v2352 = vadd.f32 %v2251, %v2351
          %2353 = vmatmul.bf16.gmra.mxu0 %v2227
          %v2354 = vpop.f32.mrf.mxu0
          %v2355 = vadd.f32 %v2251, %v2354
          %v2356 = vpop.f32.mrf.mxu0
          %v2357 = vadd.f32 %v2251, %v2356
          %2358 = vmatmul.bf16.gmra.mxu0 %v2228
          %v2359 = vpop.f32.mrf.mxu0
          %v2360 = vadd.f32 %v2251, %v2359
          %v2361 = vpop.f32.mrf.mxu0
          %v2362 = vadd.f32 %v2251, %v2361
          %2363 = vmatmul.bf16.gmra.mxu0 %v2229
          %v2364 = vpop.f32.mrf.mxu0
          %v2365 = vadd.f32 %v2251, %v2364
          %v2366 = vpop.f32.mrf.mxu0
          %v2367 = vadd.f32 %v2251, %v2366
          %2368 = vmatmul.bf16.gmra.mxu0 %v2230
          %v2369 = vpop.f32.mrf.mxu0
          %v2370 = vadd.f32 %v2251, %v2369
          %v2371 = vpop.f32.mrf.mxu0
          %v2372 = vadd.f32 %v2251, %v2371
          %2373 = vmatmul.bf16.gmra.mxu0 %v2231
          %v2374 = vpop.f32.mrf.mxu0
          %v2375 = vadd.f32 %v2251, %v2374
          %v2376 = vpop.f32.mrf.mxu0
          %v2377 = vadd.f32 %v2251, %v2376
          %2378 = vmatmul.bf16.gmra.mxu0 %v2232
          %v2379 = vpop.f32.mrf.mxu0
          %v2380 = vadd.f32 %v2251, %v2379
          %v2381 = vpop.f32.mrf.mxu0
          %v2382 = vadd.f32 %v2251, %v2381
          %2383 = vdwg.mxu0
          %2384 = vmatpush.bf16.msra.mxu0 %v2318
          %2385 = vmatpush.bf16.msra.mxu0 %v2316
          %2386 = vmatpush.bf16.msra.mxu0 %v2314
          %2387 = vmatpush.bf16.msra.mxu0 %v2312
          %2388 = vmatpush.bf16.msra.mxu0 %v2310
          %2389 = vmatpush.bf16.msra.mxu0 %v2308
          %2390 = vmatpush.bf16.msra.mxu0 %v2306
          %2391 = vmatpush.bf16.msra.mxu0 %v2304
          %2392 = vmatmul.bf16.gmra.mxu0 %v2225
          %v2393 = vpop.f32.mrf.mxu0
          %v2394 = vadd.f32 %v2252, %v2393
          %v2395 = vpop.f32.mrf.mxu0
          %v2396 = vadd.f32 %v2252, %v2395
          %2397 = vmatmul.bf16.gmra.mxu0 %v2226
          %v2398 = vpop.f32.mrf.mxu0
          %v2399 = vadd.f32 %v2252, %v2398
          %v2400 = vpop.f32.mrf.mxu0
          %v2401 = vadd.f32 %v2252, %v2400
          %2402 = vmatmul.bf16.gmra.mxu0 %v2227
          %v2403 = vpop.f32.mrf.mxu0
          %v2404 = vadd.f32 %v2252, %v2403
          %v2405 = vpop.f32.mrf.mxu0
          %v2406 = vadd.f32 %v2252, %v2405
          %2407 = vmatmul.bf16.gmra.mxu0 %v2228
          %v2408 = vpop.f32.mrf.mxu0
          %v2409 = vadd.f32 %v2252, %v2408
          %v2410 = vpop.f32.mrf.mxu0
          %v2411 = vadd.f32 %v2252, %v2410
          %2412 = vmatmul.bf16.gmra.mxu0 %v2229
          %v2413 = vpop.f32.mrf.mxu0
          %v2414 = vadd.f32 %v2252, %v2413
          %v2415 = vpop.f32.mrf.mxu0
          %v2416 = vadd.f32 %v2252, %v2415
          %2417 = vmatmul.bf16.gmra.mxu0 %v2230
          %v2418 = vpop.f32.mrf.mxu0
          %v2419 = vadd.f32 %v2252, %v2418
          %v2420 = vpop.f32.mrf.mxu0
          %v2421 = vadd.f32 %v2252, %v2420
          %2422 = vmatmul.bf16.gmra.mxu0 %v2231
          %v2423 = vpop.f32.mrf.mxu0
          %v2424 = vadd.f32 %v2252, %v2423
          %v2425 = vpop.f32.mrf.mxu0
          %v2426 = vadd.f32 %v2252, %v2425
          %2427 = vmatmul.bf16.gmra.mxu0 %v2232
          %v2428 = vpop.f32.mrf.mxu0
          %v2429 = vadd.f32 %v2252, %v2428
          %v2430 = vpop.f32.mrf.mxu0
          %v2431 = vadd.f32 %v2252, %v2430
          %2432 = vdwg.mxu0
          %v2433 = vtanh.pop %v2345
          %v2434 = vtanh.pop %v2394
          %v2435 = vtanh.pop %v2347
          %v2436 = vtanh.pop %v2396
          %v2437 = vtanh.pop %v2350
          %v2438 = vtanh.pop %v2399
          %v2439 = vtanh.pop %v2352
          %v2440 = vtanh.pop %v2401
          %v2441 = vtanh.pop %v2355
          %v2442 = vtanh.pop %v2404
          %v2443 = vtanh.pop %v2357
          %v2444 = vtanh.pop %v2406
          %v2445 = vtanh.pop %v2360
          %v2446 = vtanh.pop %v2409
          %v2447 = vtanh.pop %v2362
          %v2448 = vtanh.pop %v2411
          %v2449 = vtanh.pop %v2365
          %v2450 = vtanh.pop %v2414
          %v2451 = vtanh.pop %v2367
          %v2452 = vtanh.pop %v2416
          %v2453 = vtanh.pop %v2370
          %v2454 = vtanh.pop %v2419
          %v2455 = vtanh.pop %v2372
          %v2456 = vtanh.pop %v2421
          %v2457 = vtanh.pop %v2375
          %v2458 = vtanh.pop %v2424
          %v2459 = vtanh.pop %v2377
          %v2460 = vtanh.pop %v2426
          %v2461 = vtanh.pop %v2380
          %v2462 = vtanh.pop %v2429
          %v2463 = vtanh.pop %v2382
          %v2464 = vtanh.pop %v2431
          %v2465 = vpack.c.bf16 %v2434, %v2433
          %v2466 = vpack.c.bf16 %v2436, %v2435
          %v2467 = vpack.c.bf16 %v2438, %v2437
          %v2468 = vpack.c.bf16 %v2440, %v2439
          %v2469 = vpack.c.bf16 %v2442, %v2441
          %v2470 = vpack.c.bf16 %v2444, %v2443
          %v2471 = vpack.c.bf16 %v2446, %v2445
          %v2472 = vpack.c.bf16 %v2448, %v2447
          %v2473 = vpack.c.bf16 %v2450, %v2449
          %v2474 = vpack.c.bf16 %v2452, %v2451
          %v2475 = vpack.c.bf16 %v2454, %v2453
          %v2476 = vpack.c.bf16 %v2456, %v2455
          %v2477 = vpack.c.bf16 %v2458, %v2457
          %v2478 = vpack.c.bf16 %v2460, %v2459
          %v2479 = vpack.c.bf16 %v2462, %v2461
          %v2480 = vpack.c.bf16 %v2464, %v2463
          %2481 = vst [vmem:[%s488] sm:$0xff] %v2465
          %2482 = vst [vmem:[%s488 + $0x8] sm:$0xff] %v2466
          %2483 = vst [vmem:[%s488 + $0x10] sm:$0xff] %v2467
          %2484 = vst [vmem:[%s488 + $0x18] sm:$0xff] %v2468
          %2485 = vst [vmem:[%s488 + $0x20] sm:$0xff] %v2469
          %2486 = vst [vmem:[%s488 + $0x28] sm:$0xff] %v2470
          %2487 = vst [vmem:[%s488 + $0x30] sm:$0xff] %v2471
          %2488 = vst [vmem:[%s488 + $0x38] sm:$0xff] %v2472
          %2489 = vst [vmem:[%s488 + $0x40] sm:$0xff] %v2473
          %2490 = vst [vmem:[%s488 + $0x48] sm:$0xff] %v2474
          %2491 = vst [vmem:[%s488 + $0x50] sm:$0xff] %v2475
          %2492 = vst [vmem:[%s488 + $0x58] sm:$0xff] %v2476
          %2493 = vst [vmem:[%s488 + $0x60] sm:$0xff] %v2477
          %2494 = vst [vmem:[%s488 + $0x68] sm:$0xff] %v2478
          %2495 = vst [vmem:[%s488 + $0x70] sm:$0xff] %v2479
          %2496 = vst [vmem:[%s488 + $0x78] sm:$0xff] %v2480
          %v2497 = vadd.f32 %v2074, 1.0
          %v2498 = vadd.f32 %v2076, 1.0
          %v2499 = vadd.f32 %v2079, 1.0
          %v2500 = vadd.f32 %v2081, 1.0
          %v2501 = vadd.f32 %v2084, 1.0
          %v2502 = vadd.f32 %v2086, 1.0
          %v2503 = vadd.f32 %v2089, 1.0
          %v2504 = vadd.f32 %v2091, 1.0
          %v2505 = vadd.f32 %v2094, 1.0
          %v2506 = vadd.f32 %v2096, 1.0
          %v2507 = vadd.f32 %v2099, 1.0
          %v2508 = vadd.f32 %v2101, 1.0
          %v2509 = vadd.f32 %v2104, 1.0
          %v2510 = vadd.f32 %v2106, 1.0
          %v2511 = vadd.f32 %v2109, 1.0
          %v2512 = vadd.f32 %v2111, 1.0
          %v2513 = vmul.f32 %v1976, %v1976
          %v2514 = vmul.f32 %v1978, %v1978
          %v2515 = vmul.f32 %v1981, %v1981
          %v2516 = vmul.f32 %v1983, %v1983
          %v2517 = vmul.f32 %v1986, %v1986
          %v2518 = vmul.f32 %v1988, %v1988
          %v2519 = vmul.f32 %v1991, %v1991
          %v2520 = vmul.f32 %v1993, %v1993
          %v2521 = vmul.f32 %v1996, %v1996
          %v2522 = vmul.f32 %v1998, %v1998
          %v2523 = vmul.f32 %v2001, %v2001
          %v2524 = vmul.f32 %v2003, %v2003
          %v2525 = vmul.f32 %v2006, %v2006
          %v2526 = vmul.f32 %v2008, %v2008
          %v2527 = vmul.f32 %v2011, %v2011
          %v2528 = vmul.f32 %v2013, %v2013
          %v2529 = vsub.f32 %v2497, %v2513
          %v2530 = vsub.f32 %v2498, %v2514
          %v2531 = vsub.f32 %v2499, %v2515
          %v2532 = vsub.f32 %v2500, %v2516
          %v2533 = vsub.f32 %v2501, %v2517
          %v2534 = vsub.f32 %v2502, %v2518
          %v2535 = vsub.f32 %v2503, %v2519
          %v2536 = vsub.f32 %v2504, %v2520
          %v2537 = vsub.f32 %v2505, %v2521
          %v2538 = vsub.f32 %v2506, %v2522
          %v2539 = vsub.f32 %v2507, %v2523
          %v2540 = vsub.f32 %v2508, %v2524
          %v2541 = vsub.f32 %v2509, %v2525
          %v2542 = vsub.f32 %v2510, %v2526
          %v2543 = vsub.f32 %v2511, %v2527
          %v2544 = vsub.f32 %v2512, %v2528
          %v2545 = vsub.f32 %v2529, %v2161
          %v2546 = vsub.f32 %v2530, %v2162
          %v2547 = vsub.f32 %v2531, %v2163
          %v2548 = vsub.f32 %v2532, %v2164
          %v2549 = vsub.f32 %v2533, %v2165
          %v2550 = vsub.f32 %v2534, %v2166
          %v2551 = vsub.f32 %v2535, %v2167
          %v2552 = vsub.f32 %v2536, %v2168
          %v2553 = vsub.f32 %v2537, %v2169
          %v2554 = vsub.f32 %v2538, %v2170
          %v2555 = vsub.f32 %v2539, %v2171
          %v2556 = vsub.f32 %v2540, %v2172
          %v2557 = vsub.f32 %v2541, %v2173
          %v2558 = vsub.f32 %v2542, %v2174
          %v2559 = vsub.f32 %v2543, %v2175
          %v2560 = vsub.f32 %v2544, %v2176
          %s2561 = smul.u32 %s25, 128
          %v2562 = vlaneseq
          %v2563 = vshrl.u32 %v2562, 7
          %v2564 = vadd.s32 %v2563, 8
          %v2565 = vadd.s32 %v2563, 16
          %v2566 = vadd.s32 %v2563, 24
          %v2567 = vadd.s32 %v2563, 32
          %v2568 = vadd.s32 %v2563, 40
          %v2569 = vadd.s32 %v2563, 48
          %v2570 = vadd.s32 %v2563, 56
          %v2571 = vadd.s32 %v2563, 64
          %v2572 = vadd.s32 %v2563, 72
          %v2573 = vadd.s32 %v2563, 80
          %v2574 = vadd.s32 %v2563, 88
          %v2575 = vadd.s32 %v2563, 96
          %v2576 = vadd.s32 %v2563, 104
          %v2577 = vadd.s32 %v2563, 112
          %v2578 = vadd.s32 %v2563, 120
          %v2579 = vstv %s2561
          %v2580 = vadd.s32 %v2579, %v2563
          %v2581 = vadd.s32 %v2579, %v2564
          %v2582 = vadd.s32 %v2579, %v2565
          %v2583 = vadd.s32 %v2579, %v2566
          %v2584 = vadd.s32 %v2579, %v2567
          %v2585 = vadd.s32 %v2579, %v2568
          %v2586 = vadd.s32 %v2579, %v2569
          %v2587 = vadd.s32 %v2579, %v2570
          %v2588 = vadd.s32 %v2579, %v2571
          %v2589 = vadd.s32 %v2579, %v2572
          %v2590 = vadd.s32 %v2579, %v2573
          %v2591 = vadd.s32 %v2579, %v2574
          %v2592 = vadd.s32 %v2579, %v2575
          %v2593 = vadd.s32 %v2579, %v2576
          %v2594 = vadd.s32 %v2579, %v2577
          %v2595 = vadd.s32 %v2579, %v2578
          %vm2596 = vcmp.lt.s32.totalorder %v2580, 256
          %vm2597 = vcmp.lt.s32.totalorder %v2581, 256
          %vm2598 = vcmp.lt.s32.totalorder %v2582, 256
          %vm2599 = vcmp.lt.s32.totalorder %v2583, 256
          %vm2600 = vcmp.lt.s32.totalorder %v2584, 256
          %vm2601 = vcmp.lt.s32.totalorder %v2585, 256
          %vm2602 = vcmp.lt.s32.totalorder %v2586, 256
          %vm2603 = vcmp.lt.s32.totalorder %v2587, 256
          %vm2604 = vcmp.lt.s32.totalorder %v2588, 256
          %vm2605 = vcmp.lt.s32.totalorder %v2589, 256
          %vm2606 = vcmp.lt.s32.totalorder %v2590, 256
          %vm2607 = vcmp.lt.s32.totalorder %v2591, 256
          %vm2608 = vcmp.lt.s32.totalorder %v2592, 256
          %vm2609 = vcmp.lt.s32.totalorder %v2593, 256
          %vm2610 = vcmp.lt.s32.totalorder %v2594, 256
          %vm2611 = vcmp.lt.s32.totalorder %v2595, 256
          %v2612 = vsel %vm2596, 1, 0
          %v2613 = vsel %vm2597, 1, 0
          %v2614 = vsel %vm2598, 1, 0
          %v2615 = vsel %vm2599, 1, 0
          %v2616 = vsel %vm2600, 1, 0
          %v2617 = vsel %vm2601, 1, 0
          %v2618 = vsel %vm2602, 1, 0
          %v2619 = vsel %vm2603, 1, 0
          %v2620 = vsel %vm2604, 1, 0
          %v2621 = vsel %vm2605, 1, 0
          %v2622 = vsel %vm2606, 1, 0
          %v2623 = vsel %vm2607, 1, 0
          %v2624 = vsel %vm2608, 1, 0
          %v2625 = vsel %vm2609, 1, 0
          %v2626 = vsel %vm2610, 1, 0
          %v2627 = vsel %vm2611, 1, 0
          %vm2628 = vcmp.eq.s32.totalorder %v2612, 1
          %vm2629 = vcmp.eq.s32.totalorder %v2613, 1
          %vm2630 = vcmp.eq.s32.totalorder %v2614, 1
          %vm2631 = vcmp.eq.s32.totalorder %v2615, 1
          %vm2632 = vcmp.eq.s32.totalorder %v2616, 1
          %vm2633 = vcmp.eq.s32.totalorder %v2617, 1
          %vm2634 = vcmp.eq.s32.totalorder %v2618, 1
          %vm2635 = vcmp.eq.s32.totalorder %v2619, 1
          %vm2636 = vcmp.eq.s32.totalorder %v2620, 1
          %vm2637 = vcmp.eq.s32.totalorder %v2621, 1
          %vm2638 = vcmp.eq.s32.totalorder %v2622, 1
          %vm2639 = vcmp.eq.s32.totalorder %v2623, 1
          %vm2640 = vcmp.eq.s32.totalorder %v2624, 1
          %vm2641 = vcmp.eq.s32.totalorder %v2625, 1
          %vm2642 = vcmp.eq.s32.totalorder %v2626, 1
          %vm2643 = vcmp.eq.s32.totalorder %v2627, 1
          %v2644 = vsel %vm2628, %v2545, 0.0
          %v2645 = vsel %vm2629, %v2546, 0.0
          %v2646 = vsel %vm2630, %v2547, 0.0
          %v2647 = vsel %vm2631, %v2548, 0.0
          %v2648 = vsel %vm2632, %v2549, 0.0
          %v2649 = vsel %vm2633, %v2550, 0.0
          %v2650 = vsel %vm2634, %v2551, 0.0
          %v2651 = vsel %vm2635, %v2552, 0.0
          %v2652 = vsel %vm2636, %v2553, 0.0
          %v2653 = vsel %vm2637, %v2554, 0.0
          %v2654 = vsel %vm2638, %v2555, 0.0
          %v2655 = vsel %vm2639, %v2556, 0.0
          %v2656 = vsel %vm2640, %v2557, 0.0
          %v2657 = vsel %vm2641, %v2558, 0.0
          %v2658 = vsel %vm2642, %v2559, 0.0
          %v2659 = vsel %vm2643, %v2560, 0.0
          %v2660 = vadd.f32 %v2644, %v2645
          %v2661 = vadd.f32 %v2660, %v2646
          %v2662 = vadd.f32 %v2661, %v2647
          %v2663 = vadd.f32 %v2662, %v2648
          %v2664 = vadd.f32 %v2663, %v2649
          %v2665 = vadd.f32 %v2664, %v2650
          %v2666 = vadd.f32 %v2665, %v2651
          %v2667 = vadd.f32 %v2666, %v2652
          %v2668 = vadd.f32 %v2667, %v2653
          %v2669 = vadd.f32 %v2668, %v2654
          %v2670 = vadd.f32 %v2669, %v2655
          %v2671 = vadd.f32 %v2670, %v2656
          %v2672 = vadd.f32 %v2671, %v2657
          %v2673 = vadd.f32 %v2672, %v2658
          %v2674 = vadd.f32 %v2673, %v2659
          %v2675 = vrot.slane %v2674, 4
          %v2676 = vadd.f32 %v2674, %v2675
          %v2677 = vrot.slane %v2676, 2
          %v2678 = vadd.f32 %v2676, %v2677
          %v2679 = vrot.slane %v2678, 1
          %v2680 = vadd.f32 %v2678, %v2679
          %2681 = vst [vmem:[%s492] sm:$0x1] %v2680
        $region87: #{vae_forward.2} parent=70 // pred_fallthru
          _
        %s2682 = smul.u32 16, %s25
        %p2683 = scmp.lt.s32.totalorder %s2682, 31
        %s2684 = scalar_select %p2683, %s2682, 31
        %s2685 = smul.addr %s2684, 2
        %s2686 = smul.addr %s2685, 4
        %s2687 = scalar_lea.vmem %s8, %s2686
        %p2688 = scmp.lt.s32.totalorder %s25, 1
        %s2689 = scalar_select %p2688, %s25, 1
        %s2690 = scalar_lea.vmem %s9, %s2689
        // Predicated region
        $region88: #{vae_forward.2} parent=70 // pred_check
          %p2691 = pneg %p236
        $region89: #{vae_forward.2} parent=70 // pred_check_branch
          %2693 = sbr.rel (%p2691) target = $region91
        $region90: #{vae_forward.2} parent=70 // pred_region
          %s2694 = smul.u32 16, %s25
        $region91: #{vae_forward.2} parent=70 // pred_fallthru
          _
        // Predicated region
        $region92: #{vae_forward.2} parent=70 // pred_check
          %p2695 = pneg %p262
        $region93: #{vae_forward.2} parent=70 // pred_check_branch
          %2697 = sbr.rel (%p2695) target = $region95
        $region94: #{vae_forward.2} parent=70 // pred_region
          _
        $region95: #{vae_forward.2} parent=70 // pred_fallthru
          _
      $region71: #{vae_forward.2} parent=5 // pred_fallthru
        _
      %p2698 = scmp.le.s32.totalorder 2, %s16
      // Predicated region
      $region96: #{vae_forward.2} parent=5 // pred_check
        %p2699 = pneg %p2698
      $region97: #{vae_forward.2} parent=5 // pred_check_branch
        %2701 = sbr.rel (%p2699) target = $region99
      $region98: #{vae_forward.2} parent=5 // pred_region
        %s2702 = ssub.s32 %s16, 2
        // Predicated region
        $region100: #{vae_forward.2} parent=98 // pred_check
          %p2703 = pneg %p242
        $region101: #{vae_forward.2} parent=98 // pred_check_branch
          %2705 = sbr.rel (%p2703) target = $region103
        $region102: #{vae_forward.2} parent=98 // pred_region
          %s2706 = smul.u32 16, %s27
          %p2707 = scmp.lt.s32.totalorder %s2706, 31
          %s2708 = scalar_select %p2707, %s2706, 31
          %s2709 = smul.addr %s2708, 2
          %s2710 = smul.addr %s2709, 4
          %s2711 = scalar_lea.vmem %s8, %s2710
        $region103: #{vae_forward.2} parent=98 // pred_fallthru
          _
        // Predicated region
        $region104: #{vae_forward.2} parent=98 // pred_check
          %p2712 = pneg %p268
        $region105: #{vae_forward.2} parent=98 // pred_check_branch
          %2714 = sbr.rel (%p2712) target = $region107
        $region106: #{vae_forward.2} parent=98 // pred_region
          %p2715 = scmp.lt.s32.totalorder %s27, 1
          %s2716 = scalar_select %p2715, %s27, 1
          %s2717 = scalar_lea.vmem %s9, %s2716
        $region107: #{vae_forward.2} parent=98 // pred_fallthru
          _
      $region99: #{vae_forward.2} parent=5 // pred_fallthru
        _
    $region6: #{vae_forward.2} parent=1 // loop_footer
      %s20 = sadd.s32 1, %s16
    $region7: #{vae_forward.2} parent=1 // loop_footer_branch
      %15 = sbr.rel target = $region3
    $region8: #{vae_forward.2} parent=1 // loop_exit
      _

</llo_original>
